<compile_context>
chip_gen: v7x
topology: tpu7x:2x2x1
jax: 0.10.0
libtpu: 0.0.40
codegen_flags: <defaults>
</compile_context>

<pallas_src>
import jax
import jax.numpy as jnp
from jax import lax
from jax.experimental import pallas as pl
from jax.experimental.pallas import tpu as pltpu

LANE = 128
SUBLANE = 8


def _wn_net_fused_kernel(x_ref, w1_hbm, w2_hbm, w3_hbm, w4_hbm,
                         b1_ref, b2_ref, b3_ref, b4_ref,
                         o_ref,
                         w1_vmem, w2_vmem, w3_vmem, w4_vmem, dma_sems):
    """Fused fc1->ReLU->fc2->ReLU->fc3->ReLU->fc4 for one batch block.

    Weights are pre-folded (weight-norm scale applied offline), stored in HBM
    as bf16 [in, out] and copied ONCE (grid step 0) into single-buffered VMEM
    scratch that persists across batch blocks.  Biases are small f32 [1, out]
    blocks.  Matmuls accumulate in f32 on the MXU; bias/ReLU run in f32 on the
    VPU; activations are re-cast to bf16 only as MXU inputs.
    """
    # Load all weights into resident VMEM scratch on the first grid step only.
    # (Requires sequential grid execution -> dimension_semantics "arbitrary".)
    @pl.when(pl.program_id(0) == 0)
    def _load_weights():
        copies = [
            pltpu.make_async_copy(src, dst, dma_sems.at[i])
            for i, (src, dst) in enumerate(
                ((w1_hbm, w1_vmem), (w2_hbm, w2_vmem),
                 (w3_hbm, w3_vmem), (w4_hbm, w4_vmem)))
        ]
        for c in copies:
            c.start()
        for c in copies:
            c.wait()

    h = x_ref[...].astype(jnp.bfloat16)
    h = jnp.dot(h, w1_vmem[...], preferred_element_type=jnp.float32)
    h = jnp.maximum(h + b1_ref[...], 0.0).astype(jnp.bfloat16)
    h = jnp.dot(h, w2_vmem[...], preferred_element_type=jnp.float32)
    h = jnp.maximum(h + b2_ref[...], 0.0).astype(jnp.bfloat16)
    h = jnp.dot(h, w3_vmem[...], preferred_element_type=jnp.float32)
    h = jnp.maximum(h + b3_ref[...], 0.0).astype(jnp.bfloat16)
    h = jnp.dot(h, w4_vmem[...], preferred_element_type=jnp.float32)
    o_ref[...] = (h + b4_ref[...]).astype(o_ref.dtype)


def fold_weightnorm(v, g, b, compute_dtype=jnp.bfloat16):
    """Fold the weight-norm scale into the weight (static at inference).

    v: [out, in] (PyTorch layout), g: [out], b: [out].
    Returns (W [in, out] in compute_dtype, bias [1, out] f32) with
    W = (v * g/||v||_row)^T so that  y = x @ W + b.
    Note: like PyTorch weight_norm there is no epsilon, so an all-zero row
    would yield inf/NaN — this happens offline where it is easy to inspect.
    """
    v32 = v.astype(jnp.float32)
    inv_norm = lax.rsqrt(jnp.sum(v32 * v32, axis=1))
    w = (v32 * (g.astype(jnp.float32) * inv_norm)[:, None]).T
    return w.astype(compute_dtype), b.reshape(1, -1).astype(jnp.float32)


def prepare_wn_net_params(params, compute_dtype=jnp.bfloat16):
    """Fold + pad all layer params once (do this offline, not per forward)."""
    folded = [fold_weightnorm(v, g, b, compute_dtype) for (v, g, b) in params]

    # Pad fc1's input dim (K) to a full lane multiple: lane-dense x loads and
    # full MXU depth for the first matmul (zero rows contribute nothing).
    w1, b1 = folded[0]
    k1 = w1.shape[0]
    k1_pad = max(LANE, -(-k1 // LANE) * LANE)
    if k1_pad != k1:
        w1 = jnp.pad(w1, ((0, k1_pad - k1), (0, 0)))
    folded[0] = (w1, b1)

    # Pad the last layer's output dim to a full lane (128) for unmasked stores.
    w4, b4 = folded[-1]
    n4 = w4.shape[1]
    n4_pad = max(LANE, -(-n4 // LANE) * LANE)
    if n4_pad != n4:
        w4 = jnp.pad(w4, ((0, 0), (0, n4_pad - n4)))
        b4 = jnp.pad(b4, ((0, 0), (0, n4_pad - n4)))
    folded[-1] = (w4, b4)
    return folded, n4


def _pick_batch_tile(b_pad, max_tb=256):
    """Largest batch tile (multiple of 8, <= max_tb) that divides the padded batch.

    Default cap 256 is v7x-safe; on v5e/v6e (128 MiB VMEM) large-batch runs can
    raise max_tb to 512-1024 for fewer grid steps.
    """
    for cand in (1024, 512, 256, 128, 64, 32, 16, 8):
        if cand <= max_tb and b_pad % cand == 0:
            return cand
    return b_pad


def _vmem_limit_bytes(folded, tb, k1_pad, n4_pad):
    """Explicit VMEM budget from the real footprint (review: size it, don't guess)."""
    weight_bytes = sum(int(w.size) * w.dtype.itemsize for w, _ in folded)   # single-buffered scratch
    bias_bytes = 2 * sum(int(b.size) * b.dtype.itemsize for _, b in folded)  # double-buffered blocks
    io_bytes = 2 * tb * (k1_pad + n4_pad) * 4                                # double-buffered x / out f32 tiles
    interm_bytes = 4 * tb * 2048 * 4                                         # headroom for tb x 2048 f32 live values
    total = weight_bytes + bias_bytes + io_bytes + interm_bytes + (4 << 20)
    # Clamp: >=16 MiB so tiny batches still get a sane scoped budget,
    # <=48 MiB so we never exceed v7x's 64 MiB physical VMEM.
    return int(min(max(total, 16 << 20), 48 << 20))


def wn_net_forward(x, prepared, *, max_tb=256):
    """x: [B, input_size] f32 -> logits [B, num_classes] f32."""
    folded, num_classes = prepared
    (w1, b1), (w2, b2), (w3, b3), (w4, b4) = folded

    B, K = x.shape
    k1_pad = w1.shape[0]
    assert K <= k1_pad, (K, k1_pad)
    n4_pad = w4.shape[1]

    # Pad x columns to the (lane-aligned) fc1 input dim and rows to a sublane multiple.
    if K != k1_pad:
        x = jnp.pad(x, ((0, 0), (0, k1_pad - K)))
    b_pad = -(-B // SUBLANE) * SUBLANE
    if b_pad != B:
        x = jnp.pad(x, ((0, b_pad - B), (0, 0)))
    tb = _pick_batch_tile(b_pad, max_tb)

    const = lambda i: (0, 0)      # biases: tiny, resident across batch blocks
    batch = lambda i: (i, 0)      # x / out: tile over the batch axis only

    out = pl.pallas_call(
        _wn_net_fused_kernel,
        out_shape=jax.ShapeDtypeStruct((b_pad, n4_pad), jnp.float32),
        grid_spec=pltpu.PrefetchScalarGridSpec(
            num_scalar_prefetch=0,
            grid=(b_pad // tb,),
            in_specs=[
                pl.BlockSpec((tb, k1_pad), batch),       # x (pipelined)
                pl.BlockSpec(memory_space=pl.ANY),       # w1: raw HBM, manual DMA
                pl.BlockSpec(memory_space=pl.ANY),       # w2
                pl.BlockSpec(memory_space=pl.ANY),       # w3
                pl.BlockSpec(memory_space=pl.ANY),       # w4
                pl.BlockSpec(b1.shape, const),
                pl.BlockSpec(b2.shape, const),
                pl.BlockSpec(b3.shape, const),
                pl.BlockSpec(b4.shape, const),
            ],
            out_specs=pl.BlockSpec((tb, n4_pad), batch),
            scratch_shapes=[
                pltpu.VMEM(w1.shape, w1.dtype),          # single-buffered resident weights
                pltpu.VMEM(w2.shape, w2.dtype),
                pltpu.VMEM(w3.shape, w3.dtype),
                pltpu.VMEM(w4.shape, w4.dtype),
                pltpu.SemaphoreType.DMA((4,)),
            ],
        ),
        compiler_params=pltpu.CompilerParams(
            # "arbitrary": sequential grid (needed for the load-on-step-0 guard)
            # and avoids duplicating the weight fetch per TensorCore on v7x in
            # the weight-DMA-bound regime.
            dimension_semantics=("arbitrary",),
            vmem_limit_bytes=_vmem_limit_bytes(folded, tb, k1_pad, n4_pad),
        ),
    )(x, w1, w2, w3, w4, b1, b2, b3, b4)
    return out[:B, :num_classes]


def init_wn_layer(key, in_features, out_features):
    """Deterministic WeightNorm layer params (v, g, b), PyTorch shapes."""
    kv, kb = jax.random.split(key)
    v = 0.05 * jax.random.normal(kv, (out_features, in_features), jnp.float32)
    # PyTorch weight_norm-style init: g = ||v||_row so effective W == v at init.
    g = jnp.sqrt(jnp.sum(v * v, axis=1))
    b = 0.01 * jax.random.normal(kb, (out_features,), jnp.float32)
    return v, g, b


def wn_net_reference_f32(x, params):
    """Exact f32 pure-JAX reference of the module's forward."""
    out = x
    for i, (v, g, b) in enumerate(params):
        w = v * (g / jnp.sqrt(jnp.sum(v * v, axis=1)))[:, None]
        out = out @ w.T + b
        if i < len(params) - 1:
            out = jnp.maximum(out, 0.0)
    return out


def wn_net_reference_bf16(x, prepared):
    """Pure-JAX reference matching the kernel's bf16 weight/activation quantization."""
    folded, num_classes = prepared
    k1_pad = folded[0][0].shape[0]
    if x.shape[1] != k1_pad:
        x = jnp.pad(x, ((0, 0), (0, k1_pad - x.shape[1])))
    h = x.astype(jnp.bfloat16)
    for i, (w, b) in enumerate(folded):
        h = jnp.dot(h, w, preferred_element_type=jnp.float32) + b
        if i < len(folded) - 1:
            h = jnp.maximum(h, 0.0).astype(jnp.bfloat16)
    return h[:, :num_classes]


if __name__ == "__main__":
    INPUT_SIZE = 32      # small, consistent with forward: x is [B, input_size]
    NUM_CLASSES = 16
    BATCH = 8
    # hidden dims fixed by the module's __init__: 1024 -> 1024 -> 2048
    dims = [(INPUT_SIZE, 1024), (1024, 1024), (1024, 2048), (2048, NUM_CLASSES)]

    root = jax.random.PRNGKey(0)
    kx, *kls = jax.random.split(root, 1 + len(dims))
    x = jax.random.normal(kx, (BATCH, INPUT_SIZE), jnp.float32)
    params = [init_wn_layer(k, din, dout) for k, (din, dout) in zip(kls, dims)]

    # Offline fold: weight-norm scale baked into bf16 weights (weights are static).
    prepared = prepare_wn_net_params(params)

    out = wn_net_forward(x, prepared)
    out = jax.block_until_ready(out)
    assert out.shape == (BATCH, NUM_CLASSES), out.shape

    # Apples-to-apples check against a pure-JAX bf16-quantized forward.
    ref_bf16 = wn_net_reference_bf16(x, prepared)
    assert jnp.allclose(out, ref_bf16, atol=1e-2, rtol=1e-2), \
        float(jnp.max(jnp.abs(out - ref_bf16)))

    # Loose check against the exact f32 module semantics (bf16 weight quantization).
    ref_f32 = wn_net_reference_f32(x, params)
    assert jnp.allclose(out, ref_f32, atol=5e-2, rtol=5e-2), \
        float(jnp.max(jnp.abs(out - ref_f32)))

    print("KERNEL_OK")
</pallas_src>

<mosaic_0001>
module attributes {stable_mosaic.version = 11 : i64} {
  func.func @_wn_net_fused_kernel(%arg0: i32, %arg1: memref<8x128xf32, #tpu.memory_space<vmem>>, %arg2: memref<128x1024xbf16, #tpu.memory_space<any>>, %arg3: memref<1024x1024xbf16, #tpu.memory_space<any>>, %arg4: memref<1024x2048xbf16, #tpu.memory_space<any>>, %arg5: memref<2048x128xbf16, #tpu.memory_space<any>>, %arg6: memref<1x1024xf32, #tpu.memory_space<vmem>>, %arg7: memref<1x1024xf32, #tpu.memory_space<vmem>>, %arg8: memref<1x2048xf32, #tpu.memory_space<vmem>>, %arg9: memref<1x128xf32, #tpu.memory_space<vmem>>, %arg10: memref<8x128xf32, #tpu.memory_space<vmem>>, %arg11: memref<128x1024xbf16, #tpu.memory_space<vmem>>, %arg12: memref<1024x1024xbf16, #tpu.memory_space<vmem>>, %arg13: memref<1024x2048xbf16, #tpu.memory_space<vmem>>, %arg14: memref<2048x128xbf16, #tpu.memory_space<vmem>>, %arg15: memref<4x!tpu.dma_semaphore, #tpu.memory_space<semaphore_mem>>) attributes {dimension_semantics = [#tpu.dimension_semantics<arbitrary>], iteration_bounds = array<i64: 1>, scalar_prefetch = 0 : i64, scratch_operands = 5 : i64, tpu.core_type = #tpu.core_type<tc>, window_params = [{transform_indices = @transform_0, window_bounds = array<i64: 8, 128>}, {}, {}, {}, {}, {pipeline_mode = #tpu.pipeline_mode<synchronous>, transform_indices = @transform_5, window_bounds = array<i64: 1, 1024>}, {pipeline_mode = #tpu.pipeline_mode<synchronous>, transform_indices = @transform_6, window_bounds = array<i64: 1, 1024>}, {pipeline_mode = #tpu.pipeline_mode<synchronous>, transform_indices = @transform_7, window_bounds = array<i64: 1, 2048>}, {pipeline_mode = #tpu.pipeline_mode<synchronous>, transform_indices = @transform_8, window_bounds = array<i64: 1, 128>}, {transform_indices = @transform_9, window_bounds = array<i64: 8, 128>}]} {
    %c0_i32 = arith.constant 0 : i32
    %0 = arith.cmpi eq, %arg0, %c0_i32 : i32
    %1 = arith.extui %0 : i1 to i32
    %c0_i32_0 = arith.constant 0 : i32
    %2 = arith.cmpi ne, %1, %c0_i32_0 : i32
    scf.if %2 {
      %c0_i32_26 = arith.constant 0 : i32
      %35 = tpu.memref_slice %arg15[%c0_i32_26] : memref<4x!tpu.dma_semaphore, #tpu.memory_space<semaphore_mem>> -> memref<1x!tpu.dma_semaphore, #tpu.memory_space<semaphore_mem>>
      %36 = tpu.memref_squeeze %35 : memref<1x!tpu.dma_semaphore, #tpu.memory_space<semaphore_mem>> -> memref<!tpu.dma_semaphore, #tpu.memory_space<semaphore_mem>>
      tpu.enqueue_dma source(%arg2 : memref<128x1024xbf16, #tpu.memory_space<any>>) target(%arg11 : memref<128x1024xbf16, #tpu.memory_space<vmem>>) target_semaphore(%36 : memref<!tpu.dma_semaphore, #tpu.memory_space<semaphore_mem>>)
      %c1_i32 = arith.constant 1 : i32
      %37 = tpu.memref_slice %arg15[%c1_i32] : memref<4x!tpu.dma_semaphore, #tpu.memory_space<semaphore_mem>> -> memref<1x!tpu.dma_semaphore, #tpu.memory_space<semaphore_mem>>
      %38 = tpu.memref_squeeze %37 : memref<1x!tpu.dma_semaphore, #tpu.memory_space<semaphore_mem>> -> memref<!tpu.dma_semaphore, #tpu.memory_space<semaphore_mem>>
      tpu.enqueue_dma source(%arg3 : memref<1024x1024xbf16, #tpu.memory_space<any>>) target(%arg12 : memref<1024x1024xbf16, #tpu.memory_space<vmem>>) target_semaphore(%38 : memref<!tpu.dma_semaphore, #tpu.memory_space<semaphore_mem>>)
      %c2_i32 = arith.constant 2 : i32
      %39 = tpu.memref_slice %arg15[%c2_i32] : memref<4x!tpu.dma_semaphore, #tpu.memory_space<semaphore_mem>> -> memref<1x!tpu.dma_semaphore, #tpu.memory_space<semaphore_mem>>
      %40 = tpu.memref_squeeze %39 : memref<1x!tpu.dma_semaphore, #tpu.memory_space<semaphore_mem>> -> memref<!tpu.dma_semaphore, #tpu.memory_space<semaphore_mem>>
      tpu.enqueue_dma source(%arg4 : memref<1024x2048xbf16, #tpu.memory_space<any>>) target(%arg13 : memref<1024x2048xbf16, #tpu.memory_space<vmem>>) target_semaphore(%40 : memref<!tpu.dma_semaphore, #tpu.memory_space<semaphore_mem>>)
      %c3_i32 = arith.constant 3 : i32
      %41 = tpu.memref_slice %arg15[%c3_i32] : memref<4x!tpu.dma_semaphore, #tpu.memory_space<semaphore_mem>> -> memref<1x!tpu.dma_semaphore, #tpu.memory_space<semaphore_mem>>
      %42 = tpu.memref_squeeze %41 : memref<1x!tpu.dma_semaphore, #tpu.memory_space<semaphore_mem>> -> memref<!tpu.dma_semaphore, #tpu.memory_space<semaphore_mem>>
      tpu.enqueue_dma source(%arg5 : memref<2048x128xbf16, #tpu.memory_space<any>>) target(%arg14 : memref<2048x128xbf16, #tpu.memory_space<vmem>>) target_semaphore(%42 : memref<!tpu.dma_semaphore, #tpu.memory_space<semaphore_mem>>)
      %c0_i32_27 = arith.constant 0 : i32
      %43 = tpu.memref_slice %arg15[%c0_i32_27] : memref<4x!tpu.dma_semaphore, #tpu.memory_space<semaphore_mem>> -> memref<1x!tpu.dma_semaphore, #tpu.memory_space<semaphore_mem>>
      %44 = tpu.memref_squeeze %43 : memref<1x!tpu.dma_semaphore, #tpu.memory_space<semaphore_mem>> -> memref<!tpu.dma_semaphore, #tpu.memory_space<semaphore_mem>>
      tpu.wait_dma2 semaphore(%44 : memref<!tpu.dma_semaphore, #tpu.memory_space<semaphore_mem>>) src(%arg2 : memref<128x1024xbf16, #tpu.memory_space<any>>) dst(%arg11 : memref<128x1024xbf16, #tpu.memory_space<vmem>>)
      %c1_i32_28 = arith.constant 1 : i32
      %45 = tpu.memref_slice %arg15[%c1_i32_28] : memref<4x!tpu.dma_semaphore, #tpu.memory_space<semaphore_mem>> -> memref<1x!tpu.dma_semaphore, #tpu.memory_space<semaphore_mem>>
      %46 = tpu.memref_squeeze %45 : memref<1x!tpu.dma_semaphore, #tpu.memory_space<semaphore_mem>> -> memref<!tpu.dma_semaphore, #tpu.memory_space<semaphore_mem>>
      tpu.wait_dma2 semaphore(%46 : memref<!tpu.dma_semaphore, #tpu.memory_space<semaphore_mem>>) src(%arg3 : memref<1024x1024xbf16, #tpu.memory_space<any>>) dst(%arg12 : memref<1024x1024xbf16, #tpu.memory_space<vmem>>)
      %c2_i32_29 = arith.constant 2 : i32
      %47 = tpu.memref_slice %arg15[%c2_i32_29] : memref<4x!tpu.dma_semaphore, #tpu.memory_space<semaphore_mem>> -> memref<1x!tpu.dma_semaphore, #tpu.memory_space<semaphore_mem>>
      %48 = tpu.memref_squeeze %47 : memref<1x!tpu.dma_semaphore, #tpu.memory_space<semaphore_mem>> -> memref<!tpu.dma_semaphore, #tpu.memory_space<semaphore_mem>>
      tpu.wait_dma2 semaphore(%48 : memref<!tpu.dma_semaphore, #tpu.memory_space<semaphore_mem>>) src(%arg4 : memref<1024x2048xbf16, #tpu.memory_space<any>>) dst(%arg13 : memref<1024x2048xbf16, #tpu.memory_space<vmem>>)
      %c3_i32_30 = arith.constant 3 : i32
      %49 = tpu.memref_slice %arg15[%c3_i32_30] : memref<4x!tpu.dma_semaphore, #tpu.memory_space<semaphore_mem>> -> memref<1x!tpu.dma_semaphore, #tpu.memory_space<semaphore_mem>>
      %50 = tpu.memref_squeeze %49 : memref<1x!tpu.dma_semaphore, #tpu.memory_space<semaphore_mem>> -> memref<!tpu.dma_semaphore, #tpu.memory_space<semaphore_mem>>
      tpu.wait_dma2 semaphore(%50 : memref<!tpu.dma_semaphore, #tpu.memory_space<semaphore_mem>>) src(%arg5 : memref<2048x128xbf16, #tpu.memory_space<any>>) dst(%arg14 : memref<2048x128xbf16, #tpu.memory_space<vmem>>)
    } else {
    }
    %c0 = arith.constant 0 : index
    %c0_1 = arith.constant 0 : index
    %3 = vector.load %arg1[%c0, %c0_1] : memref<8x128xf32, #tpu.memory_space<vmem>>, vector<8x128xf32>
    %4 = arith.truncf %3 : vector<8x128xf32> to vector<8x128xbf16>
    %c0_2 = arith.constant 0 : index
    %c0_3 = arith.constant 0 : index
    %5 = vector.load %arg11[%c0_2, %c0_3] : memref<128x1024xbf16, #tpu.memory_space<vmem>>, vector<128x1024xbf16>
    %cst = arith.constant dense<0.000000e+00> : vector<8x1024xf32>
    %6 = tpu.matmul %4, %5, %cst {dimension_numbers = #tpu.dot_dimension_numbers<[1], [0], [0], [1], [0, 0, 1, 1], [], []>} : vector<8x128xbf16>, vector<128x1024xbf16>, vector<8x1024xf32> -> vector<8x1024xf32>
    %c0_4 = arith.constant 0 : index
    %c0_5 = arith.constant 0 : index
    %7 = vector.load %arg6[%c0_4, %c0_5] : memref<1x1024xf32, #tpu.memory_space<vmem>>, vector<1x1024xf32>
    %8 = vector.broadcast %7 : vector<1x1024xf32> to vector<8x1024xf32>
    %9 = arith.addf %6, %8 : vector<8x1024xf32>
    %cst_6 = arith.constant 0.000000e+00 : f32
    %10 = vector.broadcast %cst_6 : f32 to vector<8x1024xf32>
    %11 = arith.maximumf %9, %10 : vector<8x1024xf32>
    %12 = arith.truncf %11 : vector<8x1024xf32> to vector<8x1024xbf16>
    %c0_7 = arith.constant 0 : index
    %c0_8 = arith.constant 0 : index
    %13 = vector.load %arg12[%c0_7, %c0_8] : memref<1024x1024xbf16, #tpu.memory_space<vmem>>, vector<1024x1024xbf16>
    %cst_9 = arith.constant dense<0.000000e+00> : vector<8x1024xf32>
    %14 = tpu.matmul %12, %13, %cst_9 {dimension_numbers = #tpu.dot_dimension_numbers<[1], [0], [0], [1], [0, 0, 1, 1], [], []>} : vector<8x1024xbf16>, vector<1024x1024xbf16>, vector<8x1024xf32> -> vector<8x1024xf32>
    %c0_10 = arith.constant 0 : index
    %c0_11 = arith.constant 0 : index
    %15 = vector.load %arg7[%c0_10, %c0_11] : memref<1x1024xf32, #tpu.memory_space<vmem>>, vector<1x1024xf32>
    %16 = vector.broadcast %15 : vector<1x1024xf32> to vector<8x1024xf32>
    %17 = arith.addf %14, %16 : vector<8x1024xf32>
    %cst_12 = arith.constant 0.000000e+00 : f32
    %18 = vector.broadcast %cst_12 : f32 to vector<8x1024xf32>
    %19 = arith.maximumf %17, %18 : vector<8x1024xf32>
    %20 = arith.truncf %19 : vector<8x1024xf32> to vector<8x1024xbf16>
    %c0_13 = arith.constant 0 : index
    %c0_14 = arith.constant 0 : index
    %21 = vector.load %arg13[%c0_13, %c0_14] : memref<1024x2048xbf16, #tpu.memory_space<vmem>>, vector<1024x2048xbf16>
    %cst_15 = arith.constant dense<0.000000e+00> : vector<8x2048xf32>
    %22 = tpu.matmul %20, %21, %cst_15 {dimension_numbers = #tpu.dot_dimension_numbers<[1], [0], [0], [1], [0, 0, 1, 1], [], []>} : vector<8x1024xbf16>, vector<1024x2048xbf16>, vector<8x2048xf32> -> vector<8x2048xf32>
    %c0_16 = arith.constant 0 : index
    %c0_17 = arith.constant 0 : index
    %23 = vector.load %arg8[%c0_16, %c0_17] : memref<1x2048xf32, #tpu.memory_space<vmem>>, vector<1x2048xf32>
    %24 = vector.broadcast %23 : vector<1x2048xf32> to vector<8x2048xf32>
    %25 = arith.addf %22, %24 : vector<8x2048xf32>
    %cst_18 = arith.constant 0.000000e+00 : f32
    %26 = vector.broadcast %cst_18 : f32 to vector<8x2048xf32>
    %27 = arith.maximumf %25, %26 : vector<8x2048xf32>
    %28 = arith.truncf %27 : vector<8x2048xf32> to vector<8x2048xbf16>
    %c0_19 = arith.constant 0 : index
    %c0_20 = arith.constant 0 : index
    %29 = vector.load %arg14[%c0_19, %c0_20] : memref<2048x128xbf16, #tpu.memory_space<vmem>>, vector<2048x128xbf16>
    %cst_21 = arith.constant dense<0.000000e+00> : vector<8x128xf32>
    %30 = tpu.matmul %28, %29, %cst_21 {dimension_numbers = #tpu.dot_dimension_numbers<[1], [0], [0], [1], [0, 0, 1, 1], [], []>} : vector<8x2048xbf16>, vector<2048x128xbf16>, vector<8x128xf32> -> vector<8x128xf32>
    %c0_22 = arith.constant 0 : index
    %c0_23 = arith.constant 0 : index
    %31 = vector.load %arg9[%c0_22, %c0_23] : memref<1x128xf32, #tpu.memory_space<vmem>>, vector<1x128xf32>
    %32 = vector.broadcast %31 : vector<1x128xf32> to vector<8x128xf32>
    %33 = arith.addf %30, %32 : vector<8x128xf32>
    %c0_24 = arith.constant 0 : index
    %c0_25 = arith.constant 0 : index
    %34 = vector.load %arg10[%c0_24, %c0_25] : memref<8x128xf32, #tpu.memory_space<vmem>>, vector<8x128xf32>
    tpu.vector_store %arg10[%c0_24, %c0_25], %33 {strides = array<i32>} : memref<8x128xf32, #tpu.memory_space<vmem>>, vector<8x128xf32>,
    return
  }
  func.func @transform_0(%arg0: i32) -> (i32, i32) {
    %c0_i32 = arith.constant 0 : i32
    %c0_i32_0 = arith.constant 0 : i32
    return %arg0, %c0_i32 : i32, i32
  }
  func.func @transform_5(%arg0: i32) -> (i32, i32) {
    %c0_i32 = arith.constant 0 : i32
    %c0_i32_0 = arith.constant 0 : i32
    %c0_i32_1 = arith.constant 0 : i32
    return %c0_i32, %c0_i32_0 : i32, i32
  }
  func.func @transform_6(%arg0: i32) -> (i32, i32) {
    %c0_i32 = arith.constant 0 : i32
    %c0_i32_0 = arith.constant 0 : i32
    %c0_i32_1 = arith.constant 0 : i32
    return %c0_i32, %c0_i32_0 : i32, i32
  }
  func.func @transform_7(%arg0: i32) -> (i32, i32) {
    %c0_i32 = arith.constant 0 : i32
    %c0_i32_0 = arith.constant 0 : i32
    %c0_i32_1 = arith.constant 0 : i32
    return %c0_i32, %c0_i32_0 : i32, i32
  }
  func.func @transform_8(%arg0: i32) -> (i32, i32) {
    %c0_i32 = arith.constant 0 : i32
    %c0_i32_0 = arith.constant 0 : i32
    %c0_i32_1 = arith.constant 0 : i32
    return %c0_i32, %c0_i32_0 : i32, i32
  }
  func.func @transform_9(%arg0: i32) -> (i32, i32) {
    %c0_i32 = arith.constant 0 : i32
    %c0_i32_0 = arith.constant 0 : i32
    return %arg0, %c0_i32 : i32, i32
  }
}

</mosaic_0001>

<llo_original>
// kernel: tpu_custom_call.1
$region0: #{tpu_custom_call.1}
  #allocation0 [shape = 'u32[]', space=smem, size = 0x4, offset = 0x4, fixed_abs, tag = 'smem constant byte address 0x4 - core index']
  #allocation1 [shape = 'u32[144,128]{1,0:T(1,128)}', space=vmem, size = 0x12000, scoped, tag = 'internal scratch']
  #allocation2 [shape = 'bf16[128,1024]{1,0:T(16,128)(2,1)}', space=vmem, size = 0x40000, scoped, tag = 'scratch operand']
  #allocation3 [shape = 'bf16[1024,1024]{1,0:T(16,128)(2,1)}', space=vmem, size = 0x200000, scoped, tag = 'scratch operand']
  #allocation4 [shape = 'bf16[1024,2048]{1,0:T(16,128)(2,1)}', space=vmem, size = 0x400000, scoped, tag = 'scratch operand']
  #allocation5 [shape = 'bf16[2048,128]{1,0:T(16,128)(2,1)}', space=vmem, size = 0x80000, scoped, tag = 'scratch operand']
  #allocation6 [shape = 's32[4]{0}', space=sflag, size = 0x10, scoped, tag = 'scratch operand']
  #allocation17 [shape = 's32[]', space=sflag, size = 0x4, offset = 0, fixed_abs, tag = 'sflag constant byte address 0x0 - dummy sync flag']
  #allocation19 [shape = 's32[]', space=sflag, size = 0x4, offset = 0, fixed_abs, tag = 'sflag constant byte address 0x0 - dummy sync flag']
  #allocation21 [shape = 's32[]', space=sflag, size = 0x4, offset = 0, fixed_abs, tag = 'sflag constant byte address 0x0 - dummy sync flag']
  #allocation23 [shape = 's32[]', space=sflag, size = 0x4, offset = 0, fixed_abs, tag = 'sflag constant byte address 0x0 - dummy sync flag']
  #allocation24 [shape = 's32[]', space=sflag, size = 0x4, offset = 0, fixed_abs, tag = 'sflag constant byte address 0x0 - dummy sync flag']
  #allocation25 [shape = 'u32[]', space=smem, size = 0x4, offset = 0x44, fixed_abs, tag = 'smem constant byte address 0x44 - assertion arg 0']
  #allocation26 [shape = 'u32[]', space=smem, size = 0x4, offset = 0x48, fixed_abs, tag = 'smem constant byte address 0x48 - assertion arg 1']
  %s0 = inlined_call_operand.hbm [shape: f32[8,128], index: 0, kind: input, shape index: {}]
  %s1 = inlined_call_operand.hbm [shape: bf16[128,1024], index: 1, kind: input, shape index: {}]
  %s2 = inlined_call_operand.hbm [shape: bf16[1024,1024], index: 2, kind: input, shape index: {}]
  %s3 = inlined_call_operand.hbm [shape: bf16[1024,2048], index: 3, kind: input, shape index: {}]
  %s4 = inlined_call_operand.hbm [shape: bf16[2048,128], index: 4, kind: input, shape index: {}]
  %s5 = inlined_call_operand.hbm [shape: f32[1,1024], index: 5, kind: input, shape index: {}]
  %s6 = inlined_call_operand.hbm [shape: f32[1,1024], index: 6, kind: input, shape index: {}]
  %s7 = inlined_call_operand.hbm [shape: f32[1,2048], index: 7, kind: input, shape index: {}]
  %s8 = inlined_call_operand.hbm [shape: f32[1,128], index: 8, kind: input, shape index: {}]
  %s9 = inlined_call_operand.hbm [shape: f32[8,128], index: 9, kind: output, shape index: {}]
  %s10 = sld [smem:[#allocation0]]
  $region58: #{tpu_custom_call.1} parent=0
    _
  %s12 = ssub.s32 1, %s10
  %s13 = scalar_select 0, %s12, %s10
  $region1: #{tpu_custom_call.1} parent=0
    #allocation7 [shape = 'u8[4096]{0}', space=vmem, size = 0x1000, scoped, tag = 'input window, operand 0, single buffered']
    #allocation8 [shape = 's32[1]{0}', space=sflag, size = 0x4, scoped, tag = 'scoped memory for tpu_custom_call.1']
    #allocation9 [shape = 's32[1]{0}', space=sflag, size = 0x4, scoped, tag = 'scoped memory for tpu_custom_call.1']
    #allocation10 [shape = 'u8[4096]{0}', space=vmem, size = 0x1000, scoped, tag = 'input window, operand 5, single buffered']
    #allocation11 [shape = 's32[1]{0}', space=sflag, size = 0x4, scoped, tag = 'scoped memory for tpu_custom_call.1']
    #allocation12 [shape = 'u8[4096]{0}', space=vmem, size = 0x1000, scoped, tag = 'input window, operand 6, single buffered']
    #allocation13 [shape = 'u8[8192]{0}', space=vmem, size = 0x2000, scoped, tag = 'input window, operand 7, single buffered']
    #allocation14 [shape = 's32[1]{0}', space=sflag, size = 0x4, scoped, tag = 'scoped memory for tpu_custom_call.1']
    #allocation15 [shape = 'u8[512]{0}', space=vmem, size = 0x400, scoped, tag = 'input window, operand 8, single buffered']
    #allocation16 [shape = 'u8[4096]{0}', space=vmem, size = 0x1000, scoped, tag = 'output window, operand 0, single buffered']
    %14 = vsyncpa [#allocation8], 0
    %15 = vsyncpa [#allocation11], 0
    %16 = vsyncpa [#allocation14], 0
    %17 = vsyncpa [#allocation9], 0
    // Predicated region
    $region2: #{tpu_custom_call.1} parent=1 // pred_check
      _
    $region3: #{tpu_custom_call.1} parent=1 // pred_check_branch
      %19 = sbr.rel (0) target = $region5
    $region4: #{tpu_custom_call.1} parent=1 // pred_region
      %s21 = ssub.s32 128, 128
      %22 = vsyncadd [#allocation8], %s21
      %s24 = sshll.u32 [#allocation7], 4
      %s25 = int_to_ptr.vmem [resolvable:$true] %s24
      %27 = dma.hbm_to_vmem [thread:$0]  %s0, 128, %s25, [#allocation8]
    $region5: #{tpu_custom_call.1} parent=1 // pred_fallthru
      _
    // Predicated region
    $region6: #{tpu_custom_call.1} parent=1 // pred_check
      _
    $region7: #{tpu_custom_call.1} parent=1 // pred_check_branch
      %29 = sbr.rel (0) target = $region9
    $region8: #{tpu_custom_call.1} parent=1 // pred_region
      %s31 = ssub.s32 128, 128
      %32 = vsyncadd [#allocation11], %s31
      %s34 = sshll.u32 [#allocation10], 4
      %s35 = int_to_ptr.vmem [resolvable:$true] %s34
      %37 = dma.hbm_to_vmem [thread:$0]  %s5, 128, %s35, [#allocation11]
    $region9: #{tpu_custom_call.1} parent=1 // pred_fallthru
      _
    // Predicated region
    $region10: #{tpu_custom_call.1} parent=1 // pred_check
      _
    $region11: #{tpu_custom_call.1} parent=1 // pred_check_branch
      %39 = sbr.rel (0) target = $region13
    $region12: #{tpu_custom_call.1} parent=1 // pred_region
      %s41 = ssub.s32 128, 128
      %42 = vsyncadd [#allocation11], %s41
      %s44 = sshll.u32 [#allocation12], 4
      %s45 = int_to_ptr.vmem [resolvable:$true] %s44
      %47 = dma.hbm_to_vmem [thread:$0]  %s6, 128, %s45, [#allocation11]
    $region13: #{tpu_custom_call.1} parent=1 // pred_fallthru
      _
    // Predicated region
    $region14: #{tpu_custom_call.1} parent=1 // pred_check
      _
    $region15: #{tpu_custom_call.1} parent=1 // pred_check_branch
      %49 = sbr.rel (0) target = $region17
    $region16: #{tpu_custom_call.1} parent=1 // pred_region
      %s51 = ssub.s32 256, 256
      %52 = vsyncadd [#allocation14], %s51
      %s54 = sshll.u32 [#allocation13], 4
      %s55 = int_to_ptr.vmem [resolvable:$true] %s54
      %57 = dma.hbm_to_vmem [thread:$0]  %s7, 256, %s55, [#allocation14]
    $region17: #{tpu_custom_call.1} parent=1 // pred_fallthru
      _
    // Predicated region
    $region18: #{tpu_custom_call.1} parent=1 // pred_check
      _
    $region19: #{tpu_custom_call.1} parent=1 // pred_check_branch
      %59 = sbr.rel (0) target = $region21
    $region20: #{tpu_custom_call.1} parent=1 // pred_region
      %s61 = ssub.s32 16, 16
      %62 = vsyncadd [#allocation14], %s61
      %s64 = sshll.u32 [#allocation15], 4
      %s65 = int_to_ptr.vmem [resolvable:$true] %s64
      %67 = dma.hbm_to_vmem [thread:$0]  %s8, 16, %s65, [#allocation14]
    $region21: #{tpu_custom_call.1} parent=1 // pred_fallthru
      _
    // Predicated region
    $region22: #{tpu_custom_call.1} parent=1 // pred_check
      _
    $region23: #{tpu_custom_call.1} parent=1 // pred_check_branch
      %69 = sbr.rel (0) target = $region25
    $region24: #{tpu_custom_call.1} parent=1 // pred_region
      %70 = dma.done [#allocation8], 128
    $region25: #{tpu_custom_call.1} parent=1 // pred_fallthru
      _
    // Predicated region
    $region26: #{tpu_custom_call.1} parent=1 // pred_check
      _
    $region27: #{tpu_custom_call.1} parent=1 // pred_check_branch
      %72 = sbr.rel (0) target = $region29
    $region28: #{tpu_custom_call.1} parent=1 // pred_region
      %73 = dma.done [#allocation11], 128
    $region29: #{tpu_custom_call.1} parent=1 // pred_fallthru
      _
    // Predicated region
    $region30: #{tpu_custom_call.1} parent=1 // pred_check
      _
    $region31: #{tpu_custom_call.1} parent=1 // pred_check_branch
      %75 = sbr.rel (0) target = $region33
    $region32: #{tpu_custom_call.1} parent=1 // pred_region
      %76 = dma.done [#allocation11], 128
    $region33: #{tpu_custom_call.1} parent=1 // pred_fallthru
      _
    // Predicated region
    $region34: #{tpu_custom_call.1} parent=1 // pred_check
      _
    $region35: #{tpu_custom_call.1} parent=1 // pred_check_branch
      %78 = sbr.rel (0) target = $region37
    $region36: #{tpu_custom_call.1} parent=1 // pred_region
      %79 = dma.done [#allocation14], 256
    $region37: #{tpu_custom_call.1} parent=1 // pred_fallthru
      _
    // Predicated region
    $region38: #{tpu_custom_call.1} parent=1 // pred_check
      _
    $region39: #{tpu_custom_call.1} parent=1 // pred_check_branch
      %81 = sbr.rel (0) target = $region41
    $region40: #{tpu_custom_call.1} parent=1 // pred_region
      %82 = dma.done [#allocation14], 16
    $region41: #{tpu_custom_call.1} parent=1 // pred_fallthru
      _
    %p84 = scmp.eq.s32.totalorder 0, 0
    // Predicated region
    $region42: #{tpu_custom_call.1} parent=1 // pred_check
      %p85 = pneg %p84
    $region43: #{tpu_custom_call.1} parent=1 // pred_check_branch
      %87 = sbr.rel (%p85) target = $region45
    $region44: #{tpu_custom_call.1} parent=1 // pred_region
      #allocation18 [shape = 'u32[9]{0}', space=smem, size = 0x24, scoped, tag = 'DMA stride descriptor']
      #allocation20 [shape = 'u32[9]{0}', space=smem, size = 0x24, scoped, tag = 'DMA stride descriptor']
      #allocation22 [shape = 'u32[9]{0}', space=smem, size = 0x24, scoped, tag = 'DMA stride descriptor']
      %s89 = sshll.u32 1, 14
      %s90 = sxor.u32 4294967295, %s89
      %s92 = sld [smem:[#allocation0]]
      %s93 = sadd.s32 2, %s92
      %s95 = sshll.u32 7, 26
      %s96 = sxor.u32 4294967295, %s95
      %s97 = sand.u32 0, %s96
      %s98 = sshll.u32 %s93, 26
      %s99 = sor.u32 %s97, %s98
      %s100 = sshll.u32 [#allocation2], 4
      %s101 = int_to_ptr.vmem [resolvable:$true] %s100
      %104 = sst [smem:[#allocation18]] 1024
      %s105 = scalar_lea.smem [#allocation18], 1
      %106 = sst [smem:[%s105]] 1024
      %s107 = scalar_lea.smem [#allocation18], 2
      %108 = sst [smem:[%s107]] 8
      %s109 = scalar_lea.smem [#allocation18], 3
      %110 = sst [smem:[%s109]] 64
      %s111 = scalar_lea.smem [#allocation18], 4
      %112 = sst [smem:[%s111]] 128
      %s113 = scalar_lea.smem [#allocation18], 5
      %114 = sst [smem:[%s113]] 2
      %s115 = scalar_lea.smem [#allocation18], 6
      %116 = sst [smem:[%s115]] 512
      %s117 = scalar_lea.smem [#allocation18], 7
      %118 = sst [smem:[%s117]] 64
      %s119 = scalar_lea.smem [#allocation18], 8
      %120 = sst [smem:[%s119]] 4
      %122 = dma.general %s1, 8192, %s101, [#allocation6], [#allocation17], [#allocation18], %s99, 0
      %s123 = scalar_lea.sflag [#allocation6], 1
      %s125 = sshll.u32 1, 14
      %s126 = sxor.u32 4294967295, %s125
      %s128 = sadd.s32 2, %s92
      %s130 = sshll.u32 7, 26
      %s131 = sxor.u32 4294967295, %s130
      %s132 = sand.u32 0, %s131
      %s133 = sshll.u32 %s128, 26
      %s134 = sor.u32 %s132, %s133
      %s135 = sshll.u32 [#allocation3], 4
      %s136 = int_to_ptr.vmem [resolvable:$true] %s135
      %139 = sst [smem:[#allocation20]] 1024
      %s140 = scalar_lea.smem [#allocation20], 1
      %141 = sst [smem:[%s140]] 1024
      %s142 = scalar_lea.smem [#allocation20], 2
      %143 = sst [smem:[%s142]] 8
      %s144 = scalar_lea.smem [#allocation20], 3
      %145 = sst [smem:[%s144]] 64
      %s146 = scalar_lea.smem [#allocation20], 4
      %147 = sst [smem:[%s146]] 128
      %s148 = scalar_lea.smem [#allocation20], 5
      %149 = sst [smem:[%s148]] 2
      %s150 = scalar_lea.smem [#allocation20], 6
      %151 = sst [smem:[%s150]] 512
      %s152 = scalar_lea.smem [#allocation20], 7
      %153 = sst [smem:[%s152]] 64
      %s154 = scalar_lea.smem [#allocation20], 8
      %155 = sst [smem:[%s154]] 4
      %157 = dma.general %s2, 65536, %s136, %s123, [#allocation19], [#allocation20], %s134, 0
      %s158 = scalar_lea.sflag [#allocation6], 2
      %s160 = sshll.u32 1, 14
      %s161 = sxor.u32 4294967295, %s160
      %s163 = sadd.s32 2, %s92
      %s165 = sshll.u32 7, 26
      %s166 = sxor.u32 4294967295, %s165
      %s167 = sand.u32 0, %s166
      %s168 = sshll.u32 %s163, 26
      %s169 = sor.u32 %s167, %s168
      %s170 = sshll.u32 [#allocation4], 4
      %s171 = int_to_ptr.vmem [resolvable:$true] %s170
      %174 = sst [smem:[#allocation22]] 2048
      %s175 = scalar_lea.smem [#allocation22], 1
      %176 = sst [smem:[%s175]] 2048
      %s177 = scalar_lea.smem [#allocation22], 2
      %178 = sst [smem:[%s177]] 16
      %s179 = scalar_lea.smem [#allocation22], 3
      %180 = sst [smem:[%s179]] 64
      %s181 = scalar_lea.smem [#allocation22], 4
      %182 = sst [smem:[%s181]] 128
      %s183 = scalar_lea.smem [#allocation22], 5
      %184 = sst [smem:[%s183]] 2
      %s185 = scalar_lea.smem [#allocation22], 6
      %186 = sst [smem:[%s185]] 1024
      %s187 = scalar_lea.smem [#allocation22], 7
      %188 = sst [smem:[%s187]] 64
      %s189 = scalar_lea.smem [#allocation22], 8
      %190 = sst [smem:[%s189]] 4
      %192 = dma.general %s3, 131072, %s171, %s158, [#allocation21], [#allocation22], %s169, 0
      %s193 = scalar_lea.sflag [#allocation6], 3
      // Predicated region
      $region46: #{tpu_custom_call.1} parent=44 // pred_check
        _
      $region47: #{tpu_custom_call.1} parent=44 // pred_check_branch
        %195 = sbr.rel target = $region49
      $region48: #{tpu_custom_call.1} parent=44 // pred_region
        %196 = sst [smem:[#allocation25]] [#allocation24]
        %197 = sst [smem:[#allocation26]] [#allocation23]
      $region49: #{tpu_custom_call.1} parent=44 // pred_fallthru
        _
      %199 = shalt.err (0)
      %s201 = sshll.u32 [#allocation5], 4
      %s202 = int_to_ptr.vmem [resolvable:$true] %s201
      %204 = dma.hbm_to_vmem [thread:$0]  %s4, 16384, %s202, %s193
      %s205 = smul.u32 4, 16
      %s206 = smul.u32 %s205, 8
      %s207 = sshll.u32 %s206, 4
      %208 = dma.done [#allocation6], %s207
      %s209 = smul.u32 4, 128
      %s210 = smul.u32 %s209, 8
      %s211 = sshll.u32 %s210, 4
      %212 = dma.done %s123, %s211
      %s213 = smul.u32 %s209, 16
      %s214 = sshll.u32 %s213, 4
      %215 = dma.done %s158, %s214
      %s216 = smul.u32 4, 256
      %s217 = smul.u32 %s216, 1
      %s218 = sshll.u32 %s217, 4
      %219 = dma.done %s193, %s218
    $region45: #{tpu_custom_call.1} parent=1 // pred_fallthru
      _
    %v220 = vld [vmem:[#allocation7] sm:$0xff]
    %v221 = vpack.c.bf16 %v220, %v220
    %v222 = vld [vmem:[#allocation2] sm:$0xff]
    %v223 = vld [vmem:[#allocation2 + $0x8] sm:$0xff]
    %v224 = vld [vmem:[#allocation2 + $0x10] sm:$0xff]
    %v225 = vld [vmem:[#allocation2 + $0x18] sm:$0xff]
    %v226 = vld [vmem:[#allocation2 + $0x20] sm:$0xff]
    %v227 = vld [vmem:[#allocation2 + $0x28] sm:$0xff]
    %v228 = vld [vmem:[#allocation2 + $0x30] sm:$0xff]
    %v229 = vld [vmem:[#allocation2 + $0x38] sm:$0xff]
    %v230 = vld [vmem:[#allocation2 + $0x40] sm:$0xff]
    %v231 = vld [vmem:[#allocation2 + $0x48] sm:$0xff]
    %v232 = vld [vmem:[#allocation2 + $0x50] sm:$0xff]
    %v233 = vld [vmem:[#allocation2 + $0x58] sm:$0xff]
    %v234 = vld [vmem:[#allocation2 + $0x60] sm:$0xff]
    %v235 = vld [vmem:[#allocation2 + $0x68] sm:$0xff]
    %v236 = vld [vmem:[#allocation2 + $0x70] sm:$0xff]
    %v237 = vld [vmem:[#allocation2 + $0x78] sm:$0xff]
    %v238 = vld [vmem:[#allocation2 + $0x80] sm:$0xff]
    %v239 = vld [vmem:[#allocation2 + $0x88] sm:$0xff]
    %v240 = vld [vmem:[#allocation2 + $0x90] sm:$0xff]
    %v241 = vld [vmem:[#allocation2 + $0x98] sm:$0xff]
    %v242 = vld [vmem:[#allocation2 + $0xa0] sm:$0xff]
    %v243 = vld [vmem:[#allocation2 + $0xa8] sm:$0xff]
    %v244 = vld [vmem:[#allocation2 + $0xb0] sm:$0xff]
    %v245 = vld [vmem:[#allocation2 + $0xb8] sm:$0xff]
    %v246 = vld [vmem:[#allocation2 + $0xc0] sm:$0xff]
    %v247 = vld [vmem:[#allocation2 + $0xc8] sm:$0xff]
    %v248 = vld [vmem:[#allocation2 + $0xd0] sm:$0xff]
    %v249 = vld [vmem:[#allocation2 + $0xd8] sm:$0xff]
    %v250 = vld [vmem:[#allocation2 + $0xe0] sm:$0xff]
    %v251 = vld [vmem:[#allocation2 + $0xe8] sm:$0xff]
    %v252 = vld [vmem:[#allocation2 + $0xf0] sm:$0xff]
    %v253 = vld [vmem:[#allocation2 + $0xf8] sm:$0xff]
    %v254 = vld [vmem:[#allocation2 + $0x100] sm:$0xff]
    %v255 = vld [vmem:[#allocation2 + $0x108] sm:$0xff]
    %v256 = vld [vmem:[#allocation2 + $0x110] sm:$0xff]
    %v257 = vld [vmem:[#allocation2 + $0x118] sm:$0xff]
    %v258 = vld [vmem:[#allocation2 + $0x120] sm:$0xff]
    %v259 = vld [vmem:[#allocation2 + $0x128] sm:$0xff]
    %v260 = vld [vmem:[#allocation2 + $0x130] sm:$0xff]
    %v261 = vld [vmem:[#allocation2 + $0x138] sm:$0xff]
    %v262 = vld [vmem:[#allocation2 + $0x140] sm:$0xff]
    %v263 = vld [vmem:[#allocation2 + $0x148] sm:$0xff]
    %v264 = vld [vmem:[#allocation2 + $0x150] sm:$0xff]
    %v265 = vld [vmem:[#allocation2 + $0x158] sm:$0xff]
    %v266 = vld [vmem:[#allocation2 + $0x160] sm:$0xff]
    %v267 = vld [vmem:[#allocation2 + $0x168] sm:$0xff]
    %v268 = vld [vmem:[#allocation2 + $0x170] sm:$0xff]
    %v269 = vld [vmem:[#allocation2 + $0x178] sm:$0xff]
    %v270 = vld [vmem:[#allocation2 + $0x180] sm:$0xff]
    %v271 = vld [vmem:[#allocation2 + $0x188] sm:$0xff]
    %v272 = vld [vmem:[#allocation2 + $0x190] sm:$0xff]
    %v273 = vld [vmem:[#allocation2 + $0x198] sm:$0xff]
    %v274 = vld [vmem:[#allocation2 + $0x1a0] sm:$0xff]
    %v275 = vld [vmem:[#allocation2 + $0x1a8] sm:$0xff]
    %v276 = vld [vmem:[#allocation2 + $0x1b0] sm:$0xff]
    %v277 = vld [vmem:[#allocation2 + $0x1b8] sm:$0xff]
    %v278 = vld [vmem:[#allocation2 + $0x1c0] sm:$0xff]
    %v279 = vld [vmem:[#allocation2 + $0x1c8] sm:$0xff]
    %v280 = vld [vmem:[#allocation2 + $0x1d0] sm:$0xff]
    %v281 = vld [vmem:[#allocation2 + $0x1d8] sm:$0xff]
    %v282 = vld [vmem:[#allocation2 + $0x1e0] sm:$0xff]
    %v283 = vld [vmem:[#allocation2 + $0x1e8] sm:$0xff]
    %v284 = vld [vmem:[#allocation2 + $0x1f0] sm:$0xff]
    %v285 = vld [vmem:[#allocation2 + $0x1f8] sm:$0xff]
    %v286 = vld [vmem:[#allocation10] sm:$0xff]
    %v288 = vlaneseq
    %v289 = vshrl.u32 %v288, 7
    %v290 = vsub.s32 0, %v289
    %v291 = vrot.slane %v286, %v290
    %v292 = vlaneseq
    %v293 = vshrl.u32 %v292, 7
    %v294 = vsub.s32 1, %v293
    %v295 = vrot.slane %v286, %v294
    %v296 = vlaneseq
    %v297 = vshrl.u32 %v296, 7
    %v298 = vsub.s32 2, %v297
    %v299 = vrot.slane %v286, %v298
    %v300 = vlaneseq
    %v301 = vshrl.u32 %v300, 7
    %v302 = vsub.s32 3, %v301
    %v303 = vrot.slane %v286, %v302
    %v304 = vlaneseq
    %v305 = vshrl.u32 %v304, 7
    %v306 = vsub.s32 4, %v305
    %v307 = vrot.slane %v286, %v306
    %v308 = vlaneseq
    %v309 = vshrl.u32 %v308, 7
    %v310 = vsub.s32 5, %v309
    %v311 = vrot.slane %v286, %v310
    %v312 = vlaneseq
    %v313 = vshrl.u32 %v312, 7
    %v314 = vsub.s32 6, %v313
    %v315 = vrot.slane %v286, %v314
    %v316 = vlaneseq
    %v317 = vshrl.u32 %v316, 7
    %v318 = vsub.s32 7, %v317
    %v319 = vrot.slane %v286, %v318
    %328 = vmatprep.subr.bf16.mxu0 %v223
    %329 = vmatpush1.bf16.msra.mxu0 %v222
    %330 = vmatprep.subr.bf16.mxu0 %v231
    %331 = vmatpush1.bf16.msra.mxu0 %v230
    %332 = vmatprep.subr.bf16.mxu0 %v239
    %333 = vmatpush1.bf16.msra.mxu0 %v238
    %334 = vmatprep.subr.bf16.mxu0 %v247
    %335 = vmatpush1.bf16.msra.mxu0 %v246
    %336 = vmatprep.subr.bf16.mxu0 %v255
    %337 = vmatpush1.bf16.msra.mxu0 %v254
    %338 = vmatprep.subr.bf16.mxu0 %v263
    %339 = vmatpush1.bf16.msra.mxu0 %v262
    %340 = vmatprep.subr.bf16.mxu0 %v271
    %341 = vmatpush1.bf16.msra.mxu0 %v270
    %342 = vmatprep.subr.bf16.mxu0 %v279
    %343 = vmatpush1.bf16.msra.mxu0 %v278
    %344 = vmatprep.subr.bf16.mxu0 0
    %345 = vmatpush1.bf16.msra.mxu0 0
    %346 = vmatprep.subr.bf16.mxu0 0
    %347 = vmatpush1.bf16.msra.mxu0 0
    %348 = vmatprep.subr.bf16.mxu0 0
    %349 = vmatpush1.bf16.msra.mxu0 0
    %350 = vmatprep.subr.bf16.mxu0 0
    %351 = vmatpush1.bf16.msra.mxu0 0
    %352 = vmatprep.subr.bf16.mxu0 0
    %353 = vmatpush1.bf16.msra.mxu0 0
    %354 = vmatprep.subr.bf16.mxu0 0
    %355 = vmatpush1.bf16.msra.mxu0 0
    %356 = vmatprep.subr.bf16.mxu0 0
    %357 = vmatpush1.bf16.msra.mxu0 0
    %358 = vmatprep.subr.bf16.mxu0 0
    %359 = vmatpush1.bf16.msra.mxu0 0
    %360 = vmatprep.mubr.bf16.mxu0 0
    %361 = vmatmul.mubr.bf16.gmra.mrb[0].mxu0 %v221
    %v362 = vpop.f32.mrb[0].mxu0
    %v363 = vadd.f32 %v291, %v362
    %v364 = vpop.f32.mrb[0].mxu0
    %v365 = vadd.f32 %v295, %v364
    %v366 = vpop.f32.mrb[0].mxu0
    %v367 = vpop.f32.mrb[0].mxu0
    %368 = vdwg.mxu0
    %369 = vmatprep.subr.bf16.mxu0 %v225
    %370 = vmatpush1.bf16.msra.mxu0 %v224
    %371 = vmatprep.subr.bf16.mxu0 %v233
    %372 = vmatpush1.bf16.msra.mxu0 %v232
    %373 = vmatprep.subr.bf16.mxu0 %v241
    %374 = vmatpush1.bf16.msra.mxu0 %v240
    %375 = vmatprep.subr.bf16.mxu0 %v249
    %376 = vmatpush1.bf16.msra.mxu0 %v248
    %377 = vmatprep.subr.bf16.mxu0 %v257
    %378 = vmatpush1.bf16.msra.mxu0 %v256
    %379 = vmatprep.subr.bf16.mxu0 %v265
    %380 = vmatpush1.bf16.msra.mxu0 %v264
    %381 = vmatprep.subr.bf16.mxu0 %v273
    %382 = vmatpush1.bf16.msra.mxu0 %v272
    %383 = vmatprep.subr.bf16.mxu0 %v281
    %384 = vmatpush1.bf16.msra.mxu0 %v280
    %385 = vmatprep.subr.bf16.mxu0 0
    %386 = vmatpush1.bf16.msra.mxu0 0
    %387 = vmatprep.subr.bf16.mxu0 0
    %388 = vmatpush1.bf16.msra.mxu0 0
    %389 = vmatprep.subr.bf16.mxu0 0
    %390 = vmatpush1.bf16.msra.mxu0 0
    %391 = vmatprep.subr.bf16.mxu0 0
    %392 = vmatpush1.bf16.msra.mxu0 0
    %393 = vmatprep.subr.bf16.mxu0 0
    %394 = vmatpush1.bf16.msra.mxu0 0
    %395 = vmatprep.subr.bf16.mxu0 0
    %396 = vmatpush1.bf16.msra.mxu0 0
    %397 = vmatprep.subr.bf16.mxu0 0
    %398 = vmatpush1.bf16.msra.mxu0 0
    %399 = vmatprep.subr.bf16.mxu0 0
    %400 = vmatpush1.bf16.msra.mxu0 0
    %401 = vmatprep.mubr.bf16.mxu0 0
    %402 = vmatmul.mubr.bf16.gmra.mrb[0].mxu0 %v221
    %v403 = vpop.f32.mrb[0].mxu0
    %v404 = vadd.f32 %v299, %v403
    %v405 = vpop.f32.mrb[0].mxu0
    %v406 = vadd.f32 %v303, %v405
    %v407 = vpop.f32.mrb[0].mxu0
    %v408 = vpop.f32.mrb[0].mxu0
    %409 = vdwg.mxu0
    %410 = vmatprep.subr.bf16.mxu0 %v227
    %411 = vmatpush1.bf16.msra.mxu0 %v226
    %412 = vmatprep.subr.bf16.mxu0 %v235
    %413 = vmatpush1.bf16.msra.mxu0 %v234
    %414 = vmatprep.subr.bf16.mxu0 %v243
    %415 = vmatpush1.bf16.msra.mxu0 %v242
    %416 = vmatprep.subr.bf16.mxu0 %v251
    %417 = vmatpush1.bf16.msra.mxu0 %v250
    %418 = vmatprep.subr.bf16.mxu0 %v259
    %419 = vmatpush1.bf16.msra.mxu0 %v258
    %420 = vmatprep.subr.bf16.mxu0 %v267
    %421 = vmatpush1.bf16.msra.mxu0 %v266
    %422 = vmatprep.subr.bf16.mxu0 %v275
    %423 = vmatpush1.bf16.msra.mxu0 %v274
    %424 = vmatprep.subr.bf16.mxu0 %v283
    %425 = vmatpush1.bf16.msra.mxu0 %v282
    %426 = vmatprep.subr.bf16.mxu0 0
    %427 = vmatpush1.bf16.msra.mxu0 0
    %428 = vmatprep.subr.bf16.mxu0 0
    %429 = vmatpush1.bf16.msra.mxu0 0
    %430 = vmatprep.subr.bf16.mxu0 0
    %431 = vmatpush1.bf16.msra.mxu0 0
    %432 = vmatprep.subr.bf16.mxu0 0
    %433 = vmatpush1.bf16.msra.mxu0 0
    %434 = vmatprep.subr.bf16.mxu0 0
    %435 = vmatpush1.bf16.msra.mxu0 0
    %436 = vmatprep.subr.bf16.mxu0 0
    %437 = vmatpush1.bf16.msra.mxu0 0
    %438 = vmatprep.subr.bf16.mxu0 0
    %439 = vmatpush1.bf16.msra.mxu0 0
    %440 = vmatprep.subr.bf16.mxu0 0
    %441 = vmatpush1.bf16.msra.mxu0 0
    %442 = vmatprep.mubr.bf16.mxu0 0
    %443 = vmatmul.mubr.bf16.gmra.mrb[0].mxu0 %v221
    %v444 = vpop.f32.mrb[0].mxu0
    %v445 = vadd.f32 %v307, %v444
    %v446 = vpop.f32.mrb[0].mxu0
    %v447 = vadd.f32 %v311, %v446
    %v448 = vpop.f32.mrb[0].mxu0
    %v449 = vpop.f32.mrb[0].mxu0
    %450 = vdwg.mxu0
    %451 = vmatprep.subr.bf16.mxu0 %v229
    %452 = vmatpush1.bf16.msra.mxu0 %v228
    %453 = vmatprep.subr.bf16.mxu0 %v237
    %454 = vmatpush1.bf16.msra.mxu0 %v236
    %455 = vmatprep.subr.bf16.mxu0 %v245
    %456 = vmatpush1.bf16.msra.mxu0 %v244
    %457 = vmatprep.subr.bf16.mxu0 %v253
    %458 = vmatpush1.bf16.msra.mxu0 %v252
    %459 = vmatprep.subr.bf16.mxu0 %v261
    %460 = vmatpush1.bf16.msra.mxu0 %v260
    %461 = vmatprep.subr.bf16.mxu0 %v269
    %462 = vmatpush1.bf16.msra.mxu0 %v268
    %463 = vmatprep.subr.bf16.mxu0 %v277
    %464 = vmatpush1.bf16.msra.mxu0 %v276
    %465 = vmatprep.subr.bf16.mxu0 %v285
    %466 = vmatpush1.bf16.msra.mxu0 %v284
    %467 = vmatprep.subr.bf16.mxu0 0
    %468 = vmatpush1.bf16.msra.mxu0 0
    %469 = vmatprep.subr.bf16.mxu0 0
    %470 = vmatpush1.bf16.msra.mxu0 0
    %471 = vmatprep.subr.bf16.mxu0 0
    %472 = vmatpush1.bf16.msra.mxu0 0
    %473 = vmatprep.subr.bf16.mxu0 0
    %474 = vmatpush1.bf16.msra.mxu0 0
    %475 = vmatprep.subr.bf16.mxu0 0
    %476 = vmatpush1.bf16.msra.mxu0 0
    %477 = vmatprep.subr.bf16.mxu0 0
    %478 = vmatpush1.bf16.msra.mxu0 0
    %479 = vmatprep.subr.bf16.mxu0 0
    %480 = vmatpush1.bf16.msra.mxu0 0
    %481 = vmatprep.subr.bf16.mxu0 0
    %482 = vmatpush1.bf16.msra.mxu0 0
    %483 = vmatprep.mubr.bf16.mxu0 0
    %484 = vmatmul.mubr.bf16.gmra.mrb[0].mxu0 %v221
    %v485 = vpop.f32.mrb[0].mxu0
    %v486 = vadd.f32 %v315, %v485
    %v487 = vpop.f32.mrb[0].mxu0
    %v488 = vadd.f32 %v319, %v487
    %v489 = vpop.f32.mrb[0].mxu0
    %v490 = vpop.f32.mrb[0].mxu0
    %491 = vdwg.mxu0
    %v492 = vmax.f32 %v363, 0.0
    %v493 = vmax.f32 %v365, 0.0
    %v494 = vmax.f32 %v404, 0.0
    %v495 = vmax.f32 %v406, 0.0
    %v496 = vmax.f32 %v445, 0.0
    %v497 = vmax.f32 %v447, 0.0
    %v498 = vmax.f32 %v486, 0.0
    %v499 = vmax.f32 %v488, 0.0
    %v500 = vpack.c.bf16 %v492, %v492
    %v501 = vpack.c.bf16 %v493, %v493
    %v502 = vpack.c.bf16 %v494, %v494
    %v503 = vpack.c.bf16 %v495, %v495
    %v504 = vpack.c.bf16 %v496, %v496
    %v505 = vpack.c.bf16 %v497, %v497
    %v506 = vpack.c.bf16 %v498, %v498
    %v507 = vpack.c.bf16 %v499, %v499
    %v508 = vld [vmem:[#allocation3] sm:$0xff]
    %v509 = vld [vmem:[#allocation3 + $0x8] sm:$0xff]
    %v510 = vld [vmem:[#allocation3 + $0x10] sm:$0xff]
    %v511 = vld [vmem:[#allocation3 + $0x18] sm:$0xff]
    %v512 = vld [vmem:[#allocation3 + $0x20] sm:$0xff]
    %v513 = vld [vmem:[#allocation3 + $0x28] sm:$0xff]
    %v514 = vld [vmem:[#allocation3 + $0x30] sm:$0xff]
    %v515 = vld [vmem:[#allocation3 + $0x38] sm:$0xff]
    %v516 = vld [vmem:[#allocation3 + $0x40] sm:$0xff]
    %v517 = vld [vmem:[#allocation3 + $0x48] sm:$0xff]
    %v518 = vld [vmem:[#allocation3 + $0x50] sm:$0xff]
    %v519 = vld [vmem:[#allocation3 + $0x58] sm:$0xff]
    %v520 = vld [vmem:[#allocation3 + $0x60] sm:$0xff]
    %v521 = vld [vmem:[#allocation3 + $0x68] sm:$0xff]
    %v522 = vld [vmem:[#allocation3 + $0x70] sm:$0xff]
    %v523 = vld [vmem:[#allocation3 + $0x78] sm:$0xff]
    %v524 = vld [vmem:[#allocation3 + $0x80] sm:$0xff]
    %v525 = vld [vmem:[#allocation3 + $0x88] sm:$0xff]
    %v526 = vld [vmem:[#allocation3 + $0x90] sm:$0xff]
    %v527 = vld [vmem:[#allocation3 + $0x98] sm:$0xff]
    %v528 = vld [vmem:[#allocation3 + $0xa0] sm:$0xff]
    %v529 = vld [vmem:[#allocation3 + $0xa8] sm:$0xff]
    %v530 = vld [vmem:[#allocation3 + $0xb0] sm:$0xff]
    %v531 = vld [vmem:[#allocation3 + $0xb8] sm:$0xff]
    %v532 = vld [vmem:[#allocation3 + $0xc0] sm:$0xff]
    %v533 = vld [vmem:[#allocation3 + $0xc8] sm:$0xff]
    %v534 = vld [vmem:[#allocation3 + $0xd0] sm:$0xff]
    %v535 = vld [vmem:[#allocation3 + $0xd8] sm:$0xff]
    %v536 = vld [vmem:[#allocation3 + $0xe0] sm:$0xff]
    %v537 = vld [vmem:[#allocation3 + $0xe8] sm:$0xff]
    %v538 = vld [vmem:[#allocation3 + $0xf0] sm:$0xff]
    %v539 = vld [vmem:[#allocation3 + $0xf8] sm:$0xff]
    %v540 = vld [vmem:[#allocation3 + $0x100] sm:$0xff]
    %v541 = vld [vmem:[#allocation3 + $0x108] sm:$0xff]
    %v542 = vld [vmem:[#allocation3 + $0x110] sm:$0xff]
    %v543 = vld [vmem:[#allocation3 + $0x118] sm:$0xff]
    %v544 = vld [vmem:[#allocation3 + $0x120] sm:$0xff]
    %v545 = vld [vmem:[#allocation3 + $0x128] sm:$0xff]
    %v546 = vld [vmem:[#allocation3 + $0x130] sm:$0xff]
    %v547 = vld [vmem:[#allocation3 + $0x138] sm:$0xff]
    %v548 = vld [vmem:[#allocation3 + $0x140] sm:$0xff]
    %v549 = vld [vmem:[#allocation3 + $0x148] sm:$0xff]
    %v550 = vld [vmem:[#allocation3 + $0x150] sm:$0xff]
    %v551 = vld [vmem:[#allocation3 + $0x158] sm:$0xff]
    %v552 = vld [vmem:[#allocation3 + $0x160] sm:$0xff]
    %v553 = vld [vmem:[#allocation3 + $0x168] sm:$0xff]
    %v554 = vld [vmem:[#allocation3 + $0x170] sm:$0xff]
    %v555 = vld [vmem:[#allocation3 + $0x178] sm:$0xff]
    %v556 = vld [vmem:[#allocation3 + $0x180] sm:$0xff]
    %v557 = vld [vmem:[#allocation3 + $0x188] sm:$0xff]
    %v558 = vld [vmem:[#allocation3 + $0x190] sm:$0xff]
    %v559 = vld [vmem:[#allocation3 + $0x198] sm:$0xff]
    %v560 = vld [vmem:[#allocation3 + $0x1a0] sm:$0xff]
    %v561 = vld [vmem:[#allocation3 + $0x1a8] sm:$0xff]
    %v562 = vld [vmem:[#allocation3 + $0x1b0] sm:$0xff]
    %v563 = vld [vmem:[#allocation3 + $0x1b8] sm:$0xff]
    %v564 = vld [vmem:[#allocation3 + $0x1c0] sm:$0xff]
    %v565 = vld [vmem:[#allocation3 + $0x1c8] sm:$0xff]
    %v566 = vld [vmem:[#allocation3 + $0x1d0] sm:$0xff]
    %v567 = vld [vmem:[#allocation3 + $0x1d8] sm:$0xff]
    %v568 = vld [vmem:[#allocation3 + $0x1e0] sm:$0xff]
    %v569 = vld [vmem:[#allocation3 + $0x1e8] sm:$0xff]
    %v570 = vld [vmem:[#allocation3 + $0x1f0] sm:$0xff]
    %v571 = vld [vmem:[#allocation3 + $0x1f8] sm:$0xff]
    %v572 = vld [vmem:[#allocation3 + $0x200] sm:$0xff]
    %v573 = vld [vmem:[#allocation3 + $0x208] sm:$0xff]
    %v574 = vld [vmem:[#allocation3 + $0x210] sm:$0xff]
    %v575 = vld [vmem:[#allocation3 + $0x218] sm:$0xff]
    %v576 = vld [vmem:[#allocation3 + $0x220] sm:$0xff]
    %v577 = vld [vmem:[#allocation3 + $0x228] sm:$0xff]
    %v578 = vld [vmem:[#allocation3 + $0x230] sm:$0xff]
    %v579 = vld [vmem:[#allocation3 + $0x238] sm:$0xff]
    %v580 = vld [vmem:[#allocation3 + $0x240] sm:$0xff]
    %v581 = vld [vmem:[#allocation3 + $0x248] sm:$0xff]
    %v582 = vld [vmem:[#allocation3 + $0x250] sm:$0xff]
    %v583 = vld [vmem:[#allocation3 + $0x258] sm:$0xff]
    %v584 = vld [vmem:[#allocation3 + $0x260] sm:$0xff]
    %v585 = vld [vmem:[#allocation3 + $0x268] sm:$0xff]
    %v586 = vld [vmem:[#allocation3 + $0x270] sm:$0xff]
    %v587 = vld [vmem:[#allocation3 + $0x278] sm:$0xff]
    %v588 = vld [vmem:[#allocation3 + $0x280] sm:$0xff]
    %v589 = vld [vmem:[#allocation3 + $0x288] sm:$0xff]
    %v590 = vld [vmem:[#allocation3 + $0x290] sm:$0xff]
    %v591 = vld [vmem:[#allocation3 + $0x298] sm:$0xff]
    %v592 = vld [vmem:[#allocation3 + $0x2a0] sm:$0xff]
    %v593 = vld [vmem:[#allocation3 + $0x2a8] sm:$0xff]
    %v594 = vld [vmem:[#allocation3 + $0x2b0] sm:$0xff]
    %v595 = vld [vmem:[#allocation3 + $0x2b8] sm:$0xff]
    %v596 = vld [vmem:[#allocation3 + $0x2c0] sm:$0xff]
    %v597 = vld [vmem:[#allocation3 + $0x2c8] sm:$0xff]
    %v598 = vld [vmem:[#allocation3 + $0x2d0] sm:$0xff]
    %v599 = vld [vmem:[#allocation3 + $0x2d8] sm:$0xff]
    %v600 = vld [vmem:[#allocation3 + $0x2e0] sm:$0xff]
    %v601 = vld [vmem:[#allocation3 + $0x2e8] sm:$0xff]
    %v602 = vld [vmem:[#allocation3 + $0x2f0] sm:$0xff]
    %v603 = vld [vmem:[#allocation3 + $0x2f8] sm:$0xff]
    %v604 = vld [vmem:[#allocation3 + $0x300] sm:$0xff]
    %v605 = vld [vmem:[#allocation3 + $0x308] sm:$0xff]
    %v606 = vld [vmem:[#allocation3 + $0x310] sm:$0xff]
    %v607 = vld [vmem:[#allocation3 + $0x318] sm:$0xff]
    %v608 = vld [vmem:[#allocation3 + $0x320] sm:$0xff]
    %v609 = vld [vmem:[#allocation3 + $0x328] sm:$0xff]
    %v610 = vld [vmem:[#allocation3 + $0x330] sm:$0xff]
    %v611 = vld [vmem:[#allocation3 + $0x338] sm:$0xff]
    %v612 = vld [vmem:[#allocation3 + $0x340] sm:$0xff]
    %v613 = vld [vmem:[#allocation3 + $0x348] sm:$0xff]
    %v614 = vld [vmem:[#allocation3 + $0x350] sm:$0xff]
    %v615 = vld [vmem:[#allocation3 + $0x358] sm:$0xff]
    %v616 = vld [vmem:[#allocation3 + $0x360] sm:$0xff]
    %v617 = vld [vmem:[#allocation3 + $0x368] sm:$0xff]
    %v618 = vld [vmem:[#allocation3 + $0x370] sm:$0xff]
    %v619 = vld [vmem:[#allocation3 + $0x378] sm:$0xff]
    %v620 = vld [vmem:[#allocation3 + $0x380] sm:$0xff]
    %v621 = vld [vmem:[#allocation3 + $0x388] sm:$0xff]
    %v622 = vld [vmem:[#allocation3 + $0x390] sm:$0xff]
    %v623 = vld [vmem:[#allocation3 + $0x398] sm:$0xff]
    %v624 = vld [vmem:[#allocation3 + $0x3a0] sm:$0xff]
    %v625 = vld [vmem:[#allocation3 + $0x3a8] sm:$0xff]
    %v626 = vld [vmem:[#allocation3 + $0x3b0] sm:$0xff]
    %v627 = vld [vmem:[#allocation3 + $0x3b8] sm:$0xff]
    %v628 = vld [vmem:[#allocation3 + $0x3c0] sm:$0xff]
    %v629 = vld [vmem:[#allocation3 + $0x3c8] sm:$0xff]
    %v630 = vld [vmem:[#allocation3 + $0x3d0] sm:$0xff]
    %v631 = vld [vmem:[#allocation3 + $0x3d8] sm:$0xff]
    %v632 = vld [vmem:[#allocation3 + $0x3e0] sm:$0xff]
    %v633 = vld [vmem:[#allocation3 + $0x3e8] sm:$0xff]
    %v634 = vld [vmem:[#allocation3 + $0x3f0] sm:$0xff]
    %v635 = vld [vmem:[#allocation3 + $0x3f8] sm:$0xff]
    %v636 = vld [vmem:[#allocation3 + $0x400] sm:$0xff]
    %v637 = vld [vmem:[#allocation3 + $0x408] sm:$0xff]
    %v638 = vld [vmem:[#allocation3 + $0x410] sm:$0xff]
    %v639 = vld [vmem:[#allocation3 + $0x418] sm:$0xff]
    %v640 = vld [vmem:[#allocation3 + $0x420] sm:$0xff]
    %v641 = vld [vmem:[#allocation3 + $0x428] sm:$0xff]
    %v642 = vld [vmem:[#allocation3 + $0x430] sm:$0xff]
    %v643 = vld [vmem:[#allocation3 + $0x438] sm:$0xff]
    %v644 = vld [vmem:[#allocation3 + $0x440] sm:$0xff]
    %v645 = vld [vmem:[#allocation3 + $0x448] sm:$0xff]
    %v646 = vld [vmem:[#allocation3 + $0x450] sm:$0xff]
    %v647 = vld [vmem:[#allocation3 + $0x458] sm:$0xff]
    %v648 = vld [vmem:[#allocation3 + $0x460] sm:$0xff]
    %v649 = vld [vmem:[#allocation3 + $0x468] sm:$0xff]
    %v650 = vld [vmem:[#allocation3 + $0x470] sm:$0xff]
    %v651 = vld [vmem:[#allocation3 + $0x478] sm:$0xff]
    %v652 = vld [vmem:[#allocation3 + $0x480] sm:$0xff]
    %v653 = vld [vmem:[#allocation3 + $0x488] sm:$0xff]
    %v654 = vld [vmem:[#allocation3 + $0x490] sm:$0xff]
    %v655 = vld [vmem:[#allocation3 + $0x498] sm:$0xff]
    %v656 = vld [vmem:[#allocation3 + $0x4a0] sm:$0xff]
    %v657 = vld [vmem:[#allocation3 + $0x4a8] sm:$0xff]
    %v658 = vld [vmem:[#allocation3 + $0x4b0] sm:$0xff]
    %v659 = vld [vmem:[#allocation3 + $0x4b8] sm:$0xff]
    %v660 = vld [vmem:[#allocation3 + $0x4c0] sm:$0xff]
    %v661 = vld [vmem:[#allocation3 + $0x4c8] sm:$0xff]
    %v662 = vld [vmem:[#allocation3 + $0x4d0] sm:$0xff]
    %v663 = vld [vmem:[#allocation3 + $0x4d8] sm:$0xff]
    %v664 = vld [vmem:[#allocation3 + $0x4e0] sm:$0xff]
    %v665 = vld [vmem:[#allocation3 + $0x4e8] sm:$0xff]
    %v666 = vld [vmem:[#allocation3 + $0x4f0] sm:$0xff]
    %v667 = vld [vmem:[#allocation3 + $0x4f8] sm:$0xff]
    %v668 = vld [vmem:[#allocation3 + $0x500] sm:$0xff]
    %v669 = vld [vmem:[#allocation3 + $0x508] sm:$0xff]
    %v670 = vld [vmem:[#allocation3 + $0x510] sm:$0xff]
    %v671 = vld [vmem:[#allocation3 + $0x518] sm:$0xff]
    %v672 = vld [vmem:[#allocation3 + $0x520] sm:$0xff]
    %v673 = vld [vmem:[#allocation3 + $0x528] sm:$0xff]
    %v674 = vld [vmem:[#allocation3 + $0x530] sm:$0xff]
    %v675 = vld [vmem:[#allocation3 + $0x538] sm:$0xff]
    %v676 = vld [vmem:[#allocation3 + $0x540] sm:$0xff]
    %v677 = vld [vmem:[#allocation3 + $0x548] sm:$0xff]
    %v678 = vld [vmem:[#allocation3 + $0x550] sm:$0xff]
    %v679 = vld [vmem:[#allocation3 + $0x558] sm:$0xff]
    %v680 = vld [vmem:[#allocation3 + $0x560] sm:$0xff]
    %v681 = vld [vmem:[#allocation3 + $0x568] sm:$0xff]
    %v682 = vld [vmem:[#allocation3 + $0x570] sm:$0xff]
    %v683 = vld [vmem:[#allocation3 + $0x578] sm:$0xff]
    %v684 = vld [vmem:[#allocation3 + $0x580] sm:$0xff]
    %v685 = vld [vmem:[#allocation3 + $0x588] sm:$0xff]
    %v686 = vld [vmem:[#allocation3 + $0x590] sm:$0xff]
    %v687 = vld [vmem:[#allocation3 + $0x598] sm:$0xff]
    %v688 = vld [vmem:[#allocation3 + $0x5a0] sm:$0xff]
    %v689 = vld [vmem:[#allocation3 + $0x5a8] sm:$0xff]
    %v690 = vld [vmem:[#allocation3 + $0x5b0] sm:$0xff]
    %v691 = vld [vmem:[#allocation3 + $0x5b8] sm:$0xff]
    %v692 = vld [vmem:[#allocation3 + $0x5c0] sm:$0xff]
    %v693 = vld [vmem:[#allocation3 + $0x5c8] sm:$0xff]
    %v694 = vld [vmem:[#allocation3 + $0x5d0] sm:$0xff]
    %v695 = vld [vmem:[#allocation3 + $0x5d8] sm:$0xff]
    %v696 = vld [vmem:[#allocation3 + $0x5e0] sm:$0xff]
    %v697 = vld [vmem:[#allocation3 + $0x5e8] sm:$0xff]
    %v698 = vld [vmem:[#allocation3 + $0x5f0] sm:$0xff]
    %v699 = vld [vmem:[#allocation3 + $0x5f8] sm:$0xff]
    %v700 = vld [vmem:[#allocation3 + $0x600] sm:$0xff]
    %v701 = vld [vmem:[#allocation3 + $0x608] sm:$0xff]
    %v702 = vld [vmem:[#allocation3 + $0x610] sm:$0xff]
    %v703 = vld [vmem:[#allocation3 + $0x618] sm:$0xff]
    %v704 = vld [vmem:[#allocation3 + $0x620] sm:$0xff]
    %v705 = vld [vmem:[#allocation3 + $0x628] sm:$0xff]
    %v706 = vld [vmem:[#allocation3 + $0x630] sm:$0xff]
    %v707 = vld [vmem:[#allocation3 + $0x638] sm:$0xff]
    %v708 = vld [vmem:[#allocation3 + $0x640] sm:$0xff]
    %v709 = vld [vmem:[#allocation3 + $0x648] sm:$0xff]
    %v710 = vld [vmem:[#allocation3 + $0x650] sm:$0xff]
    %v711 = vld [vmem:[#allocation3 + $0x658] sm:$0xff]
    %v712 = vld [vmem:[#allocation3 + $0x660] sm:$0xff]
    %v713 = vld [vmem:[#allocation3 + $0x668] sm:$0xff]
    %v714 = vld [vmem:[#allocation3 + $0x670] sm:$0xff]
    %v715 = vld [vmem:[#allocation3 + $0x678] sm:$0xff]
    %v716 = vld [vmem:[#allocation3 + $0x680] sm:$0xff]
    %v717 = vld [vmem:[#allocation3 + $0x688] sm:$0xff]
    %v718 = vld [vmem:[#allocation3 + $0x690] sm:$0xff]
    %v719 = vld [vmem:[#allocation3 + $0x698] sm:$0xff]
    %v720 = vld [vmem:[#allocation3 + $0x6a0] sm:$0xff]
    %v721 = vld [vmem:[#allocation3 + $0x6a8] sm:$0xff]
    %v722 = vld [vmem:[#allocation3 + $0x6b0] sm:$0xff]
    %v723 = vld [vmem:[#allocation3 + $0x6b8] sm:$0xff]
    %v724 = vld [vmem:[#allocation3 + $0x6c0] sm:$0xff]
    %v725 = vld [vmem:[#allocation3 + $0x6c8] sm:$0xff]
    %v726 = vld [vmem:[#allocation3 + $0x6d0] sm:$0xff]
    %v727 = vld [vmem:[#allocation3 + $0x6d8] sm:$0xff]
    %v728 = vld [vmem:[#allocation3 + $0x6e0] sm:$0xff]
    %v729 = vld [vmem:[#allocation3 + $0x6e8] sm:$0xff]
    %v730 = vld [vmem:[#allocation3 + $0x6f0] sm:$0xff]
    %v731 = vld [vmem:[#allocation3 + $0x6f8] sm:$0xff]
    %v732 = vld [vmem:[#allocation3 + $0x700] sm:$0xff]
    %v733 = vld [vmem:[#allocation3 + $0x708] sm:$0xff]
    %v734 = vld [vmem:[#allocation3 + $0x710] sm:$0xff]
    %v735 = vld [vmem:[#allocation3 + $0x718] sm:$0xff]
    %v736 = vld [vmem:[#allocation3 + $0x720] sm:$0xff]
    %v737 = vld [vmem:[#allocation3 + $0x728] sm:$0xff]
    %v738 = vld [vmem:[#allocation3 + $0x730] sm:$0xff]
    %v739 = vld [vmem:[#allocation3 + $0x738] sm:$0xff]
    %v740 = vld [vmem:[#allocation3 + $0x740] sm:$0xff]
    %v741 = vld [vmem:[#allocation3 + $0x748] sm:$0xff]
    %v742 = vld [vmem:[#allocation3 + $0x750] sm:$0xff]
    %v743 = vld [vmem:[#allocation3 + $0x758] sm:$0xff]
    %v744 = vld [vmem:[#allocation3 + $0x760] sm:$0xff]
    %v745 = vld [vmem:[#allocation3 + $0x768] sm:$0xff]
    %v746 = vld [vmem:[#allocation3 + $0x770] sm:$0xff]
    %v747 = vld [vmem:[#allocation3 + $0x778] sm:$0xff]
    %v748 = vld [vmem:[#allocation3 + $0x780] sm:$0xff]
    %v749 = vld [vmem:[#allocation3 + $0x788] sm:$0xff]
    %v750 = vld [vmem:[#allocation3 + $0x790] sm:$0xff]
    %v751 = vld [vmem:[#allocation3 + $0x798] sm:$0xff]
    %v752 = vld [vmem:[#allocation3 + $0x7a0] sm:$0xff]
    %v753 = vld [vmem:[#allocation3 + $0x7a8] sm:$0xff]
    %v754 = vld [vmem:[#allocation3 + $0x7b0] sm:$0xff]
    %v755 = vld [vmem:[#allocation3 + $0x7b8] sm:$0xff]
    %v756 = vld [vmem:[#allocation3 + $0x7c0] sm:$0xff]
    %v757 = vld [vmem:[#allocation3 + $0x7c8] sm:$0xff]
    %v758 = vld [vmem:[#allocation3 + $0x7d0] sm:$0xff]
    %v759 = vld [vmem:[#allocation3 + $0x7d8] sm:$0xff]
    %v760 = vld [vmem:[#allocation3 + $0x7e0] sm:$0xff]
    %v761 = vld [vmem:[#allocation3 + $0x7e8] sm:$0xff]
    %v762 = vld [vmem:[#allocation3 + $0x7f0] sm:$0xff]
    %v763 = vld [vmem:[#allocation3 + $0x7f8] sm:$0xff]
    %v764 = vld [vmem:[#allocation3 + $0x800] sm:$0xff]
    %v765 = vld [vmem:[#allocation3 + $0x808] sm:$0xff]
    %v766 = vld [vmem:[#allocation3 + $0x810] sm:$0xff]
    %v767 = vld [vmem:[#allocation3 + $0x818] sm:$0xff]
    %v768 = vld [vmem:[#allocation3 + $0x820] sm:$0xff]
    %v769 = vld [vmem:[#allocation3 + $0x828] sm:$0xff]
    %v770 = vld [vmem:[#allocation3 + $0x830] sm:$0xff]
    %v771 = vld [vmem:[#allocation3 + $0x838] sm:$0xff]
    %v772 = vld [vmem:[#allocation3 + $0x840] sm:$0xff]
    %v773 = vld [vmem:[#allocation3 + $0x848] sm:$0xff]
    %v774 = vld [vmem:[#allocation3 + $0x850] sm:$0xff]
    %v775 = vld [vmem:[#allocation3 + $0x858] sm:$0xff]
    %v776 = vld [vmem:[#allocation3 + $0x860] sm:$0xff]
    %v777 = vld [vmem:[#allocation3 + $0x868] sm:$0xff]
    %v778 = vld [vmem:[#allocation3 + $0x870] sm:$0xff]
    %v779 = vld [vmem:[#allocation3 + $0x878] sm:$0xff]
    %v780 = vld [vmem:[#allocation3 + $0x880] sm:$0xff]
    %v781 = vld [vmem:[#allocation3 + $0x888] sm:$0xff]
    %v782 = vld [vmem:[#allocation3 + $0x890] sm:$0xff]
    %v783 = vld [vmem:[#allocation3 + $0x898] sm:$0xff]
    %v784 = vld [vmem:[#allocation3 + $0x8a0] sm:$0xff]
    %v785 = vld [vmem:[#allocation3 + $0x8a8] sm:$0xff]
    %v786 = vld [vmem:[#allocation3 + $0x8b0] sm:$0xff]
    %v787 = vld [vmem:[#allocation3 + $0x8b8] sm:$0xff]
    %v788 = vld [vmem:[#allocation3 + $0x8c0] sm:$0xff]
    %v789 = vld [vmem:[#allocation3 + $0x8c8] sm:$0xff]
    %v790 = vld [vmem:[#allocation3 + $0x8d0] sm:$0xff]
    %v791 = vld [vmem:[#allocation3 + $0x8d8] sm:$0xff]
    %v792 = vld [vmem:[#allocation3 + $0x8e0] sm:$0xff]
    %v793 = vld [vmem:[#allocation3 + $0x8e8] sm:$0xff]
    %v794 = vld [vmem:[#allocation3 + $0x8f0] sm:$0xff]
    %v795 = vld [vmem:[#allocation3 + $0x8f8] sm:$0xff]
    %v796 = vld [vmem:[#allocation3 + $0x900] sm:$0xff]
    %v797 = vld [vmem:[#allocation3 + $0x908] sm:$0xff]
    %v798 = vld [vmem:[#allocation3 + $0x910] sm:$0xff]
    %v799 = vld [vmem:[#allocation3 + $0x918] sm:$0xff]
    %v800 = vld [vmem:[#allocation3 + $0x920] sm:$0xff]
    %v801 = vld [vmem:[#allocation3 + $0x928] sm:$0xff]
    %v802 = vld [vmem:[#allocation3 + $0x930] sm:$0xff]
    %v803 = vld [vmem:[#allocation3 + $0x938] sm:$0xff]
    %v804 = vld [vmem:[#allocation3 + $0x940] sm:$0xff]
    %v805 = vld [vmem:[#allocation3 + $0x948] sm:$0xff]
    %v806 = vld [vmem:[#allocation3 + $0x950] sm:$0xff]
    %v807 = vld [vmem:[#allocation3 + $0x958] sm:$0xff]
    %v808 = vld [vmem:[#allocation3 + $0x960] sm:$0xff]
    %v809 = vld [vmem:[#allocation3 + $0x968] sm:$0xff]
    %v810 = vld [vmem:[#allocation3 + $0x970] sm:$0xff]
    %v811 = vld [vmem:[#allocation3 + $0x978] sm:$0xff]
    %v812 = vld [vmem:[#allocation3 + $0x980] sm:$0xff]
    %v813 = vld [vmem:[#allocation3 + $0x988] sm:$0xff]
    %v814 = vld [vmem:[#allocation3 + $0x990] sm:$0xff]
    %v815 = vld [vmem:[#allocation3 + $0x998] sm:$0xff]
    %v816 = vld [vmem:[#allocation3 + $0x9a0] sm:$0xff]
    %v817 = vld [vmem:[#allocation3 + $0x9a8] sm:$0xff]
    %v818 = vld [vmem:[#allocation3 + $0x9b0] sm:$0xff]
    %v819 = vld [vmem:[#allocation3 + $0x9b8] sm:$0xff]
    %v820 = vld [vmem:[#allocation3 + $0x9c0] sm:$0xff]
    %v821 = vld [vmem:[#allocation3 + $0x9c8] sm:$0xff]
    %v822 = vld [vmem:[#allocation3 + $0x9d0] sm:$0xff]
    %v823 = vld [vmem:[#allocation3 + $0x9d8] sm:$0xff]
    %v824 = vld [vmem:[#allocation3 + $0x9e0] sm:$0xff]
    %v825 = vld [vmem:[#allocation3 + $0x9e8] sm:$0xff]
    %v826 = vld [vmem:[#allocation3 + $0x9f0] sm:$0xff]
    %v827 = vld [vmem:[#allocation3 + $0x9f8] sm:$0xff]
    %v828 = vld [vmem:[#allocation3 + $0xa00] sm:$0xff]
    %v829 = vld [vmem:[#allocation3 + $0xa08] sm:$0xff]
    %v830 = vld [vmem:[#allocation3 + $0xa10] sm:$0xff]
    %v831 = vld [vmem:[#allocation3 + $0xa18] sm:$0xff]
    %v832 = vld [vmem:[#allocation3 + $0xa20] sm:$0xff]
    %v833 = vld [vmem:[#allocation3 + $0xa28] sm:$0xff]
    %v834 = vld [vmem:[#allocation3 + $0xa30] sm:$0xff]
    %v835 = vld [vmem:[#allocation3 + $0xa38] sm:$0xff]
    %v836 = vld [vmem:[#allocation3 + $0xa40] sm:$0xff]
    %v837 = vld [vmem:[#allocation3 + $0xa48] sm:$0xff]
    %v838 = vld [vmem:[#allocation3 + $0xa50] sm:$0xff]
    %v839 = vld [vmem:[#allocation3 + $0xa58] sm:$0xff]
    %v840 = vld [vmem:[#allocation3 + $0xa60] sm:$0xff]
    %v841 = vld [vmem:[#allocation3 + $0xa68] sm:$0xff]
    %v842 = vld [vmem:[#allocation3 + $0xa70] sm:$0xff]
    %v843 = vld [vmem:[#allocation3 + $0xa78] sm:$0xff]
    %v844 = vld [vmem:[#allocation3 + $0xa80] sm:$0xff]
    %v845 = vld [vmem:[#allocation3 + $0xa88] sm:$0xff]
    %v846 = vld [vmem:[#allocation3 + $0xa90] sm:$0xff]
    %v847 = vld [vmem:[#allocation3 + $0xa98] sm:$0xff]
    %v848 = vld [vmem:[#allocation3 + $0xaa0] sm:$0xff]
    %v849 = vld [vmem:[#allocation3 + $0xaa8] sm:$0xff]
    %v850 = vld [vmem:[#allocation3 + $0xab0] sm:$0xff]
    %v851 = vld [vmem:[#allocation3 + $0xab8] sm:$0xff]
    %v852 = vld [vmem:[#allocation3 + $0xac0] sm:$0xff]
    %v853 = vld [vmem:[#allocation3 + $0xac8] sm:$0xff]
    %v854 = vld [vmem:[#allocation3 + $0xad0] sm:$0xff]
    %v855 = vld [vmem:[#allocation3 + $0xad8] sm:$0xff]
    %v856 = vld [vmem:[#allocation3 + $0xae0] sm:$0xff]
    %v857 = vld [vmem:[#allocation3 + $0xae8] sm:$0xff]
    %v858 = vld [vmem:[#allocation3 + $0xaf0] sm:$0xff]
    %v859 = vld [vmem:[#allocation3 + $0xaf8] sm:$0xff]
    %v860 = vld [vmem:[#allocation3 + $0xb00] sm:$0xff]
    %v861 = vld [vmem:[#allocation3 + $0xb08] sm:$0xff]
    %v862 = vld [vmem:[#allocation3 + $0xb10] sm:$0xff]
    %v863 = vld [vmem:[#allocation3 + $0xb18] sm:$0xff]
    %v864 = vld [vmem:[#allocation3 + $0xb20] sm:$0xff]
    %v865 = vld [vmem:[#allocation3 + $0xb28] sm:$0xff]
    %v866 = vld [vmem:[#allocation3 + $0xb30] sm:$0xff]
    %v867 = vld [vmem:[#allocation3 + $0xb38] sm:$0xff]
    %v868 = vld [vmem:[#allocation3 + $0xb40] sm:$0xff]
    %v869 = vld [vmem:[#allocation3 + $0xb48] sm:$0xff]
    %v870 = vld [vmem:[#allocation3 + $0xb50] sm:$0xff]
    %v871 = vld [vmem:[#allocation3 + $0xb58] sm:$0xff]
    %v872 = vld [vmem:[#allocation3 + $0xb60] sm:$0xff]
    %v873 = vld [vmem:[#allocation3 + $0xb68] sm:$0xff]
    %v874 = vld [vmem:[#allocation3 + $0xb70] sm:$0xff]
    %v875 = vld [vmem:[#allocation3 + $0xb78] sm:$0xff]
    %v876 = vld [vmem:[#allocation3 + $0xb80] sm:$0xff]
    %v877 = vld [vmem:[#allocation3 + $0xb88] sm:$0xff]
    %v878 = vld [vmem:[#allocation3 + $0xb90] sm:$0xff]
    %v879 = vld [vmem:[#allocation3 + $0xb98] sm:$0xff]
    %v880 = vld [vmem:[#allocation3 + $0xba0] sm:$0xff]
    %v881 = vld [vmem:[#allocation3 + $0xba8] sm:$0xff]
    %v882 = vld [vmem:[#allocation3 + $0xbb0] sm:$0xff]
    %v883 = vld [vmem:[#allocation3 + $0xbb8] sm:$0xff]
    %v884 = vld [vmem:[#allocation3 + $0xbc0] sm:$0xff]
    %v885 = vld [vmem:[#allocation3 + $0xbc8] sm:$0xff]
    %v886 = vld [vmem:[#allocation3 + $0xbd0] sm:$0xff]
    %v887 = vld [vmem:[#allocation3 + $0xbd8] sm:$0xff]
    %v888 = vld [vmem:[#allocation3 + $0xbe0] sm:$0xff]
    %v889 = vld [vmem:[#allocation3 + $0xbe8] sm:$0xff]
    %v890 = vld [vmem:[#allocation3 + $0xbf0] sm:$0xff]
    %v891 = vld [vmem:[#allocation3 + $0xbf8] sm:$0xff]
    %v892 = vld [vmem:[#allocation3 + $0xc00] sm:$0xff]
    %v893 = vld [vmem:[#allocation3 + $0xc08] sm:$0xff]
    %v894 = vld [vmem:[#allocation3 + $0xc10] sm:$0xff]
    %v895 = vld [vmem:[#allocation3 + $0xc18] sm:$0xff]
    %v896 = vld [vmem:[#allocation3 + $0xc20] sm:$0xff]
    %v897 = vld [vmem:[#allocation3 + $0xc28] sm:$0xff]
    %v898 = vld [vmem:[#allocation3 + $0xc30] sm:$0xff]
    %v899 = vld [vmem:[#allocation3 + $0xc38] sm:$0xff]
    %v900 = vld [vmem:[#allocation3 + $0xc40] sm:$0xff]
    %v901 = vld [vmem:[#allocation3 + $0xc48] sm:$0xff]
    %v902 = vld [vmem:[#allocation3 + $0xc50] sm:$0xff]
    %v903 = vld [vmem:[#allocation3 + $0xc58] sm:$0xff]
    %v904 = vld [vmem:[#allocation3 + $0xc60] sm:$0xff]
    %v905 = vld [vmem:[#allocation3 + $0xc68] sm:$0xff]
    %v906 = vld [vmem:[#allocation3 + $0xc70] sm:$0xff]
    %v907 = vld [vmem:[#allocation3 + $0xc78] sm:$0xff]
    %v908 = vld [vmem:[#allocation3 + $0xc80] sm:$0xff]
    %v909 = vld [vmem:[#allocation3 + $0xc88] sm:$0xff]
    %v910 = vld [vmem:[#allocation3 + $0xc90] sm:$0xff]
    %v911 = vld [vmem:[#allocation3 + $0xc98] sm:$0xff]
    %v912 = vld [vmem:[#allocation3 + $0xca0] sm:$0xff]
    %v913 = vld [vmem:[#allocation3 + $0xca8] sm:$0xff]
    %v914 = vld [vmem:[#allocation3 + $0xcb0] sm:$0xff]
    %v915 = vld [vmem:[#allocation3 + $0xcb8] sm:$0xff]
    %v916 = vld [vmem:[#allocation3 + $0xcc0] sm:$0xff]
    %v917 = vld [vmem:[#allocation3 + $0xcc8] sm:$0xff]
    %v918 = vld [vmem:[#allocation3 + $0xcd0] sm:$0xff]
    %v919 = vld [vmem:[#allocation3 + $0xcd8] sm:$0xff]
    %v920 = vld [vmem:[#allocation3 + $0xce0] sm:$0xff]
    %v921 = vld [vmem:[#allocation3 + $0xce8] sm:$0xff]
    %v922 = vld [vmem:[#allocation3 + $0xcf0] sm:$0xff]
    %v923 = vld [vmem:[#allocation3 + $0xcf8] sm:$0xff]
    %v924 = vld [vmem:[#allocation3 + $0xd00] sm:$0xff]
    %v925 = vld [vmem:[#allocation3 + $0xd08] sm:$0xff]
    %v926 = vld [vmem:[#allocation3 + $0xd10] sm:$0xff]
    %v927 = vld [vmem:[#allocation3 + $0xd18] sm:$0xff]
    %v928 = vld [vmem:[#allocation3 + $0xd20] sm:$0xff]
    %v929 = vld [vmem:[#allocation3 + $0xd28] sm:$0xff]
    %v930 = vld [vmem:[#allocation3 + $0xd30] sm:$0xff]
    %v931 = vld [vmem:[#allocation3 + $0xd38] sm:$0xff]
    %v932 = vld [vmem:[#allocation3 + $0xd40] sm:$0xff]
    %v933 = vld [vmem:[#allocation3 + $0xd48] sm:$0xff]
    %v934 = vld [vmem:[#allocation3 + $0xd50] sm:$0xff]
    %v935 = vld [vmem:[#allocation3 + $0xd58] sm:$0xff]
    %v936 = vld [vmem:[#allocation3 + $0xd60] sm:$0xff]
    %v937 = vld [vmem:[#allocation3 + $0xd68] sm:$0xff]
    %v938 = vld [vmem:[#allocation3 + $0xd70] sm:$0xff]
    %v939 = vld [vmem:[#allocation3 + $0xd78] sm:$0xff]
    %v940 = vld [vmem:[#allocation3 + $0xd80] sm:$0xff]
    %v941 = vld [vmem:[#allocation3 + $0xd88] sm:$0xff]
    %v942 = vld [vmem:[#allocation3 + $0xd90] sm:$0xff]
    %v943 = vld [vmem:[#allocation3 + $0xd98] sm:$0xff]
    %v944 = vld [vmem:[#allocation3 + $0xda0] sm:$0xff]
    %v945 = vld [vmem:[#allocation3 + $0xda8] sm:$0xff]
    %v946 = vld [vmem:[#allocation3 + $0xdb0] sm:$0xff]
    %v947 = vld [vmem:[#allocation3 + $0xdb8] sm:$0xff]
    %v948 = vld [vmem:[#allocation3 + $0xdc0] sm:$0xff]
    %v949 = vld [vmem:[#allocation3 + $0xdc8] sm:$0xff]
    %v950 = vld [vmem:[#allocation3 + $0xdd0] sm:$0xff]
    %v951 = vld [vmem:[#allocation3 + $0xdd8] sm:$0xff]
    %v952 = vld [vmem:[#allocation3 + $0xde0] sm:$0xff]
    %v953 = vld [vmem:[#allocation3 + $0xde8] sm:$0xff]
    %v954 = vld [vmem:[#allocation3 + $0xdf0] sm:$0xff]
    %v955 = vld [vmem:[#allocation3 + $0xdf8] sm:$0xff]
    %v956 = vld [vmem:[#allocation3 + $0xe00] sm:$0xff]
    %v957 = vld [vmem:[#allocation3 + $0xe08] sm:$0xff]
    %v958 = vld [vmem:[#allocation3 + $0xe10] sm:$0xff]
    %v959 = vld [vmem:[#allocation3 + $0xe18] sm:$0xff]
    %v960 = vld [vmem:[#allocation3 + $0xe20] sm:$0xff]
    %v961 = vld [vmem:[#allocation3 + $0xe28] sm:$0xff]
    %v962 = vld [vmem:[#allocation3 + $0xe30] sm:$0xff]
    %v963 = vld [vmem:[#allocation3 + $0xe38] sm:$0xff]
    %v964 = vld [vmem:[#allocation3 + $0xe40] sm:$0xff]
    %v965 = vld [vmem:[#allocation3 + $0xe48] sm:$0xff]
    %v966 = vld [vmem:[#allocation3 + $0xe50] sm:$0xff]
    %v967 = vld [vmem:[#allocation3 + $0xe58] sm:$0xff]
    %v968 = vld [vmem:[#allocation3 + $0xe60] sm:$0xff]
    %v969 = vld [vmem:[#allocation3 + $0xe68] sm:$0xff]
    %v970 = vld [vmem:[#allocation3 + $0xe70] sm:$0xff]
    %v971 = vld [vmem:[#allocation3 + $0xe78] sm:$0xff]
    %v972 = vld [vmem:[#allocation3 + $0xe80] sm:$0xff]
    %v973 = vld [vmem:[#allocation3 + $0xe88] sm:$0xff]
    %v974 = vld [vmem:[#allocation3 + $0xe90] sm:$0xff]
    %v975 = vld [vmem:[#allocation3 + $0xe98] sm:$0xff]
    %v976 = vld [vmem:[#allocation3 + $0xea0] sm:$0xff]
    %v977 = vld [vmem:[#allocation3 + $0xea8] sm:$0xff]
    %v978 = vld [vmem:[#allocation3 + $0xeb0] sm:$0xff]
    %v979 = vld [vmem:[#allocation3 + $0xeb8] sm:$0xff]
    %v980 = vld [vmem:[#allocation3 + $0xec0] sm:$0xff]
    %v981 = vld [vmem:[#allocation3 + $0xec8] sm:$0xff]
    %v982 = vld [vmem:[#allocation3 + $0xed0] sm:$0xff]
    %v983 = vld [vmem:[#allocation3 + $0xed8] sm:$0xff]
    %v984 = vld [vmem:[#allocation3 + $0xee0] sm:$0xff]
    %v985 = vld [vmem:[#allocation3 + $0xee8] sm:$0xff]
    %v986 = vld [vmem:[#allocation3 + $0xef0] sm:$0xff]
    %v987 = vld [vmem:[#allocation3 + $0xef8] sm:$0xff]
    %v988 = vld [vmem:[#allocation3 + $0xf00] sm:$0xff]
    %v989 = vld [vmem:[#allocation3 + $0xf08] sm:$0xff]
    %v990 = vld [vmem:[#allocation3 + $0xf10] sm:$0xff]
    %v991 = vld [vmem:[#allocation3 + $0xf18] sm:$0xff]
    %v992 = vld [vmem:[#allocation3 + $0xf20] sm:$0xff]
    %v993 = vld [vmem:[#allocation3 + $0xf28] sm:$0xff]
    %v994 = vld [vmem:[#allocation3 + $0xf30] sm:$0xff]
    %v995 = vld [vmem:[#allocation3 + $0xf38] sm:$0xff]
    %v996 = vld [vmem:[#allocation3 + $0xf40] sm:$0xff]
    %v997 = vld [vmem:[#allocation3 + $0xf48] sm:$0xff]
    %v998 = vld [vmem:[#allocation3 + $0xf50] sm:$0xff]
    %v999 = vld [vmem:[#allocation3 + $0xf58] sm:$0xff]
    %v1000 = vld [vmem:[#allocation3 + $0xf60] sm:$0xff]
    %v1001 = vld [vmem:[#allocation3 + $0xf68] sm:$0xff]
    %v1002 = vld [vmem:[#allocation3 + $0xf70] sm:$0xff]
    %v1003 = vld [vmem:[#allocation3 + $0xf78] sm:$0xff]
    %v1004 = vld [vmem:[#allocation3 + $0xf80] sm:$0xff]
    %v1005 = vld [vmem:[#allocation3 + $0xf88] sm:$0xff]
    %v1006 = vld [vmem:[#allocation3 + $0xf90] sm:$0xff]
    %v1007 = vld [vmem:[#allocation3 + $0xf98] sm:$0xff]
    %v1008 = vld [vmem:[#allocation3 + $0xfa0] sm:$0xff]
    %v1009 = vld [vmem:[#allocation3 + $0xfa8] sm:$0xff]
    %v1010 = vld [vmem:[#allocation3 + $0xfb0] sm:$0xff]
    %v1011 = vld [vmem:[#allocation3 + $0xfb8] sm:$0xff]
    %v1012 = vld [vmem:[#allocation3 + $0xfc0] sm:$0xff]
    %v1013 = vld [vmem:[#allocation3 + $0xfc8] sm:$0xff]
    %v1014 = vld [vmem:[#allocation3 + $0xfd0] sm:$0xff]
    %v1015 = vld [vmem:[#allocation3 + $0xfd8] sm:$0xff]
    %v1016 = vld [vmem:[#allocation3 + $0xfe0] sm:$0xff]
    %v1017 = vld [vmem:[#allocation3 + $0xfe8] sm:$0xff]
    %v1018 = vld [vmem:[#allocation3 + $0xff0] sm:$0xff]
    %v1019 = vld [vmem:[#allocation3 + $0xff8] sm:$0xff]
    %v1020 = vld [vmem:[#allocation12] sm:$0xff]
    %v1022 = vlaneseq
    %v1023 = vshrl.u32 %v1022, 7
    %v1024 = vsub.s32 0, %v1023
    %v1025 = vrot.slane %v1020, %v1024
    %v1026 = vlaneseq
    %v1027 = vshrl.u32 %v1026, 7
    %v1028 = vsub.s32 1, %v1027
    %v1029 = vrot.slane %v1020, %v1028
    %v1030 = vlaneseq
    %v1031 = vshrl.u32 %v1030, 7
    %v1032 = vsub.s32 2, %v1031
    %v1033 = vrot.slane %v1020, %v1032
    %v1034 = vlaneseq
    %v1035 = vshrl.u32 %v1034, 7
    %v1036 = vsub.s32 3, %v1035
    %v1037 = vrot.slane %v1020, %v1036
    %v1038 = vlaneseq
    %v1039 = vshrl.u32 %v1038, 7
    %v1040 = vsub.s32 4, %v1039
    %v1041 = vrot.slane %v1020, %v1040
    %v1042 = vlaneseq
    %v1043 = vshrl.u32 %v1042, 7
    %v1044 = vsub.s32 5, %v1043
    %v1045 = vrot.slane %v1020, %v1044
    %v1046 = vlaneseq
    %v1047 = vshrl.u32 %v1046, 7
    %v1048 = vsub.s32 6, %v1047
    %v1049 = vrot.slane %v1020, %v1048
    %v1050 = vlaneseq
    %v1051 = vshrl.u32 %v1050, 7
    %v1052 = vsub.s32 7, %v1051
    %v1053 = vrot.slane %v1020, %v1052
    %1062 = vmatprep.subr.bf16.mxu0 %v509
    %1063 = vmatpush1.bf16.msra.mxu0 %v508
    %1064 = vmatprep.subr.bf16.mxu0 %v517
    %1065 = vmatpush1.bf16.msra.mxu0 %v516
    %1066 = vmatprep.subr.bf16.mxu0 %v525
    %1067 = vmatpush1.bf16.msra.mxu0 %v524
    %1068 = vmatprep.subr.bf16.mxu0 %v533
    %1069 = vmatpush1.bf16.msra.mxu0 %v532
    %1070 = vmatprep.subr.bf16.mxu0 %v541
    %1071 = vmatpush1.bf16.msra.mxu0 %v540
    %1072 = vmatprep.subr.bf16.mxu0 %v549
    %1073 = vmatpush1.bf16.msra.mxu0 %v548
    %1074 = vmatprep.subr.bf16.mxu0 %v557
    %1075 = vmatpush1.bf16.msra.mxu0 %v556
    %1076 = vmatprep.subr.bf16.mxu0 %v565
    %1077 = vmatpush1.bf16.msra.mxu0 %v564
    %1078 = vmatprep.subr.bf16.mxu0 %v573
    %1079 = vmatpush1.bf16.msra.mxu0 %v572
    %1080 = vmatprep.subr.bf16.mxu0 %v581
    %1081 = vmatpush1.bf16.msra.mxu0 %v580
    %1082 = vmatprep.subr.bf16.mxu0 %v589
    %1083 = vmatpush1.bf16.msra.mxu0 %v588
    %1084 = vmatprep.subr.bf16.mxu0 %v597
    %1085 = vmatpush1.bf16.msra.mxu0 %v596
    %1086 = vmatprep.subr.bf16.mxu0 %v605
    %1087 = vmatpush1.bf16.msra.mxu0 %v604
    %1088 = vmatprep.subr.bf16.mxu0 %v613
    %1089 = vmatpush1.bf16.msra.mxu0 %v612
    %1090 = vmatprep.subr.bf16.mxu0 %v621
    %1091 = vmatpush1.bf16.msra.mxu0 %v620
    %1092 = vmatprep.subr.bf16.mxu0 %v629
    %1093 = vmatpush1.bf16.msra.mxu0 %v628
    %1094 = vmatprep.mubr.bf16.mxu0 %v501
    %1095 = vmatmul.mubr.bf16.gmra.mrb[0].mxu0 %v500
    %v1096 = vpop.f32.mrb[0].mxu0
    %v1097 = vadd.f32 %v1025, %v1096
    %v1098 = vpop.f32.mrb[0].mxu0
    %v1099 = vadd.f32 %v1029, %v1098
    %v1100 = vpop.f32.mrb[0].mxu0
    %v1101 = vpop.f32.mrb[0].mxu0
    %1102 = vdwg.mxu0
    %1103 = vmatprep.subr.bf16.mxu0 %v637
    %1104 = vmatpush1.bf16.msra.mxu0 %v636
    %1105 = vmatprep.subr.bf16.mxu0 %v645
    %1106 = vmatpush1.bf16.msra.mxu0 %v644
    %1107 = vmatprep.subr.bf16.mxu0 %v653
    %1108 = vmatpush1.bf16.msra.mxu0 %v652
    %1109 = vmatprep.subr.bf16.mxu0 %v661
    %1110 = vmatpush1.bf16.msra.mxu0 %v660
    %1111 = vmatprep.subr.bf16.mxu0 %v669
    %1112 = vmatpush1.bf16.msra.mxu0 %v668
    %1113 = vmatprep.subr.bf16.mxu0 %v677
    %1114 = vmatpush1.bf16.msra.mxu0 %v676
    %1115 = vmatprep.subr.bf16.mxu0 %v685
    %1116 = vmatpush1.bf16.msra.mxu0 %v684
    %1117 = vmatprep.subr.bf16.mxu0 %v693
    %1118 = vmatpush1.bf16.msra.mxu0 %v692
    %1119 = vmatprep.subr.bf16.mxu0 %v701
    %1120 = vmatpush1.bf16.msra.mxu0 %v700
    %1121 = vmatprep.subr.bf16.mxu0 %v709
    %1122 = vmatpush1.bf16.msra.mxu0 %v708
    %1123 = vmatprep.subr.bf16.mxu0 %v717
    %1124 = vmatpush1.bf16.msra.mxu0 %v716
    %1125 = vmatprep.subr.bf16.mxu0 %v725
    %1126 = vmatpush1.bf16.msra.mxu0 %v724
    %1127 = vmatprep.subr.bf16.mxu0 %v733
    %1128 = vmatpush1.bf16.msra.mxu0 %v732
    %1129 = vmatprep.subr.bf16.mxu0 %v741
    %1130 = vmatpush1.bf16.msra.mxu0 %v740
    %1131 = vmatprep.subr.bf16.mxu0 %v749
    %1132 = vmatpush1.bf16.msra.mxu0 %v748
    %1133 = vmatprep.subr.bf16.mxu0 %v757
    %1134 = vmatpush1.bf16.msra.mxu0 %v756
    %1135 = vmatprep.mubr.bf16.mxu0 %v503
    %1136 = vmatmul.mubr.bf16.gmra.mrb[0].mxu0 %v502
    %v1137 = vpop.f32.mrb[0].mxu0
    %v1138 = vadd.f32 %v1097, %v1137
    %v1139 = vpop.f32.mrb[0].mxu0
    %v1140 = vadd.f32 %v1099, %v1139
    %v1141 = vpop.f32.mrb[0].mxu0
    %v1142 = vpop.f32.mrb[0].mxu0
    %1143 = vdwg.mxu0
    %1144 = vmatprep.subr.bf16.mxu0 %v765
    %1145 = vmatpush1.bf16.msra.mxu0 %v764
    %1146 = vmatprep.subr.bf16.mxu0 %v773
    %1147 = vmatpush1.bf16.msra.mxu0 %v772
    %1148 = vmatprep.subr.bf16.mxu0 %v781
    %1149 = vmatpush1.bf16.msra.mxu0 %v780
    %1150 = vmatprep.subr.bf16.mxu0 %v789
    %1151 = vmatpush1.bf16.msra.mxu0 %v788
    %1152 = vmatprep.subr.bf16.mxu0 %v797
    %1153 = vmatpush1.bf16.msra.mxu0 %v796
    %1154 = vmatprep.subr.bf16.mxu0 %v805
    %1155 = vmatpush1.bf16.msra.mxu0 %v804
    %1156 = vmatprep.subr.bf16.mxu0 %v813
    %1157 = vmatpush1.bf16.msra.mxu0 %v812
    %1158 = vmatprep.subr.bf16.mxu0 %v821
    %1159 = vmatpush1.bf16.msra.mxu0 %v820
    %1160 = vmatprep.subr.bf16.mxu0 %v829
    %1161 = vmatpush1.bf16.msra.mxu0 %v828
    %1162 = vmatprep.subr.bf16.mxu0 %v837
    %1163 = vmatpush1.bf16.msra.mxu0 %v836
    %1164 = vmatprep.subr.bf16.mxu0 %v845
    %1165 = vmatpush1.bf16.msra.mxu0 %v844
    %1166 = vmatprep.subr.bf16.mxu0 %v853
    %1167 = vmatpush1.bf16.msra.mxu0 %v852
    %1168 = vmatprep.subr.bf16.mxu0 %v861
    %1169 = vmatpush1.bf16.msra.mxu0 %v860
    %1170 = vmatprep.subr.bf16.mxu0 %v869
    %1171 = vmatpush1.bf16.msra.mxu0 %v868
    %1172 = vmatprep.subr.bf16.mxu0 %v877
    %1173 = vmatpush1.bf16.msra.mxu0 %v876
    %1174 = vmatprep.subr.bf16.mxu0 %v885
    %1175 = vmatpush1.bf16.msra.mxu0 %v884
    %1176 = vmatprep.mubr.bf16.mxu0 %v505
    %1177 = vmatmul.mubr.bf16.gmra.mrb[0].mxu0 %v504
    %v1178 = vpop.f32.mrb[0].mxu0
    %v1179 = vadd.f32 %v1138, %v1178
    %v1180 = vpop.f32.mrb[0].mxu0
    %v1181 = vadd.f32 %v1140, %v1180
    %v1182 = vpop.f32.mrb[0].mxu0
    %v1183 = vpop.f32.mrb[0].mxu0
    %1184 = vdwg.mxu0
    %1185 = vmatprep.subr.bf16.mxu0 %v893
    %1186 = vmatpush1.bf16.msra.mxu0 %v892
    %1187 = vmatprep.subr.bf16.mxu0 %v901
    %1188 = vmatpush1.bf16.msra.mxu0 %v900
    %1189 = vmatprep.subr.bf16.mxu0 %v909
    %1190 = vmatpush1.bf16.msra.mxu0 %v908
    %1191 = vmatprep.subr.bf16.mxu0 %v917
    %1192 = vmatpush1.bf16.msra.mxu0 %v916
    %1193 = vmatprep.subr.bf16.mxu0 %v925
    %1194 = vmatpush1.bf16.msra.mxu0 %v924
    %1195 = vmatprep.subr.bf16.mxu0 %v933
    %1196 = vmatpush1.bf16.msra.mxu0 %v932
    %1197 = vmatprep.subr.bf16.mxu0 %v941
    %1198 = vmatpush1.bf16.msra.mxu0 %v940
    %1199 = vmatprep.subr.bf16.mxu0 %v949
    %1200 = vmatpush1.bf16.msra.mxu0 %v948
    %1201 = vmatprep.subr.bf16.mxu0 %v957
    %1202 = vmatpush1.bf16.msra.mxu0 %v956
    %1203 = vmatprep.subr.bf16.mxu0 %v965
    %1204 = vmatpush1.bf16.msra.mxu0 %v964
    %1205 = vmatprep.subr.bf16.mxu0 %v973
    %1206 = vmatpush1.bf16.msra.mxu0 %v972
    %1207 = vmatprep.subr.bf16.mxu0 %v981
    %1208 = vmatpush1.bf16.msra.mxu0 %v980
    %1209 = vmatprep.subr.bf16.mxu0 %v989
    %1210 = vmatpush1.bf16.msra.mxu0 %v988
    %1211 = vmatprep.subr.bf16.mxu0 %v997
    %1212 = vmatpush1.bf16.msra.mxu0 %v996
    %1213 = vmatprep.subr.bf16.mxu0 %v1005
    %1214 = vmatpush1.bf16.msra.mxu0 %v1004
    %1215 = vmatprep.subr.bf16.mxu0 %v1013
    %1216 = vmatpush1.bf16.msra.mxu0 %v1012
    %1217 = vmatprep.mubr.bf16.mxu0 %v507
    %1218 = vmatmul.mubr.bf16.gmra.mrb[0].mxu0 %v506
    %v1219 = vpop.f32.mrb[0].mxu0
    %v1220 = vadd.f32 %v1179, %v1219
    %v1221 = vpop.f32.mrb[0].mxu0
    %v1222 = vadd.f32 %v1181, %v1221
    %v1223 = vpop.f32.mrb[0].mxu0
    %v1224 = vpop.f32.mrb[0].mxu0
    %1225 = vdwg.mxu0
    %1226 = vmatprep.subr.bf16.mxu0 %v511
    %1227 = vmatpush1.bf16.msra.mxu0 %v510
    %1228 = vmatprep.subr.bf16.mxu0 %v519
    %1229 = vmatpush1.bf16.msra.mxu0 %v518
    %1230 = vmatprep.subr.bf16.mxu0 %v527
    %1231 = vmatpush1.bf16.msra.mxu0 %v526
    %1232 = vmatprep.subr.bf16.mxu0 %v535
    %1233 = vmatpush1.bf16.msra.mxu0 %v534
    %1234 = vmatprep.subr.bf16.mxu0 %v543
    %1235 = vmatpush1.bf16.msra.mxu0 %v542
    %1236 = vmatprep.subr.bf16.mxu0 %v551
    %1237 = vmatpush1.bf16.msra.mxu0 %v550
    %1238 = vmatprep.subr.bf16.mxu0 %v559
    %1239 = vmatpush1.bf16.msra.mxu0 %v558
    %1240 = vmatprep.subr.bf16.mxu0 %v567
    %1241 = vmatpush1.bf16.msra.mxu0 %v566
    %1242 = vmatprep.subr.bf16.mxu0 %v575
    %1243 = vmatpush1.bf16.msra.mxu0 %v574
    %1244 = vmatprep.subr.bf16.mxu0 %v583
    %1245 = vmatpush1.bf16.msra.mxu0 %v582
    %1246 = vmatprep.subr.bf16.mxu0 %v591
    %1247 = vmatpush1.bf16.msra.mxu0 %v590
    %1248 = vmatprep.subr.bf16.mxu0 %v599
    %1249 = vmatpush1.bf16.msra.mxu0 %v598
    %1250 = vmatprep.subr.bf16.mxu0 %v607
    %1251 = vmatpush1.bf16.msra.mxu0 %v606
    %1252 = vmatprep.subr.bf16.mxu0 %v615
    %1253 = vmatpush1.bf16.msra.mxu0 %v614
    %1254 = vmatprep.subr.bf16.mxu0 %v623
    %1255 = vmatpush1.bf16.msra.mxu0 %v622
    %1256 = vmatprep.subr.bf16.mxu0 %v631
    %1257 = vmatpush1.bf16.msra.mxu0 %v630
    %1258 = vmatprep.mubr.bf16.mxu0 %v501
    %1259 = vmatmul.mubr.bf16.gmra.mrb[0].mxu0 %v500
    %v1260 = vpop.f32.mrb[0].mxu0
    %v1261 = vadd.f32 %v1033, %v1260
    %v1262 = vpop.f32.mrb[0].mxu0
    %v1263 = vadd.f32 %v1037, %v1262
    %v1264 = vpop.f32.mrb[0].mxu0
    %v1265 = vpop.f32.mrb[0].mxu0
    %1266 = vdwg.mxu0
    %1267 = vmatprep.subr.bf16.mxu0 %v639
    %1268 = vmatpush1.bf16.msra.mxu0 %v638
    %1269 = vmatprep.subr.bf16.mxu0 %v647
    %1270 = vmatpush1.bf16.msra.mxu0 %v646
    %1271 = vmatprep.subr.bf16.mxu0 %v655
    %1272 = vmatpush1.bf16.msra.mxu0 %v654
    %1273 = vmatprep.subr.bf16.mxu0 %v663
    %1274 = vmatpush1.bf16.msra.mxu0 %v662
    %1275 = vmatprep.subr.bf16.mxu0 %v671
    %1276 = vmatpush1.bf16.msra.mxu0 %v670
    %1277 = vmatprep.subr.bf16.mxu0 %v679
    %1278 = vmatpush1.bf16.msra.mxu0 %v678
    %1279 = vmatprep.subr.bf16.mxu0 %v687
    %1280 = vmatpush1.bf16.msra.mxu0 %v686
    %1281 = vmatprep.subr.bf16.mxu0 %v695
    %1282 = vmatpush1.bf16.msra.mxu0 %v694
    %1283 = vmatprep.subr.bf16.mxu0 %v703
    %1284 = vmatpush1.bf16.msra.mxu0 %v702
    %1285 = vmatprep.subr.bf16.mxu0 %v711
    %1286 = vmatpush1.bf16.msra.mxu0 %v710
    %1287 = vmatprep.subr.bf16.mxu0 %v719
    %1288 = vmatpush1.bf16.msra.mxu0 %v718
    %1289 = vmatprep.subr.bf16.mxu0 %v727
    %1290 = vmatpush1.bf16.msra.mxu0 %v726
    %1291 = vmatprep.subr.bf16.mxu0 %v735
    %1292 = vmatpush1.bf16.msra.mxu0 %v734
    %1293 = vmatprep.subr.bf16.mxu0 %v743
    %1294 = vmatpush1.bf16.msra.mxu0 %v742
    %1295 = vmatprep.subr.bf16.mxu0 %v751
    %1296 = vmatpush1.bf16.msra.mxu0 %v750
    %1297 = vmatprep.subr.bf16.mxu0 %v759
    %1298 = vmatpush1.bf16.msra.mxu0 %v758
    %1299 = vmatprep.mubr.bf16.mxu0 %v503
    %1300 = vmatmul.mubr.bf16.gmra.mrb[0].mxu0 %v502
    %v1301 = vpop.f32.mrb[0].mxu0
    %v1302 = vadd.f32 %v1261, %v1301
    %v1303 = vpop.f32.mrb[0].mxu0
    %v1304 = vadd.f32 %v1263, %v1303
    %v1305 = vpop.f32.mrb[0].mxu0
    %v1306 = vpop.f32.mrb[0].mxu0
    %1307 = vdwg.mxu0
    %1308 = vmatprep.subr.bf16.mxu0 %v767
    %1309 = vmatpush1.bf16.msra.mxu0 %v766
    %1310 = vmatprep.subr.bf16.mxu0 %v775
    %1311 = vmatpush1.bf16.msra.mxu0 %v774
    %1312 = vmatprep.subr.bf16.mxu0 %v783
    %1313 = vmatpush1.bf16.msra.mxu0 %v782
    %1314 = vmatprep.subr.bf16.mxu0 %v791
    %1315 = vmatpush1.bf16.msra.mxu0 %v790
    %1316 = vmatprep.subr.bf16.mxu0 %v799
    %1317 = vmatpush1.bf16.msra.mxu0 %v798
    %1318 = vmatprep.subr.bf16.mxu0 %v807
    %1319 = vmatpush1.bf16.msra.mxu0 %v806
    %1320 = vmatprep.subr.bf16.mxu0 %v815
    %1321 = vmatpush1.bf16.msra.mxu0 %v814
    %1322 = vmatprep.subr.bf16.mxu0 %v823
    %1323 = vmatpush1.bf16.msra.mxu0 %v822
    %1324 = vmatprep.subr.bf16.mxu0 %v831
    %1325 = vmatpush1.bf16.msra.mxu0 %v830
    %1326 = vmatprep.subr.bf16.mxu0 %v839
    %1327 = vmatpush1.bf16.msra.mxu0 %v838
    %1328 = vmatprep.subr.bf16.mxu0 %v847
    %1329 = vmatpush1.bf16.msra.mxu0 %v846
    %1330 = vmatprep.subr.bf16.mxu0 %v855
    %1331 = vmatpush1.bf16.msra.mxu0 %v854
    %1332 = vmatprep.subr.bf16.mxu0 %v863
    %1333 = vmatpush1.bf16.msra.mxu0 %v862
    %1334 = vmatprep.subr.bf16.mxu0 %v871
    %1335 = vmatpush1.bf16.msra.mxu0 %v870
    %1336 = vmatprep.subr.bf16.mxu0 %v879
    %1337 = vmatpush1.bf16.msra.mxu0 %v878
    %1338 = vmatprep.subr.bf16.mxu0 %v887
    %1339 = vmatpush1.bf16.msra.mxu0 %v886
    %1340 = vmatprep.mubr.bf16.mxu0 %v505
    %1341 = vmatmul.mubr.bf16.gmra.mrb[0].mxu0 %v504
    %v1342 = vpop.f32.mrb[0].mxu0
    %v1343 = vadd.f32 %v1302, %v1342
    %v1344 = vpop.f32.mrb[0].mxu0
    %v1345 = vadd.f32 %v1304, %v1344
    %v1346 = vpop.f32.mrb[0].mxu0
    %v1347 = vpop.f32.mrb[0].mxu0
    %1348 = vdwg.mxu0
    %1349 = vmatprep.subr.bf16.mxu0 %v895
    %1350 = vmatpush1.bf16.msra.mxu0 %v894
    %1351 = vmatprep.subr.bf16.mxu0 %v903
    %1352 = vmatpush1.bf16.msra.mxu0 %v902
    %1353 = vmatprep.subr.bf16.mxu0 %v911
    %1354 = vmatpush1.bf16.msra.mxu0 %v910
    %1355 = vmatprep.subr.bf16.mxu0 %v919
    %1356 = vmatpush1.bf16.msra.mxu0 %v918
    %1357 = vmatprep.subr.bf16.mxu0 %v927
    %1358 = vmatpush1.bf16.msra.mxu0 %v926
    %1359 = vmatprep.subr.bf16.mxu0 %v935
    %1360 = vmatpush1.bf16.msra.mxu0 %v934
    %1361 = vmatprep.subr.bf16.mxu0 %v943
    %1362 = vmatpush1.bf16.msra.mxu0 %v942
    %1363 = vmatprep.subr.bf16.mxu0 %v951
    %1364 = vmatpush1.bf16.msra.mxu0 %v950
    %1365 = vmatprep.subr.bf16.mxu0 %v959
    %1366 = vmatpush1.bf16.msra.mxu0 %v958
    %1367 = vmatprep.subr.bf16.mxu0 %v967
    %1368 = vmatpush1.bf16.msra.mxu0 %v966
    %1369 = vmatprep.subr.bf16.mxu0 %v975
    %1370 = vmatpush1.bf16.msra.mxu0 %v974
    %1371 = vmatprep.subr.bf16.mxu0 %v983
    %1372 = vmatpush1.bf16.msra.mxu0 %v982
    %1373 = vmatprep.subr.bf16.mxu0 %v991
    %1374 = vmatpush1.bf16.msra.mxu0 %v990
    %1375 = vmatprep.subr.bf16.mxu0 %v999
    %1376 = vmatpush1.bf16.msra.mxu0 %v998
    %1377 = vmatprep.subr.bf16.mxu0 %v1007
    %1378 = vmatpush1.bf16.msra.mxu0 %v1006
    %1379 = vmatprep.subr.bf16.mxu0 %v1015
    %1380 = vmatpush1.bf16.msra.mxu0 %v1014
    %1381 = vmatprep.mubr.bf16.mxu0 %v507
    %1382 = vmatmul.mubr.bf16.gmra.mrb[0].mxu0 %v506
    %v1383 = vpop.f32.mrb[0].mxu0
    %v1384 = vadd.f32 %v1343, %v1383
    %v1385 = vpop.f32.mrb[0].mxu0
    %v1386 = vadd.f32 %v1345, %v1385
    %v1387 = vpop.f32.mrb[0].mxu0
    %v1388 = vpop.f32.mrb[0].mxu0
    %1389 = vdwg.mxu0
    %1390 = vmatprep.subr.bf16.mxu0 %v513
    %1391 = vmatpush1.bf16.msra.mxu0 %v512
    %1392 = vmatprep.subr.bf16.mxu0 %v521
    %1393 = vmatpush1.bf16.msra.mxu0 %v520
    %1394 = vmatprep.subr.bf16.mxu0 %v529
    %1395 = vmatpush1.bf16.msra.mxu0 %v528
    %1396 = vmatprep.subr.bf16.mxu0 %v537
    %1397 = vmatpush1.bf16.msra.mxu0 %v536
    %1398 = vmatprep.subr.bf16.mxu0 %v545
    %1399 = vmatpush1.bf16.msra.mxu0 %v544
    %1400 = vmatprep.subr.bf16.mxu0 %v553
    %1401 = vmatpush1.bf16.msra.mxu0 %v552
    %1402 = vmatprep.subr.bf16.mxu0 %v561
    %1403 = vmatpush1.bf16.msra.mxu0 %v560
    %1404 = vmatprep.subr.bf16.mxu0 %v569
    %1405 = vmatpush1.bf16.msra.mxu0 %v568
    %1406 = vmatprep.subr.bf16.mxu0 %v577
    %1407 = vmatpush1.bf16.msra.mxu0 %v576
    %1408 = vmatprep.subr.bf16.mxu0 %v585
    %1409 = vmatpush1.bf16.msra.mxu0 %v584
    %1410 = vmatprep.subr.bf16.mxu0 %v593
    %1411 = vmatpush1.bf16.msra.mxu0 %v592
    %1412 = vmatprep.subr.bf16.mxu0 %v601
    %1413 = vmatpush1.bf16.msra.mxu0 %v600
    %1414 = vmatprep.subr.bf16.mxu0 %v609
    %1415 = vmatpush1.bf16.msra.mxu0 %v608
    %1416 = vmatprep.subr.bf16.mxu0 %v617
    %1417 = vmatpush1.bf16.msra.mxu0 %v616
    %1418 = vmatprep.subr.bf16.mxu0 %v625
    %1419 = vmatpush1.bf16.msra.mxu0 %v624
    %1420 = vmatprep.subr.bf16.mxu0 %v633
    %1421 = vmatpush1.bf16.msra.mxu0 %v632
    %1422 = vmatprep.mubr.bf16.mxu0 %v501
    %1423 = vmatmul.mubr.bf16.gmra.mrb[0].mxu0 %v500
    %v1424 = vpop.f32.mrb[0].mxu0
    %v1425 = vadd.f32 %v1041, %v1424
    %v1426 = vpop.f32.mrb[0].mxu0
    %v1427 = vadd.f32 %v1045, %v1426
    %v1428 = vpop.f32.mrb[0].mxu0
    %v1429 = vpop.f32.mrb[0].mxu0
    %1430 = vdwg.mxu0
    %1431 = vmatprep.subr.bf16.mxu0 %v641
    %1432 = vmatpush1.bf16.msra.mxu0 %v640
    %1433 = vmatprep.subr.bf16.mxu0 %v649
    %1434 = vmatpush1.bf16.msra.mxu0 %v648
    %1435 = vmatprep.subr.bf16.mxu0 %v657
    %1436 = vmatpush1.bf16.msra.mxu0 %v656
    %1437 = vmatprep.subr.bf16.mxu0 %v665
    %1438 = vmatpush1.bf16.msra.mxu0 %v664
    %1439 = vmatprep.subr.bf16.mxu0 %v673
    %1440 = vmatpush1.bf16.msra.mxu0 %v672
    %1441 = vmatprep.subr.bf16.mxu0 %v681
    %1442 = vmatpush1.bf16.msra.mxu0 %v680
    %1443 = vmatprep.subr.bf16.mxu0 %v689
    %1444 = vmatpush1.bf16.msra.mxu0 %v688
    %1445 = vmatprep.subr.bf16.mxu0 %v697
    %1446 = vmatpush1.bf16.msra.mxu0 %v696
    %1447 = vmatprep.subr.bf16.mxu0 %v705
    %1448 = vmatpush1.bf16.msra.mxu0 %v704
    %1449 = vmatprep.subr.bf16.mxu0 %v713
    %1450 = vmatpush1.bf16.msra.mxu0 %v712
    %1451 = vmatprep.subr.bf16.mxu0 %v721
    %1452 = vmatpush1.bf16.msra.mxu0 %v720
    %1453 = vmatprep.subr.bf16.mxu0 %v729
    %1454 = vmatpush1.bf16.msra.mxu0 %v728
    %1455 = vmatprep.subr.bf16.mxu0 %v737
    %1456 = vmatpush1.bf16.msra.mxu0 %v736
    %1457 = vmatprep.subr.bf16.mxu0 %v745
    %1458 = vmatpush1.bf16.msra.mxu0 %v744
    %1459 = vmatprep.subr.bf16.mxu0 %v753
    %1460 = vmatpush1.bf16.msra.mxu0 %v752
    %1461 = vmatprep.subr.bf16.mxu0 %v761
    %1462 = vmatpush1.bf16.msra.mxu0 %v760
    %1463 = vmatprep.mubr.bf16.mxu0 %v503
    %1464 = vmatmul.mubr.bf16.gmra.mrb[0].mxu0 %v502
    %v1465 = vpop.f32.mrb[0].mxu0
    %v1466 = vadd.f32 %v1425, %v1465
    %v1467 = vpop.f32.mrb[0].mxu0
    %v1468 = vadd.f32 %v1427, %v1467
    %v1469 = vpop.f32.mrb[0].mxu0
    %v1470 = vpop.f32.mrb[0].mxu0
    %1471 = vdwg.mxu0
    %1472 = vmatprep.subr.bf16.mxu0 %v769
    %1473 = vmatpush1.bf16.msra.mxu0 %v768
    %1474 = vmatprep.subr.bf16.mxu0 %v777
    %1475 = vmatpush1.bf16.msra.mxu0 %v776
    %1476 = vmatprep.subr.bf16.mxu0 %v785
    %1477 = vmatpush1.bf16.msra.mxu0 %v784
    %1478 = vmatprep.subr.bf16.mxu0 %v793
    %1479 = vmatpush1.bf16.msra.mxu0 %v792
    %1480 = vmatprep.subr.bf16.mxu0 %v801
    %1481 = vmatpush1.bf16.msra.mxu0 %v800
    %1482 = vmatprep.subr.bf16.mxu0 %v809
    %1483 = vmatpush1.bf16.msra.mxu0 %v808
    %1484 = vmatprep.subr.bf16.mxu0 %v817
    %1485 = vmatpush1.bf16.msra.mxu0 %v816
    %1486 = vmatprep.subr.bf16.mxu0 %v825
    %1487 = vmatpush1.bf16.msra.mxu0 %v824
    %1488 = vmatprep.subr.bf16.mxu0 %v833
    %1489 = vmatpush1.bf16.msra.mxu0 %v832
    %1490 = vmatprep.subr.bf16.mxu0 %v841
    %1491 = vmatpush1.bf16.msra.mxu0 %v840
    %1492 = vmatprep.subr.bf16.mxu0 %v849
    %1493 = vmatpush1.bf16.msra.mxu0 %v848
    %1494 = vmatprep.subr.bf16.mxu0 %v857
    %1495 = vmatpush1.bf16.msra.mxu0 %v856
    %1496 = vmatprep.subr.bf16.mxu0 %v865
    %1497 = vmatpush1.bf16.msra.mxu0 %v864
    %1498 = vmatprep.subr.bf16.mxu0 %v873
    %1499 = vmatpush1.bf16.msra.mxu0 %v872
    %1500 = vmatprep.subr.bf16.mxu0 %v881
    %1501 = vmatpush1.bf16.msra.mxu0 %v880
    %1502 = vmatprep.subr.bf16.mxu0 %v889
    %1503 = vmatpush1.bf16.msra.mxu0 %v888
    %1504 = vmatprep.mubr.bf16.mxu0 %v505
    %1505 = vmatmul.mubr.bf16.gmra.mrb[0].mxu0 %v504
    %v1506 = vpop.f32.mrb[0].mxu0
    %v1507 = vadd.f32 %v1466, %v1506
    %v1508 = vpop.f32.mrb[0].mxu0
    %v1509 = vadd.f32 %v1468, %v1508
    %v1510 = vpop.f32.mrb[0].mxu0
    %v1511 = vpop.f32.mrb[0].mxu0
    %1512 = vdwg.mxu0
    %1513 = vmatprep.subr.bf16.mxu0 %v897
    %1514 = vmatpush1.bf16.msra.mxu0 %v896
    %1515 = vmatprep.subr.bf16.mxu0 %v905
    %1516 = vmatpush1.bf16.msra.mxu0 %v904
    %1517 = vmatprep.subr.bf16.mxu0 %v913
    %1518 = vmatpush1.bf16.msra.mxu0 %v912
    %1519 = vmatprep.subr.bf16.mxu0 %v921
    %1520 = vmatpush1.bf16.msra.mxu0 %v920
    %1521 = vmatprep.subr.bf16.mxu0 %v929
    %1522 = vmatpush1.bf16.msra.mxu0 %v928
    %1523 = vmatprep.subr.bf16.mxu0 %v937
    %1524 = vmatpush1.bf16.msra.mxu0 %v936
    %1525 = vmatprep.subr.bf16.mxu0 %v945
    %1526 = vmatpush1.bf16.msra.mxu0 %v944
    %1527 = vmatprep.subr.bf16.mxu0 %v953
    %1528 = vmatpush1.bf16.msra.mxu0 %v952
    %1529 = vmatprep.subr.bf16.mxu0 %v961
    %1530 = vmatpush1.bf16.msra.mxu0 %v960
    %1531 = vmatprep.subr.bf16.mxu0 %v969
    %1532 = vmatpush1.bf16.msra.mxu0 %v968
    %1533 = vmatprep.subr.bf16.mxu0 %v977
    %1534 = vmatpush1.bf16.msra.mxu0 %v976
    %1535 = vmatprep.subr.bf16.mxu0 %v985
    %1536 = vmatpush1.bf16.msra.mxu0 %v984
    %1537 = vmatprep.subr.bf16.mxu0 %v993
    %1538 = vmatpush1.bf16.msra.mxu0 %v992
    %1539 = vmatprep.subr.bf16.mxu0 %v1001
    %1540 = vmatpush1.bf16.msra.mxu0 %v1000
    %1541 = vmatprep.subr.bf16.mxu0 %v1009
    %1542 = vmatpush1.bf16.msra.mxu0 %v1008
    %1543 = vmatprep.subr.bf16.mxu0 %v1017
    %1544 = vmatpush1.bf16.msra.mxu0 %v1016
    %1545 = vmatprep.mubr.bf16.mxu0 %v507
    %1546 = vmatmul.mubr.bf16.gmra.mrb[0].mxu0 %v506
    %v1547 = vpop.f32.mrb[0].mxu0
    %v1548 = vadd.f32 %v1507, %v1547
    %v1549 = vpop.f32.mrb[0].mxu0
    %v1550 = vadd.f32 %v1509, %v1549
    %v1551 = vpop.f32.mrb[0].mxu0
    %v1552 = vpop.f32.mrb[0].mxu0
    %1553 = vdwg.mxu0
    %1554 = vmatprep.subr.bf16.mxu0 %v515
    %1555 = vmatpush1.bf16.msra.mxu0 %v514
    %1556 = vmatprep.subr.bf16.mxu0 %v523
    %1557 = vmatpush1.bf16.msra.mxu0 %v522
    %1558 = vmatprep.subr.bf16.mxu0 %v531
    %1559 = vmatpush1.bf16.msra.mxu0 %v530
    %1560 = vmatprep.subr.bf16.mxu0 %v539
    %1561 = vmatpush1.bf16.msra.mxu0 %v538
    %1562 = vmatprep.subr.bf16.mxu0 %v547
    %1563 = vmatpush1.bf16.msra.mxu0 %v546
    %1564 = vmatprep.subr.bf16.mxu0 %v555
    %1565 = vmatpush1.bf16.msra.mxu0 %v554
    %1566 = vmatprep.subr.bf16.mxu0 %v563
    %1567 = vmatpush1.bf16.msra.mxu0 %v562
    %1568 = vmatprep.subr.bf16.mxu0 %v571
    %1569 = vmatpush1.bf16.msra.mxu0 %v570
    %1570 = vmatprep.subr.bf16.mxu0 %v579
    %1571 = vmatpush1.bf16.msra.mxu0 %v578
    %1572 = vmatprep.subr.bf16.mxu0 %v587
    %1573 = vmatpush1.bf16.msra.mxu0 %v586
    %1574 = vmatprep.subr.bf16.mxu0 %v595
    %1575 = vmatpush1.bf16.msra.mxu0 %v594
    %1576 = vmatprep.subr.bf16.mxu0 %v603
    %1577 = vmatpush1.bf16.msra.mxu0 %v602
    %1578 = vmatprep.subr.bf16.mxu0 %v611
    %1579 = vmatpush1.bf16.msra.mxu0 %v610
    %1580 = vmatprep.subr.bf16.mxu0 %v619
    %1581 = vmatpush1.bf16.msra.mxu0 %v618
    %1582 = vmatprep.subr.bf16.mxu0 %v627
    %1583 = vmatpush1.bf16.msra.mxu0 %v626
    %1584 = vmatprep.subr.bf16.mxu0 %v635
    %1585 = vmatpush1.bf16.msra.mxu0 %v634
    %1586 = vmatprep.mubr.bf16.mxu0 %v501
    %1587 = vmatmul.mubr.bf16.gmra.mrb[0].mxu0 %v500
    %v1588 = vpop.f32.mrb[0].mxu0
    %v1589 = vadd.f32 %v1049, %v1588
    %v1590 = vpop.f32.mrb[0].mxu0
    %v1591 = vadd.f32 %v1053, %v1590
    %v1592 = vpop.f32.mrb[0].mxu0
    %v1593 = vpop.f32.mrb[0].mxu0
    %1594 = vdwg.mxu0
    %1595 = vmatprep.subr.bf16.mxu0 %v643
    %1596 = vmatpush1.bf16.msra.mxu0 %v642
    %1597 = vmatprep.subr.bf16.mxu0 %v651
    %1598 = vmatpush1.bf16.msra.mxu0 %v650
    %1599 = vmatprep.subr.bf16.mxu0 %v659
    %1600 = vmatpush1.bf16.msra.mxu0 %v658
    %1601 = vmatprep.subr.bf16.mxu0 %v667
    %1602 = vmatpush1.bf16.msra.mxu0 %v666
    %1603 = vmatprep.subr.bf16.mxu0 %v675
    %1604 = vmatpush1.bf16.msra.mxu0 %v674
    %1605 = vmatprep.subr.bf16.mxu0 %v683
    %1606 = vmatpush1.bf16.msra.mxu0 %v682
    %1607 = vmatprep.subr.bf16.mxu0 %v691
    %1608 = vmatpush1.bf16.msra.mxu0 %v690
    %1609 = vmatprep.subr.bf16.mxu0 %v699
    %1610 = vmatpush1.bf16.msra.mxu0 %v698
    %1611 = vmatprep.subr.bf16.mxu0 %v707
    %1612 = vmatpush1.bf16.msra.mxu0 %v706
    %1613 = vmatprep.subr.bf16.mxu0 %v715
    %1614 = vmatpush1.bf16.msra.mxu0 %v714
    %1615 = vmatprep.subr.bf16.mxu0 %v723
    %1616 = vmatpush1.bf16.msra.mxu0 %v722
    %1617 = vmatprep.subr.bf16.mxu0 %v731
    %1618 = vmatpush1.bf16.msra.mxu0 %v730
    %1619 = vmatprep.subr.bf16.mxu0 %v739
    %1620 = vmatpush1.bf16.msra.mxu0 %v738
    %1621 = vmatprep.subr.bf16.mxu0 %v747
    %1622 = vmatpush1.bf16.msra.mxu0 %v746
    %1623 = vmatprep.subr.bf16.mxu0 %v755
    %1624 = vmatpush1.bf16.msra.mxu0 %v754
    %1625 = vmatprep.subr.bf16.mxu0 %v763
    %1626 = vmatpush1.bf16.msra.mxu0 %v762
    %1627 = vmatprep.mubr.bf16.mxu0 %v503
    %1628 = vmatmul.mubr.bf16.gmra.mrb[0].mxu0 %v502
    %v1629 = vpop.f32.mrb[0].mxu0
    %v1630 = vadd.f32 %v1589, %v1629
    %v1631 = vpop.f32.mrb[0].mxu0
    %v1632 = vadd.f32 %v1591, %v1631
    %v1633 = vpop.f32.mrb[0].mxu0
    %v1634 = vpop.f32.mrb[0].mxu0
    %1635 = vdwg.mxu0
    %1636 = vmatprep.subr.bf16.mxu0 %v771
    %1637 = vmatpush1.bf16.msra.mxu0 %v770
    %1638 = vmatprep.subr.bf16.mxu0 %v779
    %1639 = vmatpush1.bf16.msra.mxu0 %v778
    %1640 = vmatprep.subr.bf16.mxu0 %v787
    %1641 = vmatpush1.bf16.msra.mxu0 %v786
    %1642 = vmatprep.subr.bf16.mxu0 %v795
    %1643 = vmatpush1.bf16.msra.mxu0 %v794
    %1644 = vmatprep.subr.bf16.mxu0 %v803
    %1645 = vmatpush1.bf16.msra.mxu0 %v802
    %1646 = vmatprep.subr.bf16.mxu0 %v811
    %1647 = vmatpush1.bf16.msra.mxu0 %v810
    %1648 = vmatprep.subr.bf16.mxu0 %v819
    %1649 = vmatpush1.bf16.msra.mxu0 %v818
    %1650 = vmatprep.subr.bf16.mxu0 %v827
    %1651 = vmatpush1.bf16.msra.mxu0 %v826
    %1652 = vmatprep.subr.bf16.mxu0 %v835
    %1653 = vmatpush1.bf16.msra.mxu0 %v834
    %1654 = vmatprep.subr.bf16.mxu0 %v843
    %1655 = vmatpush1.bf16.msra.mxu0 %v842
    %1656 = vmatprep.subr.bf16.mxu0 %v851
    %1657 = vmatpush1.bf16.msra.mxu0 %v850
    %1658 = vmatprep.subr.bf16.mxu0 %v859
    %1659 = vmatpush1.bf16.msra.mxu0 %v858
    %1660 = vmatprep.subr.bf16.mxu0 %v867
    %1661 = vmatpush1.bf16.msra.mxu0 %v866
    %1662 = vmatprep.subr.bf16.mxu0 %v875
    %1663 = vmatpush1.bf16.msra.mxu0 %v874
    %1664 = vmatprep.subr.bf16.mxu0 %v883
    %1665 = vmatpush1.bf16.msra.mxu0 %v882
    %1666 = vmatprep.subr.bf16.mxu0 %v891
    %1667 = vmatpush1.bf16.msra.mxu0 %v890
    %1668 = vmatprep.mubr.bf16.mxu0 %v505
    %1669 = vmatmul.mubr.bf16.gmra.mrb[0].mxu0 %v504
    %v1670 = vpop.f32.mrb[0].mxu0
    %v1671 = vadd.f32 %v1630, %v1670
    %v1672 = vpop.f32.mrb[0].mxu0
    %v1673 = vadd.f32 %v1632, %v1672
    %v1674 = vpop.f32.mrb[0].mxu0
    %v1675 = vpop.f32.mrb[0].mxu0
    %1676 = vdwg.mxu0
    %1677 = vmatprep.subr.bf16.mxu0 %v899
    %1678 = vmatpush1.bf16.msra.mxu0 %v898
    %1679 = vmatprep.subr.bf16.mxu0 %v907
    %1680 = vmatpush1.bf16.msra.mxu0 %v906
    %1681 = vmatprep.subr.bf16.mxu0 %v915
    %1682 = vmatpush1.bf16.msra.mxu0 %v914
    %1683 = vmatprep.subr.bf16.mxu0 %v923
    %1684 = vmatpush1.bf16.msra.mxu0 %v922
    %1685 = vmatprep.subr.bf16.mxu0 %v931
    %1686 = vmatpush1.bf16.msra.mxu0 %v930
    %1687 = vmatprep.subr.bf16.mxu0 %v939
    %1688 = vmatpush1.bf16.msra.mxu0 %v938
    %1689 = vmatprep.subr.bf16.mxu0 %v947
    %1690 = vmatpush1.bf16.msra.mxu0 %v946
    %1691 = vmatprep.subr.bf16.mxu0 %v955
    %1692 = vmatpush1.bf16.msra.mxu0 %v954
    %1693 = vmatprep.subr.bf16.mxu0 %v963
    %1694 = vmatpush1.bf16.msra.mxu0 %v962
    %1695 = vmatprep.subr.bf16.mxu0 %v971
    %1696 = vmatpush1.bf16.msra.mxu0 %v970
    %1697 = vmatprep.subr.bf16.mxu0 %v979
    %1698 = vmatpush1.bf16.msra.mxu0 %v978
    %1699 = vmatprep.subr.bf16.mxu0 %v987
    %1700 = vmatpush1.bf16.msra.mxu0 %v986
    %1701 = vmatprep.subr.bf16.mxu0 %v995
    %1702 = vmatpush1.bf16.msra.mxu0 %v994
    %1703 = vmatprep.subr.bf16.mxu0 %v1003
    %1704 = vmatpush1.bf16.msra.mxu0 %v1002
    %1705 = vmatprep.subr.bf16.mxu0 %v1011
    %1706 = vmatpush1.bf16.msra.mxu0 %v1010
    %1707 = vmatprep.subr.bf16.mxu0 %v1019
    %1708 = vmatpush1.bf16.msra.mxu0 %v1018
    %1709 = vmatprep.mubr.bf16.mxu0 %v507
    %1710 = vmatmul.mubr.bf16.gmra.mrb[0].mxu0 %v506
    %v1711 = vpop.f32.mrb[0].mxu0
    %v1712 = vadd.f32 %v1671, %v1711
    %v1713 = vpop.f32.mrb[0].mxu0
    %v1714 = vadd.f32 %v1673, %v1713
    %v1715 = vpop.f32.mrb[0].mxu0
    %v1716 = vpop.f32.mrb[0].mxu0
    %1717 = vdwg.mxu0
    %v1718 = vmax.f32 %v1220, 0.0
    %v1719 = vmax.f32 %v1222, 0.0
    %v1720 = vmax.f32 %v1384, 0.0
    %v1721 = vmax.f32 %v1386, 0.0
    %v1722 = vmax.f32 %v1548, 0.0
    %v1723 = vmax.f32 %v1550, 0.0
    %v1724 = vmax.f32 %v1712, 0.0
    %v1725 = vmax.f32 %v1714, 0.0
    %v1726 = vpack.c.bf16 %v1718, %v1718
    %v1727 = vpack.c.bf16 %v1719, %v1719
    %v1728 = vpack.c.bf16 %v1720, %v1720
    %v1729 = vpack.c.bf16 %v1721, %v1721
    %v1730 = vpack.c.bf16 %v1722, %v1722
    %v1731 = vpack.c.bf16 %v1723, %v1723
    %v1732 = vpack.c.bf16 %v1724, %v1724
    %v1733 = vpack.c.bf16 %v1725, %v1725
    %v1734 = vld [vmem:[#allocation4] sm:$0xff]
    %v1735 = vld [vmem:[#allocation4 + $0x8] sm:$0xff]
    %v1736 = vld [vmem:[#allocation4 + $0x10] sm:$0xff]
    %v1737 = vld [vmem:[#allocation4 + $0x18] sm:$0xff]
    %v1738 = vld [vmem:[#allocation4 + $0x20] sm:$0xff]
    %v1739 = vld [vmem:[#allocation4 + $0x28] sm:$0xff]
    %v1740 = vld [vmem:[#allocation4 + $0x30] sm:$0xff]
    %v1741 = vld [vmem:[#allocation4 + $0x38] sm:$0xff]
    %v1742 = vld [vmem:[#allocation4 + $0x40] sm:$0xff]
    %v1743 = vld [vmem:[#allocation4 + $0x48] sm:$0xff]
    %v1744 = vld [vmem:[#allocation4 + $0x50] sm:$0xff]
    %v1745 = vld [vmem:[#allocation4 + $0x58] sm:$0xff]
    %v1746 = vld [vmem:[#allocation4 + $0x60] sm:$0xff]
    %v1747 = vld [vmem:[#allocation4 + $0x68] sm:$0xff]
    %v1748 = vld [vmem:[#allocation4 + $0x70] sm:$0xff]
    %v1749 = vld [vmem:[#allocation4 + $0x78] sm:$0xff]
    %v1750 = vld [vmem:[#allocation4 + $0x80] sm:$0xff]
    %v1751 = vld [vmem:[#allocation4 + $0x88] sm:$0xff]
    %v1752 = vld [vmem:[#allocation4 + $0x90] sm:$0xff]
    %v1753 = vld [vmem:[#allocation4 + $0x98] sm:$0xff]
    %v1754 = vld [vmem:[#allocation4 + $0xa0] sm:$0xff]
    %v1755 = vld [vmem:[#allocation4 + $0xa8] sm:$0xff]
    %v1756 = vld [vmem:[#allocation4 + $0xb0] sm:$0xff]
    %v1757 = vld [vmem:[#allocation4 + $0xb8] sm:$0xff]
    %v1758 = vld [vmem:[#allocation4 + $0xc0] sm:$0xff]
    %v1759 = vld [vmem:[#allocation4 + $0xc8] sm:$0xff]
    %v1760 = vld [vmem:[#allocation4 + $0xd0] sm:$0xff]
    %v1761 = vld [vmem:[#allocation4 + $0xd8] sm:$0xff]
    %v1762 = vld [vmem:[#allocation4 + $0xe0] sm:$0xff]
    %v1763 = vld [vmem:[#allocation4 + $0xe8] sm:$0xff]
    %v1764 = vld [vmem:[#allocation4 + $0xf0] sm:$0xff]
    %v1765 = vld [vmem:[#allocation4 + $0xf8] sm:$0xff]
    %v1766 = vld [vmem:[#allocation4 + $0x100] sm:$0xff]
    %v1767 = vld [vmem:[#allocation4 + $0x108] sm:$0xff]
    %v1768 = vld [vmem:[#allocation4 + $0x110] sm:$0xff]
    %v1769 = vld [vmem:[#allocation4 + $0x118] sm:$0xff]
    %v1770 = vld [vmem:[#allocation4 + $0x120] sm:$0xff]
    %v1771 = vld [vmem:[#allocation4 + $0x128] sm:$0xff]
    %v1772 = vld [vmem:[#allocation4 + $0x130] sm:$0xff]
    %v1773 = vld [vmem:[#allocation4 + $0x138] sm:$0xff]
    %v1774 = vld [vmem:[#allocation4 + $0x140] sm:$0xff]
    %v1775 = vld [vmem:[#allocation4 + $0x148] sm:$0xff]
    %v1776 = vld [vmem:[#allocation4 + $0x150] sm:$0xff]
    %v1777 = vld [vmem:[#allocation4 + $0x158] sm:$0xff]
    %v1778 = vld [vmem:[#allocation4 + $0x160] sm:$0xff]
    %v1779 = vld [vmem:[#allocation4 + $0x168] sm:$0xff]
    %v1780 = vld [vmem:[#allocation4 + $0x170] sm:$0xff]
    %v1781 = vld [vmem:[#allocation4 + $0x178] sm:$0xff]
    %v1782 = vld [vmem:[#allocation4 + $0x180] sm:$0xff]
    %v1783 = vld [vmem:[#allocation4 + $0x188] sm:$0xff]
    %v1784 = vld [vmem:[#allocation4 + $0x190] sm:$0xff]
    %v1785 = vld [vmem:[#allocation4 + $0x198] sm:$0xff]
    %v1786 = vld [vmem:[#allocation4 + $0x1a0] sm:$0xff]
    %v1787 = vld [vmem:[#allocation4 + $0x1a8] sm:$0xff]
    %v1788 = vld [vmem:[#allocation4 + $0x1b0] sm:$0xff]
    %v1789 = vld [vmem:[#allocation4 + $0x1b8] sm:$0xff]
    %v1790 = vld [vmem:[#allocation4 + $0x1c0] sm:$0xff]
    %v1791 = vld [vmem:[#allocation4 + $0x1c8] sm:$0xff]
    %v1792 = vld [vmem:[#allocation4 + $0x1d0] sm:$0xff]
    %v1793 = vld [vmem:[#allocation4 + $0x1d8] sm:$0xff]
    %v1794 = vld [vmem:[#allocation4 + $0x1e0] sm:$0xff]
    %v1795 = vld [vmem:[#allocation4 + $0x1e8] sm:$0xff]
    %v1796 = vld [vmem:[#allocation4 + $0x1f0] sm:$0xff]
    %v1797 = vld [vmem:[#allocation4 + $0x1f8] sm:$0xff]
    %v1798 = vld [vmem:[#allocation4 + $0x200] sm:$0xff]
    %v1799 = vld [vmem:[#allocation4 + $0x208] sm:$0xff]
    %v1800 = vld [vmem:[#allocation4 + $0x210] sm:$0xff]
    %v1801 = vld [vmem:[#allocation4 + $0x218] sm:$0xff]
    %v1802 = vld [vmem:[#allocation4 + $0x220] sm:$0xff]
    %v1803 = vld [vmem:[#allocation4 + $0x228] sm:$0xff]
    %v1804 = vld [vmem:[#allocation4 + $0x230] sm:$0xff]
    %v1805 = vld [vmem:[#allocation4 + $0x238] sm:$0xff]
    %v1806 = vld [vmem:[#allocation4 + $0x240] sm:$0xff]
    %v1807 = vld [vmem:[#allocation4 + $0x248] sm:$0xff]
    %v1808 = vld [vmem:[#allocation4 + $0x250] sm:$0xff]
    %v1809 = vld [vmem:[#allocation4 + $0x258] sm:$0xff]
    %v1810 = vld [vmem:[#allocation4 + $0x260] sm:$0xff]
    %v1811 = vld [vmem:[#allocation4 + $0x268] sm:$0xff]
    %v1812 = vld [vmem:[#allocation4 + $0x270] sm:$0xff]
    %v1813 = vld [vmem:[#allocation4 + $0x278] sm:$0xff]
    %v1814 = vld [vmem:[#allocation4 + $0x280] sm:$0xff]
    %v1815 = vld [vmem:[#allocation4 + $0x288] sm:$0xff]
    %v1816 = vld [vmem:[#allocation4 + $0x290] sm:$0xff]
    %v1817 = vld [vmem:[#allocation4 + $0x298] sm:$0xff]
    %v1818 = vld [vmem:[#allocation4 + $0x2a0] sm:$0xff]
    %v1819 = vld [vmem:[#allocation4 + $0x2a8] sm:$0xff]
    %v1820 = vld [vmem:[#allocation4 + $0x2b0] sm:$0xff]
    %v1821 = vld [vmem:[#allocation4 + $0x2b8] sm:$0xff]
    %v1822 = vld [vmem:[#allocation4 + $0x2c0] sm:$0xff]
    %v1823 = vld [vmem:[#allocation4 + $0x2c8] sm:$0xff]
    %v1824 = vld [vmem:[#allocation4 + $0x2d0] sm:$0xff]
    %v1825 = vld [vmem:[#allocation4 + $0x2d8] sm:$0xff]
    %v1826 = vld [vmem:[#allocation4 + $0x2e0] sm:$0xff]
    %v1827 = vld [vmem:[#allocation4 + $0x2e8] sm:$0xff]
    %v1828 = vld [vmem:[#allocation4 + $0x2f0] sm:$0xff]
    %v1829 = vld [vmem:[#allocation4 + $0x2f8] sm:$0xff]
    %v1830 = vld [vmem:[#allocation4 + $0x300] sm:$0xff]
    %v1831 = vld [vmem:[#allocation4 + $0x308] sm:$0xff]
    %v1832 = vld [vmem:[#allocation4 + $0x310] sm:$0xff]
    %v1833 = vld [vmem:[#allocation4 + $0x318] sm:$0xff]
    %v1834 = vld [vmem:[#allocation4 + $0x320] sm:$0xff]
    %v1835 = vld [vmem:[#allocation4 + $0x328] sm:$0xff]
    %v1836 = vld [vmem:[#allocation4 + $0x330] sm:$0xff]
    %v1837 = vld [vmem:[#allocation4 + $0x338] sm:$0xff]
    %v1838 = vld [vmem:[#allocation4 + $0x340] sm:$0xff]
    %v1839 = vld [vmem:[#allocation4 + $0x348] sm:$0xff]
    %v1840 = vld [vmem:[#allocation4 + $0x350] sm:$0xff]
    %v1841 = vld [vmem:[#allocation4 + $0x358] sm:$0xff]
    %v1842 = vld [vmem:[#allocation4 + $0x360] sm:$0xff]
    %v1843 = vld [vmem:[#allocation4 + $0x368] sm:$0xff]
    %v1844 = vld [vmem:[#allocation4 + $0x370] sm:$0xff]
    %v1845 = vld [vmem:[#allocation4 + $0x378] sm:$0xff]
    %v1846 = vld [vmem:[#allocation4 + $0x380] sm:$0xff]
    %v1847 = vld [vmem:[#allocation4 + $0x388] sm:$0xff]
    %v1848 = vld [vmem:[#allocation4 + $0x390] sm:$0xff]
    %v1849 = vld [vmem:[#allocation4 + $0x398] sm:$0xff]
    %v1850 = vld [vmem:[#allocation4 + $0x3a0] sm:$0xff]
    %v1851 = vld [vmem:[#allocation4 + $0x3a8] sm:$0xff]
    %v1852 = vld [vmem:[#allocation4 + $0x3b0] sm:$0xff]
    %v1853 = vld [vmem:[#allocation4 + $0x3b8] sm:$0xff]
    %v1854 = vld [vmem:[#allocation4 + $0x3c0] sm:$0xff]
    %v1855 = vld [vmem:[#allocation4 + $0x3c8] sm:$0xff]
    %v1856 = vld [vmem:[#allocation4 + $0x3d0] sm:$0xff]
    %v1857 = vld [vmem:[#allocation4 + $0x3d8] sm:$0xff]
    %v1858 = vld [vmem:[#allocation4 + $0x3e0] sm:$0xff]
    %v1859 = vld [vmem:[#allocation4 + $0x3e8] sm:$0xff]
    %v1860 = vld [vmem:[#allocation4 + $0x3f0] sm:$0xff]
    %v1861 = vld [vmem:[#allocation4 + $0x3f8] sm:$0xff]
    %v1862 = vld [vmem:[#allocation4 + $0x400] sm:$0xff]
    %v1863 = vld [vmem:[#allocation4 + $0x408] sm:$0xff]
    %v1864 = vld [vmem:[#allocation4 + $0x410] sm:$0xff]
    %v1865 = vld [vmem:[#allocation4 + $0x418] sm:$0xff]
    %v1866 = vld [vmem:[#allocation4 + $0x420] sm:$0xff]
    %v1867 = vld [vmem:[#allocation4 + $0x428] sm:$0xff]
    %v1868 = vld [vmem:[#allocation4 + $0x430] sm:$0xff]
    %v1869 = vld [vmem:[#allocation4 + $0x438] sm:$0xff]
    %v1870 = vld [vmem:[#allocation4 + $0x440] sm:$0xff]
    %v1871 = vld [vmem:[#allocation4 + $0x448] sm:$0xff]
    %v1872 = vld [vmem:[#allocation4 + $0x450] sm:$0xff]
    %v1873 = vld [vmem:[#allocation4 + $0x458] sm:$0xff]
    %v1874 = vld [vmem:[#allocation4 + $0x460] sm:$0xff]
    %v1875 = vld [vmem:[#allocation4 + $0x468] sm:$0xff]
    %v1876 = vld [vmem:[#allocation4 + $0x470] sm:$0xff]
    %v1877 = vld [vmem:[#allocation4 + $0x478] sm:$0xff]
    %v1878 = vld [vmem:[#allocation4 + $0x480] sm:$0xff]
    %v1879 = vld [vmem:[#allocation4 + $0x488] sm:$0xff]
    %v1880 = vld [vmem:[#allocation4 + $0x490] sm:$0xff]
    %v1881 = vld [vmem:[#allocation4 + $0x498] sm:$0xff]
    %v1882 = vld [vmem:[#allocation4 + $0x4a0] sm:$0xff]
    %v1883 = vld [vmem:[#allocation4 + $0x4a8] sm:$0xff]
    %v1884 = vld [vmem:[#allocation4 + $0x4b0] sm:$0xff]
    %v1885 = vld [vmem:[#allocation4 + $0x4b8] sm:$0xff]
    %v1886 = vld [vmem:[#allocation4 + $0x4c0] sm:$0xff]
    %v1887 = vld [vmem:[#allocation4 + $0x4c8] sm:$0xff]
    %v1888 = vld [vmem:[#allocation4 + $0x4d0] sm:$0xff]
    %v1889 = vld [vmem:[#allocation4 + $0x4d8] sm:$0xff]
    %v1890 = vld [vmem:[#allocation4 + $0x4e0] sm:$0xff]
    %v1891 = vld [vmem:[#allocation4 + $0x4e8] sm:$0xff]
    %v1892 = vld [vmem:[#allocation4 + $0x4f0] sm:$0xff]
    %v1893 = vld [vmem:[#allocation4 + $0x4f8] sm:$0xff]
    %v1894 = vld [vmem:[#allocation4 + $0x500] sm:$0xff]
    %v1895 = vld [vmem:[#allocation4 + $0x508] sm:$0xff]
    %v1896 = vld [vmem:[#allocation4 + $0x510] sm:$0xff]
    %v1897 = vld [vmem:[#allocation4 + $0x518] sm:$0xff]
    %v1898 = vld [vmem:[#allocation4 + $0x520] sm:$0xff]
    %v1899 = vld [vmem:[#allocation4 + $0x528] sm:$0xff]
    %v1900 = vld [vmem:[#allocation4 + $0x530] sm:$0xff]
    %v1901 = vld [vmem:[#allocation4 + $0x538] sm:$0xff]
    %v1902 = vld [vmem:[#allocation4 + $0x540] sm:$0xff]
    %v1903 = vld [vmem:[#allocation4 + $0x548] sm:$0xff]
    %v1904 = vld [vmem:[#allocation4 + $0x550] sm:$0xff]
    %v1905 = vld [vmem:[#allocation4 + $0x558] sm:$0xff]
    %v1906 = vld [vmem:[#allocation4 + $0x560] sm:$0xff]
    %v1907 = vld [vmem:[#allocation4 + $0x568] sm:$0xff]
    %v1908 = vld [vmem:[#allocation4 + $0x570] sm:$0xff]
    %v1909 = vld [vmem:[#allocation4 + $0x578] sm:$0xff]
    %v1910 = vld [vmem:[#allocation4 + $0x580] sm:$0xff]
    %v1911 = vld [vmem:[#allocation4 + $0x588] sm:$0xff]
    %v1912 = vld [vmem:[#allocation4 + $0x590] sm:$0xff]
    %v1913 = vld [vmem:[#allocation4 + $0x598] sm:$0xff]
    %v1914 = vld [vmem:[#allocation4 + $0x5a0] sm:$0xff]
    %v1915 = vld [vmem:[#allocation4 + $0x5a8] sm:$0xff]
    %v1916 = vld [vmem:[#allocation4 + $0x5b0] sm:$0xff]
    %v1917 = vld [vmem:[#allocation4 + $0x5b8] sm:$0xff]
    %v1918 = vld [vmem:[#allocation4 + $0x5c0] sm:$0xff]
    %v1919 = vld [vmem:[#allocation4 + $0x5c8] sm:$0xff]
    %v1920 = vld [vmem:[#allocation4 + $0x5d0] sm:$0xff]
    %v1921 = vld [vmem:[#allocation4 + $0x5d8] sm:$0xff]
    %v1922 = vld [vmem:[#allocation4 + $0x5e0] sm:$0xff]
    %v1923 = vld [vmem:[#allocation4 + $0x5e8] sm:$0xff]
    %v1924 = vld [vmem:[#allocation4 + $0x5f0] sm:$0xff]
    %v1925 = vld [vmem:[#allocation4 + $0x5f8] sm:$0xff]
    %v1926 = vld [vmem:[#allocation4 + $0x600] sm:$0xff]
    %v1927 = vld [vmem:[#allocation4 + $0x608] sm:$0xff]
    %v1928 = vld [vmem:[#allocation4 + $0x610] sm:$0xff]
    %v1929 = vld [vmem:[#allocation4 + $0x618] sm:$0xff]
    %v1930 = vld [vmem:[#allocation4 + $0x620] sm:$0xff]
    %v1931 = vld [vmem:[#allocation4 + $0x628] sm:$0xff]
    %v1932 = vld [vmem:[#allocation4 + $0x630] sm:$0xff]
    %v1933 = vld [vmem:[#allocation4 + $0x638] sm:$0xff]
    %v1934 = vld [vmem:[#allocation4 + $0x640] sm:$0xff]
    %v1935 = vld [vmem:[#allocation4 + $0x648] sm:$0xff]
    %v1936 = vld [vmem:[#allocation4 + $0x650] sm:$0xff]
    %v1937 = vld [vmem:[#allocation4 + $0x658] sm:$0xff]
    %v1938 = vld [vmem:[#allocation4 + $0x660] sm:$0xff]
    %v1939 = vld [vmem:[#allocation4 + $0x668] sm:$0xff]
    %v1940 = vld [vmem:[#allocation4 + $0x670] sm:$0xff]
    %v1941 = vld [vmem:[#allocation4 + $0x678] sm:$0xff]
    %v1942 = vld [vmem:[#allocation4 + $0x680] sm:$0xff]
    %v1943 = vld [vmem:[#allocation4 + $0x688] sm:$0xff]
    %v1944 = vld [vmem:[#allocation4 + $0x690] sm:$0xff]
    %v1945 = vld [vmem:[#allocation4 + $0x698] sm:$0xff]
    %v1946 = vld [vmem:[#allocation4 + $0x6a0] sm:$0xff]
    %v1947 = vld [vmem:[#allocation4 + $0x6a8] sm:$0xff]
    %v1948 = vld [vmem:[#allocation4 + $0x6b0] sm:$0xff]
    %v1949 = vld [vmem:[#allocation4 + $0x6b8] sm:$0xff]
    %v1950 = vld [vmem:[#allocation4 + $0x6c0] sm:$0xff]
    %v1951 = vld [vmem:[#allocation4 + $0x6c8] sm:$0xff]
    %v1952 = vld [vmem:[#allocation4 + $0x6d0] sm:$0xff]
    %v1953 = vld [vmem:[#allocation4 + $0x6d8] sm:$0xff]
    %v1954 = vld [vmem:[#allocation4 + $0x6e0] sm:$0xff]
    %v1955 = vld [vmem:[#allocation4 + $0x6e8] sm:$0xff]
    %v1956 = vld [vmem:[#allocation4 + $0x6f0] sm:$0xff]
    %v1957 = vld [vmem:[#allocation4 + $0x6f8] sm:$0xff]
    %v1958 = vld [vmem:[#allocation4 + $0x700] sm:$0xff]
    %v1959 = vld [vmem:[#allocation4 + $0x708] sm:$0xff]
    %v1960 = vld [vmem:[#allocation4 + $0x710] sm:$0xff]
    %v1961 = vld [vmem:[#allocation4 + $0x718] sm:$0xff]
    %v1962 = vld [vmem:[#allocation4 + $0x720] sm:$0xff]
    %v1963 = vld [vmem:[#allocation4 + $0x728] sm:$0xff]
    %v1964 = vld [vmem:[#allocation4 + $0x730] sm:$0xff]
    %v1965 = vld [vmem:[#allocation4 + $0x738] sm:$0xff]
    %v1966 = vld [vmem:[#allocation4 + $0x740] sm:$0xff]
    %v1967 = vld [vmem:[#allocation4 + $0x748] sm:$0xff]
    %v1968 = vld [vmem:[#allocation4 + $0x750] sm:$0xff]
    %v1969 = vld [vmem:[#allocation4 + $0x758] sm:$0xff]
    %v1970 = vld [vmem:[#allocation4 + $0x760] sm:$0xff]
    %v1971 = vld [vmem:[#allocation4 + $0x768] sm:$0xff]
    %v1972 = vld [vmem:[#allocation4 + $0x770] sm:$0xff]
    %v1973 = vld [vmem:[#allocation4 + $0x778] sm:$0xff]
    %v1974 = vld [vmem:[#allocation4 + $0x780] sm:$0xff]
    %v1975 = vld [vmem:[#allocation4 + $0x788] sm:$0xff]
    %v1976 = vld [vmem:[#allocation4 + $0x790] sm:$0xff]
    %v1977 = vld [vmem:[#allocation4 + $0x798] sm:$0xff]
    %v1978 = vld [vmem:[#allocation4 + $0x7a0] sm:$0xff]
    %v1979 = vld [vmem:[#allocation4 + $0x7a8] sm:$0xff]
    %v1980 = vld [vmem:[#allocation4 + $0x7b0] sm:$0xff]
    %v1981 = vld [vmem:[#allocation4 + $0x7b8] sm:$0xff]
    %v1982 = vld [vmem:[#allocation4 + $0x7c0] sm:$0xff]
    %v1983 = vld [vmem:[#allocation4 + $0x7c8] sm:$0xff]
    %v1984 = vld [vmem:[#allocation4 + $0x7d0] sm:$0xff]
    %v1985 = vld [vmem:[#allocation4 + $0x7d8] sm:$0xff]
    %v1986 = vld [vmem:[#allocation4 + $0x7e0] sm:$0xff]
    %v1987 = vld [vmem:[#allocation4 + $0x7e8] sm:$0xff]
    %v1988 = vld [vmem:[#allocation4 + $0x7f0] sm:$0xff]
    %v1989 = vld [vmem:[#allocation4 + $0x7f8] sm:$0xff]
    %v1990 = vld [vmem:[#allocation4 + $0x800] sm:$0xff]
    %v1991 = vld [vmem:[#allocation4 + $0x808] sm:$0xff]
    %v1992 = vld [vmem:[#allocation4 + $0x810] sm:$0xff]
    %v1993 = vld [vmem:[#allocation4 + $0x818] sm:$0xff]
    %v1994 = vld [vmem:[#allocation4 + $0x820] sm:$0xff]
    %v1995 = vld [vmem:[#allocation4 + $0x828] sm:$0xff]
    %v1996 = vld [vmem:[#allocation4 + $0x830] sm:$0xff]
    %v1997 = vld [vmem:[#allocation4 + $0x838] sm:$0xff]
    %v1998 = vld [vmem:[#allocation4 + $0x840] sm:$0xff]
    %v1999 = vld [vmem:[#allocation4 + $0x848] sm:$0xff]
    %v2000 = vld [vmem:[#allocation4 + $0x850] sm:$0xff]
    %v2001 = vld [vmem:[#allocation4 + $0x858] sm:$0xff]
    %v2002 = vld [vmem:[#allocation4 + $0x860] sm:$0xff]
    %v2003 = vld [vmem:[#allocation4 + $0x868] sm:$0xff]
    %v2004 = vld [vmem:[#allocation4 + $0x870] sm:$0xff]
    %v2005 = vld [vmem:[#allocation4 + $0x878] sm:$0xff]
    %v2006 = vld [vmem:[#allocation4 + $0x880] sm:$0xff]
    %v2007 = vld [vmem:[#allocation4 + $0x888] sm:$0xff]
    %v2008 = vld [vmem:[#allocation4 + $0x890] sm:$0xff]
    %v2009 = vld [vmem:[#allocation4 + $0x898] sm:$0xff]
    %v2010 = vld [vmem:[#allocation4 + $0x8a0] sm:$0xff]
    %v2011 = vld [vmem:[#allocation4 + $0x8a8] sm:$0xff]
    %v2012 = vld [vmem:[#allocation4 + $0x8b0] sm:$0xff]
    %v2013 = vld [vmem:[#allocation4 + $0x8b8] sm:$0xff]
    %v2014 = vld [vmem:[#allocation4 + $0x8c0] sm:$0xff]
    %v2015 = vld [vmem:[#allocation4 + $0x8c8] sm:$0xff]
    %v2016 = vld [vmem:[#allocation4 + $0x8d0] sm:$0xff]
    %v2017 = vld [vmem:[#allocation4 + $0x8d8] sm:$0xff]
    %v2018 = vld [vmem:[#allocation4 + $0x8e0] sm:$0xff]
    %v2019 = vld [vmem:[#allocation4 + $0x8e8] sm:$0xff]
    %v2020 = vld [vmem:[#allocation4 + $0x8f0] sm:$0xff]
    %v2021 = vld [vmem:[#allocation4 + $0x8f8] sm:$0xff]
    %v2022 = vld [vmem:[#allocation4 + $0x900] sm:$0xff]
    %v2023 = vld [vmem:[#allocation4 + $0x908] sm:$0xff]
    %v2024 = vld [vmem:[#allocation4 + $0x910] sm:$0xff]
    %v2025 = vld [vmem:[#allocation4 + $0x918] sm:$0xff]
    %v2026 = vld [vmem:[#allocation4 + $0x920] sm:$0xff]
    %v2027 = vld [vmem:[#allocation4 + $0x928] sm:$0xff]
    %v2028 = vld [vmem:[#allocation4 + $0x930] sm:$0xff]
    %v2029 = vld [vmem:[#allocation4 + $0x938] sm:$0xff]
    %v2030 = vld [vmem:[#allocation4 + $0x940] sm:$0xff]
    %v2031 = vld [vmem:[#allocation4 + $0x948] sm:$0xff]
    %v2032 = vld [vmem:[#allocation4 + $0x950] sm:$0xff]
    %v2033 = vld [vmem:[#allocation4 + $0x958] sm:$0xff]
    %v2034 = vld [vmem:[#allocation4 + $0x960] sm:$0xff]
    %v2035 = vld [vmem:[#allocation4 + $0x968] sm:$0xff]
    %v2036 = vld [vmem:[#allocation4 + $0x970] sm:$0xff]
    %v2037 = vld [vmem:[#allocation4 + $0x978] sm:$0xff]
    %v2038 = vld [vmem:[#allocation4 + $0x980] sm:$0xff]
    %v2039 = vld [vmem:[#allocation4 + $0x988] sm:$0xff]
    %v2040 = vld [vmem:[#allocation4 + $0x990] sm:$0xff]
    %v2041 = vld [vmem:[#allocation4 + $0x998] sm:$0xff]
    %v2042 = vld [vmem:[#allocation4 + $0x9a0] sm:$0xff]
    %v2043 = vld [vmem:[#allocation4 + $0x9a8] sm:$0xff]
    %v2044 = vld [vmem:[#allocation4 + $0x9b0] sm:$0xff]
    %v2045 = vld [vmem:[#allocation4 + $0x9b8] sm:$0xff]
    %v2046 = vld [vmem:[#allocation4 + $0x9c0] sm:$0xff]
    %v2047 = vld [vmem:[#allocation4 + $0x9c8] sm:$0xff]
    %v2048 = vld [vmem:[#allocation4 + $0x9d0] sm:$0xff]
    %v2049 = vld [vmem:[#allocation4 + $0x9d8] sm:$0xff]
    %v2050 = vld [vmem:[#allocation4 + $0x9e0] sm:$0xff]
    %v2051 = vld [vmem:[#allocation4 + $0x9e8] sm:$0xff]
    %v2052 = vld [vmem:[#allocation4 + $0x9f0] sm:$0xff]
    %v2053 = vld [vmem:[#allocation4 + $0x9f8] sm:$0xff]
    %v2054 = vld [vmem:[#allocation4 + $0xa00] sm:$0xff]
    %v2055 = vld [vmem:[#allocation4 + $0xa08] sm:$0xff]
    %v2056 = vld [vmem:[#allocation4 + $0xa10] sm:$0xff]
    %v2057 = vld [vmem:[#allocation4 + $0xa18] sm:$0xff]
    %v2058 = vld [vmem:[#allocation4 + $0xa20] sm:$0xff]
    %v2059 = vld [vmem:[#allocation4 + $0xa28] sm:$0xff]
    %v2060 = vld [vmem:[#allocation4 + $0xa30] sm:$0xff]
    %v2061 = vld [vmem:[#allocation4 + $0xa38] sm:$0xff]
    %v2062 = vld [vmem:[#allocation4 + $0xa40] sm:$0xff]
    %v2063 = vld [vmem:[#allocation4 + $0xa48] sm:$0xff]
    %v2064 = vld [vmem:[#allocation4 + $0xa50] sm:$0xff]
    %v2065 = vld [vmem:[#allocation4 + $0xa58] sm:$0xff]
    %v2066 = vld [vmem:[#allocation4 + $0xa60] sm:$0xff]
    %v2067 = vld [vmem:[#allocation4 + $0xa68] sm:$0xff]
    %v2068 = vld [vmem:[#allocation4 + $0xa70] sm:$0xff]
    %v2069 = vld [vmem:[#allocation4 + $0xa78] sm:$0xff]
    %v2070 = vld [vmem:[#allocation4 + $0xa80] sm:$0xff]
    %v2071 = vld [vmem:[#allocation4 + $0xa88] sm:$0xff]
    %v2072 = vld [vmem:[#allocation4 + $0xa90] sm:$0xff]
    %v2073 = vld [vmem:[#allocation4 + $0xa98] sm:$0xff]
    %v2074 = vld [vmem:[#allocation4 + $0xaa0] sm:$0xff]
    %v2075 = vld [vmem:[#allocation4 + $0xaa8] sm:$0xff]
    %v2076 = vld [vmem:[#allocation4 + $0xab0] sm:$0xff]
    %v2077 = vld [vmem:[#allocation4 + $0xab8] sm:$0xff]
    %v2078 = vld [vmem:[#allocation4 + $0xac0] sm:$0xff]
    %v2079 = vld [vmem:[#allocation4 + $0xac8] sm:$0xff]
    %v2080 = vld [vmem:[#allocation4 + $0xad0] sm:$0xff]
    %v2081 = vld [vmem:[#allocation4 + $0xad8] sm:$0xff]
    %v2082 = vld [vmem:[#allocation4 + $0xae0] sm:$0xff]
    %v2083 = vld [vmem:[#allocation4 + $0xae8] sm:$0xff]
    %v2084 = vld [vmem:[#allocation4 + $0xaf0] sm:$0xff]
    %v2085 = vld [vmem:[#allocation4 + $0xaf8] sm:$0xff]
    %v2086 = vld [vmem:[#allocation4 + $0xb00] sm:$0xff]
    %v2087 = vld [vmem:[#allocation4 + $0xb08] sm:$0xff]
    %v2088 = vld [vmem:[#allocation4 + $0xb10] sm:$0xff]
    %v2089 = vld [vmem:[#allocation4 + $0xb18] sm:$0xff]
    %v2090 = vld [vmem:[#allocation4 + $0xb20] sm:$0xff]
    %v2091 = vld [vmem:[#allocation4 + $0xb28] sm:$0xff]
    %v2092 = vld [vmem:[#allocation4 + $0xb30] sm:$0xff]
    %v2093 = vld [vmem:[#allocation4 + $0xb38] sm:$0xff]
    %v2094 = vld [vmem:[#allocation4 + $0xb40] sm:$0xff]
    %v2095 = vld [vmem:[#allocation4 + $0xb48] sm:$0xff]
    %v2096 = vld [vmem:[#allocation4 + $0xb50] sm:$0xff]
    %v2097 = vld [vmem:[#allocation4 + $0xb58] sm:$0xff]
    %v2098 = vld [vmem:[#allocation4 + $0xb60] sm:$0xff]
    %v2099 = vld [vmem:[#allocation4 + $0xb68] sm:$0xff]
    %v2100 = vld [vmem:[#allocation4 + $0xb70] sm:$0xff]
    %v2101 = vld [vmem:[#allocation4 + $0xb78] sm:$0xff]
    %v2102 = vld [vmem:[#allocation4 + $0xb80] sm:$0xff]
    %v2103 = vld [vmem:[#allocation4 + $0xb88] sm:$0xff]
    %v2104 = vld [vmem:[#allocation4 + $0xb90] sm:$0xff]
    %v2105 = vld [vmem:[#allocation4 + $0xb98] sm:$0xff]
    %v2106 = vld [vmem:[#allocation4 + $0xba0] sm:$0xff]
    %v2107 = vld [vmem:[#allocation4 + $0xba8] sm:$0xff]
    %v2108 = vld [vmem:[#allocation4 + $0xbb0] sm:$0xff]
    %v2109 = vld [vmem:[#allocation4 + $0xbb8] sm:$0xff]
    %v2110 = vld [vmem:[#allocation4 + $0xbc0] sm:$0xff]
    %v2111 = vld [vmem:[#allocation4 + $0xbc8] sm:$0xff]
    %v2112 = vld [vmem:[#allocation4 + $0xbd0] sm:$0xff]
    %v2113 = vld [vmem:[#allocation4 + $0xbd8] sm:$0xff]
    %v2114 = vld [vmem:[#allocation4 + $0xbe0] sm:$0xff]
    %v2115 = vld [vmem:[#allocation4 + $0xbe8] sm:$0xff]
    %v2116 = vld [vmem:[#allocation4 + $0xbf0] sm:$0xff]
    %v2117 = vld [vmem:[#allocation4 + $0xbf8] sm:$0xff]
    %v2118 = vld [vmem:[#allocation4 + $0xc00] sm:$0xff]
    %v2119 = vld [vmem:[#allocation4 + $0xc08] sm:$0xff]
    %v2120 = vld [vmem:[#allocation4 + $0xc10] sm:$0xff]
    %v2121 = vld [vmem:[#allocation4 + $0xc18] sm:$0xff]
    %v2122 = vld [vmem:[#allocation4 + $0xc20] sm:$0xff]
    %v2123 = vld [vmem:[#allocation4 + $0xc28] sm:$0xff]
    %v2124 = vld [vmem:[#allocation4 + $0xc30] sm:$0xff]
    %v2125 = vld [vmem:[#allocation4 + $0xc38] sm:$0xff]
    %v2126 = vld [vmem:[#allocation4 + $0xc40] sm:$0xff]
    %v2127 = vld [vmem:[#allocation4 + $0xc48] sm:$0xff]
    %v2128 = vld [vmem:[#allocation4 + $0xc50] sm:$0xff]
    %v2129 = vld [vmem:[#allocation4 + $0xc58] sm:$0xff]
    %v2130 = vld [vmem:[#allocation4 + $0xc60] sm:$0xff]
    %v2131 = vld [vmem:[#allocation4 + $0xc68] sm:$0xff]
    %v2132 = vld [vmem:[#allocation4 + $0xc70] sm:$0xff]
    %v2133 = vld [vmem:[#allocation4 + $0xc78] sm:$0xff]
    %v2134 = vld [vmem:[#allocation4 + $0xc80] sm:$0xff]
    %v2135 = vld [vmem:[#allocation4 + $0xc88] sm:$0xff]
    %v2136 = vld [vmem:[#allocation4 + $0xc90] sm:$0xff]
    %v2137 = vld [vmem:[#allocation4 + $0xc98] sm:$0xff]
    %v2138 = vld [vmem:[#allocation4 + $0xca0] sm:$0xff]
    %v2139 = vld [vmem:[#allocation4 + $0xca8] sm:$0xff]
    %v2140 = vld [vmem:[#allocation4 + $0xcb0] sm:$0xff]
    %v2141 = vld [vmem:[#allocation4 + $0xcb8] sm:$0xff]
    %v2142 = vld [vmem:[#allocation4 + $0xcc0] sm:$0xff]
    %v2143 = vld [vmem:[#allocation4 + $0xcc8] sm:$0xff]
    %v2144 = vld [vmem:[#allocation4 + $0xcd0] sm:$0xff]
    %v2145 = vld [vmem:[#allocation4 + $0xcd8] sm:$0xff]
    %v2146 = vld [vmem:[#allocation4 + $0xce0] sm:$0xff]
    %v2147 = vld [vmem:[#allocation4 + $0xce8] sm:$0xff]
    %v2148 = vld [vmem:[#allocation4 + $0xcf0] sm:$0xff]
    %v2149 = vld [vmem:[#allocation4 + $0xcf8] sm:$0xff]
    %v2150 = vld [vmem:[#allocation4 + $0xd00] sm:$0xff]
    %v2151 = vld [vmem:[#allocation4 + $0xd08] sm:$0xff]
    %v2152 = vld [vmem:[#allocation4 + $0xd10] sm:$0xff]
    %v2153 = vld [vmem:[#allocation4 + $0xd18] sm:$0xff]
    %v2154 = vld [vmem:[#allocation4 + $0xd20] sm:$0xff]
    %v2155 = vld [vmem:[#allocation4 + $0xd28] sm:$0xff]
    %v2156 = vld [vmem:[#allocation4 + $0xd30] sm:$0xff]
    %v2157 = vld [vmem:[#allocation4 + $0xd38] sm:$0xff]
    %v2158 = vld [vmem:[#allocation4 + $0xd40] sm:$0xff]
    %v2159 = vld [vmem:[#allocation4 + $0xd48] sm:$0xff]
    %v2160 = vld [vmem:[#allocation4 + $0xd50] sm:$0xff]
    %v2161 = vld [vmem:[#allocation4 + $0xd58] sm:$0xff]
    %v2162 = vld [vmem:[#allocation4 + $0xd60] sm:$0xff]
    %v2163 = vld [vmem:[#allocation4 + $0xd68] sm:$0xff]
    %v2164 = vld [vmem:[#allocation4 + $0xd70] sm:$0xff]
    %v2165 = vld [vmem:[#allocation4 + $0xd78] sm:$0xff]
    %v2166 = vld [vmem:[#allocation4 + $0xd80] sm:$0xff]
    %v2167 = vld [vmem:[#allocation4 + $0xd88] sm:$0xff]
    %v2168 = vld [vmem:[#allocation4 + $0xd90] sm:$0xff]
    %v2169 = vld [vmem:[#allocation4 + $0xd98] sm:$0xff]
    %v2170 = vld [vmem:[#allocation4 + $0xda0] sm:$0xff]
    %v2171 = vld [vmem:[#allocation4 + $0xda8] sm:$0xff]
    %v2172 = vld [vmem:[#allocation4 + $0xdb0] sm:$0xff]
    %v2173 = vld [vmem:[#allocation4 + $0xdb8] sm:$0xff]
    %v2174 = vld [vmem:[#allocation4 + $0xdc0] sm:$0xff]
    %v2175 = vld [vmem:[#allocation4 + $0xdc8] sm:$0xff]
    %v2176 = vld [vmem:[#allocation4 + $0xdd0] sm:$0xff]
    %v2177 = vld [vmem:[#allocation4 + $0xdd8] sm:$0xff]
    %v2178 = vld [vmem:[#allocation4 + $0xde0] sm:$0xff]
    %v2179 = vld [vmem:[#allocation4 + $0xde8] sm:$0xff]
    %v2180 = vld [vmem:[#allocation4 + $0xdf0] sm:$0xff]
    %v2181 = vld [vmem:[#allocation4 + $0xdf8] sm:$0xff]
    %v2182 = vld [vmem:[#allocation4 + $0xe00] sm:$0xff]
    %v2183 = vld [vmem:[#allocation4 + $0xe08] sm:$0xff]
    %v2184 = vld [vmem:[#allocation4 + $0xe10] sm:$0xff]
    %v2185 = vld [vmem:[#allocation4 + $0xe18] sm:$0xff]
    %v2186 = vld [vmem:[#allocation4 + $0xe20] sm:$0xff]
    %v2187 = vld [vmem:[#allocation4 + $0xe28] sm:$0xff]
    %v2188 = vld [vmem:[#allocation4 + $0xe30] sm:$0xff]
    %v2189 = vld [vmem:[#allocation4 + $0xe38] sm:$0xff]
    %v2190 = vld [vmem:[#allocation4 + $0xe40] sm:$0xff]
    %v2191 = vld [vmem:[#allocation4 + $0xe48] sm:$0xff]
    %v2192 = vld [vmem:[#allocation4 + $0xe50] sm:$0xff]
    %v2193 = vld [vmem:[#allocation4 + $0xe58] sm:$0xff]
    %v2194 = vld [vmem:[#allocation4 + $0xe60] sm:$0xff]
    %v2195 = vld [vmem:[#allocation4 + $0xe68] sm:$0xff]
    %v2196 = vld [vmem:[#allocation4 + $0xe70] sm:$0xff]
    %v2197 = vld [vmem:[#allocation4 + $0xe78] sm:$0xff]
    %v2198 = vld [vmem:[#allocation4 + $0xe80] sm:$0xff]
    %v2199 = vld [vmem:[#allocation4 + $0xe88] sm:$0xff]
    %v2200 = vld [vmem:[#allocation4 + $0xe90] sm:$0xff]
    %v2201 = vld [vmem:[#allocation4 + $0xe98] sm:$0xff]
    %v2202 = vld [vmem:[#allocation4 + $0xea0] sm:$0xff]
    %v2203 = vld [vmem:[#allocation4 + $0xea8] sm:$0xff]
    %v2204 = vld [vmem:[#allocation4 + $0xeb0] sm:$0xff]
    %v2205 = vld [vmem:[#allocation4 + $0xeb8] sm:$0xff]
    %v2206 = vld [vmem:[#allocation4 + $0xec0] sm:$0xff]
    %v2207 = vld [vmem:[#allocation4 + $0xec8] sm:$0xff]
    %v2208 = vld [vmem:[#allocation4 + $0xed0] sm:$0xff]
    %v2209 = vld [vmem:[#allocation4 + $0xed8] sm:$0xff]
    %v2210 = vld [vmem:[#allocation4 + $0xee0] sm:$0xff]
    %v2211 = vld [vmem:[#allocation4 + $0xee8] sm:$0xff]
    %v2212 = vld [vmem:[#allocation4 + $0xef0] sm:$0xff]
    %v2213 = vld [vmem:[#allocation4 + $0xef8] sm:$0xff]
    %v2214 = vld [vmem:[#allocation4 + $0xf00] sm:$0xff]
    %v2215 = vld [vmem:[#allocation4 + $0xf08] sm:$0xff]
    %v2216 = vld [vmem:[#allocation4 + $0xf10] sm:$0xff]
    %v2217 = vld [vmem:[#allocation4 + $0xf18] sm:$0xff]
    %v2218 = vld [vmem:[#allocation4 + $0xf20] sm:$0xff]
    %v2219 = vld [vmem:[#allocation4 + $0xf28] sm:$0xff]
    %v2220 = vld [vmem:[#allocation4 + $0xf30] sm:$0xff]
    %v2221 = vld [vmem:[#allocation4 + $0xf38] sm:$0xff]
    %v2222 = vld [vmem:[#allocation4 + $0xf40] sm:$0xff]
    %v2223 = vld [vmem:[#allocation4 + $0xf48] sm:$0xff]
    %v2224 = vld [vmem:[#allocation4 + $0xf50] sm:$0xff]
    %v2225 = vld [vmem:[#allocation4 + $0xf58] sm:$0xff]
    %v2226 = vld [vmem:[#allocation4 + $0xf60] sm:$0xff]
    %v2227 = vld [vmem:[#allocation4 + $0xf68] sm:$0xff]
    %v2228 = vld [vmem:[#allocation4 + $0xf70] sm:$0xff]
    %v2229 = vld [vmem:[#allocation4 + $0xf78] sm:$0xff]
    %v2230 = vld [vmem:[#allocation4 + $0xf80] sm:$0xff]
    %v2231 = vld [vmem:[#allocation4 + $0xf88] sm:$0xff]
    %v2232 = vld [vmem:[#allocation4 + $0xf90] sm:$0xff]
    %v2233 = vld [vmem:[#allocation4 + $0xf98] sm:$0xff]
    %v2234 = vld [vmem:[#allocation4 + $0xfa0] sm:$0xff]
    %v2235 = vld [vmem:[#allocation4 + $0xfa8] sm:$0xff]
    %v2236 = vld [vmem:[#allocation4 + $0xfb0] sm:$0xff]
    %v2237 = vld [vmem:[#allocation4 + $0xfb8] sm:$0xff]
    %v2238 = vld [vmem:[#allocation4 + $0xfc0] sm:$0xff]
    %v2239 = vld [vmem:[#allocation4 + $0xfc8] sm:$0xff]
    %v2240 = vld [vmem:[#allocation4 + $0xfd0] sm:$0xff]
    %v2241 = vld [vmem:[#allocation4 + $0xfd8] sm:$0xff]
    %v2242 = vld [vmem:[#allocation4 + $0xfe0] sm:$0xff]
    %v2243 = vld [vmem:[#allocation4 + $0xfe8] sm:$0xff]
    %v2244 = vld [vmem:[#allocation4 + $0xff0] sm:$0xff]
    %v2245 = vld [vmem:[#allocation4 + $0xff8] sm:$0xff]
    %v2246 = vld [vmem:[#allocation4 + $0x1000] sm:$0xff]
    %v2247 = vld [vmem:[#allocation4 + $0x1008] sm:$0xff]
    %v2248 = vld [vmem:[#allocation4 + $0x1010] sm:$0xff]
    %v2249 = vld [vmem:[#allocation4 + $0x1018] sm:$0xff]
    %v2250 = vld [vmem:[#allocation4 + $0x1020] sm:$0xff]
    %v2251 = vld [vmem:[#allocation4 + $0x1028] sm:$0xff]
    %v2252 = vld [vmem:[#allocation4 + $0x1030] sm:$0xff]
    %v2253 = vld [vmem:[#allocation4 + $0x1038] sm:$0xff]
    %v2254 = vld [vmem:[#allocation4 + $0x1040] sm:$0xff]
    %v2255 = vld [vmem:[#allocation4 + $0x1048] sm:$0xff]
    %v2256 = vld [vmem:[#allocation4 + $0x1050] sm:$0xff]
    %v2257 = vld [vmem:[#allocation4 + $0x1058] sm:$0xff]
    %v2258 = vld [vmem:[#allocation4 + $0x1060] sm:$0xff]
    %v2259 = vld [vmem:[#allocation4 + $0x1068] sm:$0xff]
    %v2260 = vld [vmem:[#allocation4 + $0x1070] sm:$0xff]
    %v2261 = vld [vmem:[#allocation4 + $0x1078] sm:$0xff]
    %v2262 = vld [vmem:[#allocation4 + $0x1080] sm:$0xff]
    %v2263 = vld [vmem:[#allocation4 + $0x1088] sm:$0xff]
    %v2264 = vld [vmem:[#allocation4 + $0x1090] sm:$0xff]
    %v2265 = vld [vmem:[#allocation4 + $0x1098] sm:$0xff]
    %v2266 = vld [vmem:[#allocation4 + $0x10a0] sm:$0xff]
    %v2267 = vld [vmem:[#allocation4 + $0x10a8] sm:$0xff]
    %v2268 = vld [vmem:[#allocation4 + $0x10b0] sm:$0xff]
    %v2269 = vld [vmem:[#allocation4 + $0x10b8] sm:$0xff]
    %v2270 = vld [vmem:[#allocation4 + $0x10c0] sm:$0xff]
    %v2271 = vld [vmem:[#allocation4 + $0x10c8] sm:$0xff]
    %v2272 = vld [vmem:[#allocation4 + $0x10d0] sm:$0xff]
    %v2273 = vld [vmem:[#allocation4 + $0x10d8] sm:$0xff]
    %v2274 = vld [vmem:[#allocation4 + $0x10e0] sm:$0xff]
    %v2275 = vld [vmem:[#allocation4 + $0x10e8] sm:$0xff]
    %v2276 = vld [vmem:[#allocation4 + $0x10f0] sm:$0xff]
    %v2277 = vld [vmem:[#allocation4 + $0x10f8] sm:$0xff]
    %v2278 = vld [vmem:[#allocation4 + $0x1100] sm:$0xff]
    %v2279 = vld [vmem:[#allocation4 + $0x1108] sm:$0xff]
    %v2280 = vld [vmem:[#allocation4 + $0x1110] sm:$0xff]
    %v2281 = vld [vmem:[#allocation4 + $0x1118] sm:$0xff]
    %v2282 = vld [vmem:[#allocation4 + $0x1120] sm:$0xff]
    %v2283 = vld [vmem:[#allocation4 + $0x1128] sm:$0xff]
    %v2284 = vld [vmem:[#allocation4 + $0x1130] sm:$0xff]
    %v2285 = vld [vmem:[#allocation4 + $0x1138] sm:$0xff]
    %v2286 = vld [vmem:[#allocation4 + $0x1140] sm:$0xff]
    %v2287 = vld [vmem:[#allocation4 + $0x1148] sm:$0xff]
    %v2288 = vld [vmem:[#allocation4 + $0x1150] sm:$0xff]
    %v2289 = vld [vmem:[#allocation4 + $0x1158] sm:$0xff]
    %v2290 = vld [vmem:[#allocation4 + $0x1160] sm:$0xff]
    %v2291 = vld [vmem:[#allocation4 + $0x1168] sm:$0xff]
    %v2292 = vld [vmem:[#allocation4 + $0x1170] sm:$0xff]
    %v2293 = vld [vmem:[#allocation4 + $0x1178] sm:$0xff]
    %v2294 = vld [vmem:[#allocation4 + $0x1180] sm:$0xff]
    %v2295 = vld [vmem:[#allocation4 + $0x1188] sm:$0xff]
    %v2296 = vld [vmem:[#allocation4 + $0x1190] sm:$0xff]
    %v2297 = vld [vmem:[#allocation4 + $0x1198] sm:$0xff]
    %v2298 = vld [vmem:[#allocation4 + $0x11a0] sm:$0xff]
    %v2299 = vld [vmem:[#allocation4 + $0x11a8] sm:$0xff]
    %v2300 = vld [vmem:[#allocation4 + $0x11b0] sm:$0xff]
    %v2301 = vld [vmem:[#allocation4 + $0x11b8] sm:$0xff]
    %v2302 = vld [vmem:[#allocation4 + $0x11c0] sm:$0xff]
    %v2303 = vld [vmem:[#allocation4 + $0x11c8] sm:$0xff]
    %v2304 = vld [vmem:[#allocation4 + $0x11d0] sm:$0xff]
    %v2305 = vld [vmem:[#allocation4 + $0x11d8] sm:$0xff]
    %v2306 = vld [vmem:[#allocation4 + $0x11e0] sm:$0xff]
    %v2307 = vld [vmem:[#allocation4 + $0x11e8] sm:$0xff]
    %v2308 = vld [vmem:[#allocation4 + $0x11f0] sm:$0xff]
    %v2309 = vld [vmem:[#allocation4 + $0x11f8] sm:$0xff]
    %v2310 = vld [vmem:[#allocation4 + $0x1200] sm:$0xff]
    %v2311 = vld [vmem:[#allocation4 + $0x1208] sm:$0xff]
    %v2312 = vld [vmem:[#allocation4 + $0x1210] sm:$0xff]
    %v2313 = vld [vmem:[#allocation4 + $0x1218] sm:$0xff]
    %v2314 = vld [vmem:[#allocation4 + $0x1220] sm:$0xff]
    %v2315 = vld [vmem:[#allocation4 + $0x1228] sm:$0xff]
    %v2316 = vld [vmem:[#allocation4 + $0x1230] sm:$0xff]
    %v2317 = vld [vmem:[#allocation4 + $0x1238] sm:$0xff]
    %v2318 = vld [vmem:[#allocation4 + $0x1240] sm:$0xff]
    %v2319 = vld [vmem:[#allocation4 + $0x1248] sm:$0xff]
    %v2320 = vld [vmem:[#allocation4 + $0x1250] sm:$0xff]
    %v2321 = vld [vmem:[#allocation4 + $0x1258] sm:$0xff]
    %v2322 = vld [vmem:[#allocation4 + $0x1260] sm:$0xff]
    %v2323 = vld [vmem:[#allocation4 + $0x1268] sm:$0xff]
    %v2324 = vld [vmem:[#allocation4 + $0x1270] sm:$0xff]
    %v2325 = vld [vmem:[#allocation4 + $0x1278] sm:$0xff]
    %v2326 = vld [vmem:[#allocation4 + $0x1280] sm:$0xff]
    %v2327 = vld [vmem:[#allocation4 + $0x1288] sm:$0xff]
    %v2328 = vld [vmem:[#allocation4 + $0x1290] sm:$0xff]
    %v2329 = vld [vmem:[#allocation4 + $0x1298] sm:$0xff]
    %v2330 = vld [vmem:[#allocation4 + $0x12a0] sm:$0xff]
    %v2331 = vld [vmem:[#allocation4 + $0x12a8] sm:$0xff]
    %v2332 = vld [vmem:[#allocation4 + $0x12b0] sm:$0xff]
    %v2333 = vld [vmem:[#allocation4 + $0x12b8] sm:$0xff]
    %v2334 = vld [vmem:[#allocation4 + $0x12c0] sm:$0xff]
    %v2335 = vld [vmem:[#allocation4 + $0x12c8] sm:$0xff]
    %v2336 = vld [vmem:[#allocation4 + $0x12d0] sm:$0xff]
    %v2337 = vld [vmem:[#allocation4 + $0x12d8] sm:$0xff]
    %v2338 = vld [vmem:[#allocation4 + $0x12e0] sm:$0xff]
    %v2339 = vld [vmem:[#allocation4 + $0x12e8] sm:$0xff]
    %v2340 = vld [vmem:[#allocation4 + $0x12f0] sm:$0xff]
    %v2341 = vld [vmem:[#allocation4 + $0x12f8] sm:$0xff]
    %v2342 = vld [vmem:[#allocation4 + $0x1300] sm:$0xff]
    %v2343 = vld [vmem:[#allocation4 + $0x1308] sm:$0xff]
    %v2344 = vld [vmem:[#allocation4 + $0x1310] sm:$0xff]
    %v2345 = vld [vmem:[#allocation4 + $0x1318] sm:$0xff]
    %v2346 = vld [vmem:[#allocation4 + $0x1320] sm:$0xff]
    %v2347 = vld [vmem:[#allocation4 + $0x1328] sm:$0xff]
    %v2348 = vld [vmem:[#allocation4 + $0x1330] sm:$0xff]
    %v2349 = vld [vmem:[#allocation4 + $0x1338] sm:$0xff]
    %v2350 = vld [vmem:[#allocation4 + $0x1340] sm:$0xff]
    %v2351 = vld [vmem:[#allocation4 + $0x1348] sm:$0xff]
    %v2352 = vld [vmem:[#allocation4 + $0x1350] sm:$0xff]
    %v2353 = vld [vmem:[#allocation4 + $0x1358] sm:$0xff]
    %v2354 = vld [vmem:[#allocation4 + $0x1360] sm:$0xff]
    %v2355 = vld [vmem:[#allocation4 + $0x1368] sm:$0xff]
    %v2356 = vld [vmem:[#allocation4 + $0x1370] sm:$0xff]
    %v2357 = vld [vmem:[#allocation4 + $0x1378] sm:$0xff]
    %v2358 = vld [vmem:[#allocation4 + $0x1380] sm:$0xff]
    %v2359 = vld [vmem:[#allocation4 + $0x1388] sm:$0xff]
    %v2360 = vld [vmem:[#allocation4 + $0x1390] sm:$0xff]
    %v2361 = vld [vmem:[#allocation4 + $0x1398] sm:$0xff]
    %v2362 = vld [vmem:[#allocation4 + $0x13a0] sm:$0xff]
    %v2363 = vld [vmem:[#allocation4 + $0x13a8] sm:$0xff]
    %v2364 = vld [vmem:[#allocation4 + $0x13b0] sm:$0xff]
    %v2365 = vld [vmem:[#allocation4 + $0x13b8] sm:$0xff]
    %v2366 = vld [vmem:[#allocation4 + $0x13c0] sm:$0xff]
    %v2367 = vld [vmem:[#allocation4 + $0x13c8] sm:$0xff]
    %v2368 = vld [vmem:[#allocation4 + $0x13d0] sm:$0xff]
    %v2369 = vld [vmem:[#allocation4 + $0x13d8] sm:$0xff]
    %v2370 = vld [vmem:[#allocation4 + $0x13e0] sm:$0xff]
    %v2371 = vld [vmem:[#allocation4 + $0x13e8] sm:$0xff]
    %v2372 = vld [vmem:[#allocation4 + $0x13f0] sm:$0xff]
    %v2373 = vld [vmem:[#allocation4 + $0x13f8] sm:$0xff]
    %v2374 = vld [vmem:[#allocation4 + $0x1400] sm:$0xff]
    %v2375 = vld [vmem:[#allocation4 + $0x1408] sm:$0xff]
    %v2376 = vld [vmem:[#allocation4 + $0x1410] sm:$0xff]
    %v2377 = vld [vmem:[#allocation4 + $0x1418] sm:$0xff]
    %v2378 = vld [vmem:[#allocation4 + $0x1420] sm:$0xff]
    %v2379 = vld [vmem:[#allocation4 + $0x1428] sm:$0xff]
    %v2380 = vld [vmem:[#allocation4 + $0x1430] sm:$0xff]
    %v2381 = vld [vmem:[#allocation4 + $0x1438] sm:$0xff]
    %v2382 = vld [vmem:[#allocation4 + $0x1440] sm:$0xff]
    %v2383 = vld [vmem:[#allocation4 + $0x1448] sm:$0xff]
    %v2384 = vld [vmem:[#allocation4 + $0x1450] sm:$0xff]
    %v2385 = vld [vmem:[#allocation4 + $0x1458] sm:$0xff]
    %v2386 = vld [vmem:[#allocation4 + $0x1460] sm:$0xff]
    %v2387 = vld [vmem:[#allocation4 + $0x1468] sm:$0xff]
    %v2388 = vld [vmem:[#allocation4 + $0x1470] sm:$0xff]
    %v2389 = vld [vmem:[#allocation4 + $0x1478] sm:$0xff]
    %v2390 = vld [vmem:[#allocation4 + $0x1480] sm:$0xff]
    %v2391 = vld [vmem:[#allocation4 + $0x1488] sm:$0xff]
    %v2392 = vld [vmem:[#allocation4 + $0x1490] sm:$0xff]
    %v2393 = vld [vmem:[#allocation4 + $0x1498] sm:$0xff]
    %v2394 = vld [vmem:[#allocation4 + $0x14a0] sm:$0xff]
    %v2395 = vld [vmem:[#allocation4 + $0x14a8] sm:$0xff]
    %v2396 = vld [vmem:[#allocation4 + $0x14b0] sm:$0xff]
    %v2397 = vld [vmem:[#allocation4 + $0x14b8] sm:$0xff]
    %v2398 = vld [vmem:[#allocation4 + $0x14c0] sm:$0xff]
    %v2399 = vld [vmem:[#allocation4 + $0x14c8] sm:$0xff]
    %v2400 = vld [vmem:[#allocation4 + $0x14d0] sm:$0xff]
    %v2401 = vld [vmem:[#allocation4 + $0x14d8] sm:$0xff]
    %v2402 = vld [vmem:[#allocation4 + $0x14e0] sm:$0xff]
    %v2403 = vld [vmem:[#allocation4 + $0x14e8] sm:$0xff]
    %v2404 = vld [vmem:[#allocation4 + $0x14f0] sm:$0xff]
    %v2405 = vld [vmem:[#allocation4 + $0x14f8] sm:$0xff]
    %v2406 = vld [vmem:[#allocation4 + $0x1500] sm:$0xff]
    %v2407 = vld [vmem:[#allocation4 + $0x1508] sm:$0xff]
    %v2408 = vld [vmem:[#allocation4 + $0x1510] sm:$0xff]
    %v2409 = vld [vmem:[#allocation4 + $0x1518] sm:$0xff]
    %v2410 = vld [vmem:[#allocation4 + $0x1520] sm:$0xff]
    %v2411 = vld [vmem:[#allocation4 + $0x1528] sm:$0xff]
    %v2412 = vld [vmem:[#allocation4 + $0x1530] sm:$0xff]
    %v2413 = vld [vmem:[#allocation4 + $0x1538] sm:$0xff]
    %v2414 = vld [vmem:[#allocation4 + $0x1540] sm:$0xff]
    %v2415 = vld [vmem:[#allocation4 + $0x1548] sm:$0xff]
    %v2416 = vld [vmem:[#allocation4 + $0x1550] sm:$0xff]
    %v2417 = vld [vmem:[#allocation4 + $0x1558] sm:$0xff]
    %v2418 = vld [vmem:[#allocation4 + $0x1560] sm:$0xff]
    %v2419 = vld [vmem:[#allocation4 + $0x1568] sm:$0xff]
    %v2420 = vld [vmem:[#allocation4 + $0x1570] sm:$0xff]
    %v2421 = vld [vmem:[#allocation4 + $0x1578] sm:$0xff]
    %v2422 = vld [vmem:[#allocation4 + $0x1580] sm:$0xff]
    %v2423 = vld [vmem:[#allocation4 + $0x1588] sm:$0xff]
    %v2424 = vld [vmem:[#allocation4 + $0x1590] sm:$0xff]
    %v2425 = vld [vmem:[#allocation4 + $0x1598] sm:$0xff]
    %v2426 = vld [vmem:[#allocation4 + $0x15a0] sm:$0xff]
    %v2427 = vld [vmem:[#allocation4 + $0x15a8] sm:$0xff]
    %v2428 = vld [vmem:[#allocation4 + $0x15b0] sm:$0xff]
    %v2429 = vld [vmem:[#allocation4 + $0x15b8] sm:$0xff]
    %v2430 = vld [vmem:[#allocation4 + $0x15c0] sm:$0xff]
    %v2431 = vld [vmem:[#allocation4 + $0x15c8] sm:$0xff]
    %v2432 = vld [vmem:[#allocation4 + $0x15d0] sm:$0xff]
    %v2433 = vld [vmem:[#allocation4 + $0x15d8] sm:$0xff]
    %v2434 = vld [vmem:[#allocation4 + $0x15e0] sm:$0xff]
    %v2435 = vld [vmem:[#allocation4 + $0x15e8] sm:$0xff]
    %v2436 = vld [vmem:[#allocation4 + $0x15f0] sm:$0xff]
    %v2437 = vld [vmem:[#allocation4 + $0x15f8] sm:$0xff]
    %v2438 = vld [vmem:[#allocation4 + $0x1600] sm:$0xff]
    %v2439 = vld [vmem:[#allocation4 + $0x1608] sm:$0xff]
    %v2440 = vld [vmem:[#allocation4 + $0x1610] sm:$0xff]
    %v2441 = vld [vmem:[#allocation4 + $0x1618] sm:$0xff]
    %v2442 = vld [vmem:[#allocation4 + $0x1620] sm:$0xff]
    %v2443 = vld [vmem:[#allocation4 + $0x1628] sm:$0xff]
    %v2444 = vld [vmem:[#allocation4 + $0x1630] sm:$0xff]
    %v2445 = vld [vmem:[#allocation4 + $0x1638] sm:$0xff]
    %v2446 = vld [vmem:[#allocation4 + $0x1640] sm:$0xff]
    %v2447 = vld [vmem:[#allocation4 + $0x1648] sm:$0xff]
    %v2448 = vld [vmem:[#allocation4 + $0x1650] sm:$0xff]
    %v2449 = vld [vmem:[#allocation4 + $0x1658] sm:$0xff]
    %v2450 = vld [vmem:[#allocation4 + $0x1660] sm:$0xff]
    %v2451 = vld [vmem:[#allocation4 + $0x1668] sm:$0xff]
    %v2452 = vld [vmem:[#allocation4 + $0x1670] sm:$0xff]
    %v2453 = vld [vmem:[#allocation4 + $0x1678] sm:$0xff]
    %v2454 = vld [vmem:[#allocation4 + $0x1680] sm:$0xff]
    %v2455 = vld [vmem:[#allocation4 + $0x1688] sm:$0xff]
    %v2456 = vld [vmem:[#allocation4 + $0x1690] sm:$0xff]
    %v2457 = vld [vmem:[#allocation4 + $0x1698] sm:$0xff]
    %v2458 = vld [vmem:[#allocation4 + $0x16a0] sm:$0xff]
    %v2459 = vld [vmem:[#allocation4 + $0x16a8] sm:$0xff]
    %v2460 = vld [vmem:[#allocation4 + $0x16b0] sm:$0xff]
    %v2461 = vld [vmem:[#allocation4 + $0x16b8] sm:$0xff]
    %v2462 = vld [vmem:[#allocation4 + $0x16c0] sm:$0xff]
    %v2463 = vld [vmem:[#allocation4 + $0x16c8] sm:$0xff]
    %v2464 = vld [vmem:[#allocation4 + $0x16d0] sm:$0xff]
    %v2465 = vld [vmem:[#allocation4 + $0x16d8] sm:$0xff]
    %v2466 = vld [vmem:[#allocation4 + $0x16e0] sm:$0xff]
    %v2467 = vld [vmem:[#allocation4 + $0x16e8] sm:$0xff]
    %v2468 = vld [vmem:[#allocation4 + $0x16f0] sm:$0xff]
    %v2469 = vld [vmem:[#allocation4 + $0x16f8] sm:$0xff]
    %v2470 = vld [vmem:[#allocation4 + $0x1700] sm:$0xff]
    %v2471 = vld [vmem:[#allocation4 + $0x1708] sm:$0xff]
    %v2472 = vld [vmem:[#allocation4 + $0x1710] sm:$0xff]
    %v2473 = vld [vmem:[#allocation4 + $0x1718] sm:$0xff]
    %v2474 = vld [vmem:[#allocation4 + $0x1720] sm:$0xff]
    %v2475 = vld [vmem:[#allocation4 + $0x1728] sm:$0xff]
    %v2476 = vld [vmem:[#allocation4 + $0x1730] sm:$0xff]
    %v2477 = vld [vmem:[#allocation4 + $0x1738] sm:$0xff]
    %v2478 = vld [vmem:[#allocation4 + $0x1740] sm:$0xff]
    %v2479 = vld [vmem:[#allocation4 + $0x1748] sm:$0xff]
    %v2480 = vld [vmem:[#allocation4 + $0x1750] sm:$0xff]
    %v2481 = vld [vmem:[#allocation4 + $0x1758] sm:$0xff]
    %v2482 = vld [vmem:[#allocation4 + $0x1760] sm:$0xff]
    %v2483 = vld [vmem:[#allocation4 + $0x1768] sm:$0xff]
    %v2484 = vld [vmem:[#allocation4 + $0x1770] sm:$0xff]
    %v2485 = vld [vmem:[#allocation4 + $0x1778] sm:$0xff]
    %v2486 = vld [vmem:[#allocation4 + $0x1780] sm:$0xff]
    %v2487 = vld [vmem:[#allocation4 + $0x1788] sm:$0xff]
    %v2488 = vld [vmem:[#allocation4 + $0x1790] sm:$0xff]
    %v2489 = vld [vmem:[#allocation4 + $0x1798] sm:$0xff]
    %v2490 = vld [vmem:[#allocation4 + $0x17a0] sm:$0xff]
    %v2491 = vld [vmem:[#allocation4 + $0x17a8] sm:$0xff]
    %v2492 = vld [vmem:[#allocation4 + $0x17b0] sm:$0xff]
    %v2493 = vld [vmem:[#allocation4 + $0x17b8] sm:$0xff]
    %v2494 = vld [vmem:[#allocation4 + $0x17c0] sm:$0xff]
    %v2495 = vld [vmem:[#allocation4 + $0x17c8] sm:$0xff]
    %v2496 = vld [vmem:[#allocation4 + $0x17d0] sm:$0xff]
    %v2497 = vld [vmem:[#allocation4 + $0x17d8] sm:$0xff]
    %v2498 = vld [vmem:[#allocation4 + $0x17e0] sm:$0xff]
    %v2499 = vld [vmem:[#allocation4 + $0x17e8] sm:$0xff]
    %v2500 = vld [vmem:[#allocation4 + $0x17f0] sm:$0xff]
    %v2501 = vld [vmem:[#allocation4 + $0x17f8] sm:$0xff]
    %v2502 = vld [vmem:[#allocation4 + $0x1800] sm:$0xff]
    %v2503 = vld [vmem:[#allocation4 + $0x1808] sm:$0xff]
    %v2504 = vld [vmem:[#allocation4 + $0x1810] sm:$0xff]
    %v2505 = vld [vmem:[#allocation4 + $0x1818] sm:$0xff]
    %v2506 = vld [vmem:[#allocation4 + $0x1820] sm:$0xff]
    %v2507 = vld [vmem:[#allocation4 + $0x1828] sm:$0xff]
    %v2508 = vld [vmem:[#allocation4 + $0x1830] sm:$0xff]
    %v2509 = vld [vmem:[#allocation4 + $0x1838] sm:$0xff]
    %v2510 = vld [vmem:[#allocation4 + $0x1840] sm:$0xff]
    %v2511 = vld [vmem:[#allocation4 + $0x1848] sm:$0xff]
    %v2512 = vld [vmem:[#allocation4 + $0x1850] sm:$0xff]
    %v2513 = vld [vmem:[#allocation4 + $0x1858] sm:$0xff]
    %v2514 = vld [vmem:[#allocation4 + $0x1860] sm:$0xff]
    %v2515 = vld [vmem:[#allocation4 + $0x1868] sm:$0xff]
    %v2516 = vld [vmem:[#allocation4 + $0x1870] sm:$0xff]
    %v2517 = vld [vmem:[#allocation4 + $0x1878] sm:$0xff]
    %v2518 = vld [vmem:[#allocation4 + $0x1880] sm:$0xff]
    %v2519 = vld [vmem:[#allocation4 + $0x1888] sm:$0xff]
    %v2520 = vld [vmem:[#allocation4 + $0x1890] sm:$0xff]
    %v2521 = vld [vmem:[#allocation4 + $0x1898] sm:$0xff]
    %v2522 = vld [vmem:[#allocation4 + $0x18a0] sm:$0xff]
    %v2523 = vld [vmem:[#allocation4 + $0x18a8] sm:$0xff]
    %v2524 = vld [vmem:[#allocation4 + $0x18b0] sm:$0xff]
    %v2525 = vld [vmem:[#allocation4 + $0x18b8] sm:$0xff]
    %v2526 = vld [vmem:[#allocation4 + $0x18c0] sm:$0xff]
    %v2527 = vld [vmem:[#allocation4 + $0x18c8] sm:$0xff]
    %v2528 = vld [vmem:[#allocation4 + $0x18d0] sm:$0xff]
    %v2529 = vld [vmem:[#allocation4 + $0x18d8] sm:$0xff]
    %v2530 = vld [vmem:[#allocation4 + $0x18e0] sm:$0xff]
    %v2531 = vld [vmem:[#allocation4 + $0x18e8] sm:$0xff]
    %v2532 = vld [vmem:[#allocation4 + $0x18f0] sm:$0xff]
    %v2533 = vld [vmem:[#allocation4 + $0x18f8] sm:$0xff]
    %v2534 = vld [vmem:[#allocation4 + $0x1900] sm:$0xff]
    %v2535 = vld [vmem:[#allocation4 + $0x1908] sm:$0xff]
    %v2536 = vld [vmem:[#allocation4 + $0x1910] sm:$0xff]
    %v2537 = vld [vmem:[#allocation4 + $0x1918] sm:$0xff]
    %v2538 = vld [vmem:[#allocation4 + $0x1920] sm:$0xff]
    %v2539 = vld [vmem:[#allocation4 + $0x1928] sm:$0xff]
    %v2540 = vld [vmem:[#allocation4 + $0x1930] sm:$0xff]
    %v2541 = vld [vmem:[#allocation4 + $0x1938] sm:$0xff]
    %v2542 = vld [vmem:[#allocation4 + $0x1940] sm:$0xff]
    %v2543 = vld [vmem:[#allocation4 + $0x1948] sm:$0xff]
    %v2544 = vld [vmem:[#allocation4 + $0x1950] sm:$0xff]
    %v2545 = vld [vmem:[#allocation4 + $0x1958] sm:$0xff]
    %v2546 = vld [vmem:[#allocation4 + $0x1960] sm:$0xff]
    %v2547 = vld [vmem:[#allocation4 + $0x1968] sm:$0xff]
    %v2548 = vld [vmem:[#allocation4 + $0x1970] sm:$0xff]
    %v2549 = vld [vmem:[#allocation4 + $0x1978] sm:$0xff]
    %v2550 = vld [vmem:[#allocation4 + $0x1980] sm:$0xff]
    %v2551 = vld [vmem:[#allocation4 + $0x1988] sm:$0xff]
    %v2552 = vld [vmem:[#allocation4 + $0x1990] sm:$0xff]
    %v2553 = vld [vmem:[#allocation4 + $0x1998] sm:$0xff]
    %v2554 = vld [vmem:[#allocation4 + $0x19a0] sm:$0xff]
    %v2555 = vld [vmem:[#allocation4 + $0x19a8] sm:$0xff]
    %v2556 = vld [vmem:[#allocation4 + $0x19b0] sm:$0xff]
    %v2557 = vld [vmem:[#allocation4 + $0x19b8] sm:$0xff]
    %v2558 = vld [vmem:[#allocation4 + $0x19c0] sm:$0xff]
    %v2559 = vld [vmem:[#allocation4 + $0x19c8] sm:$0xff]
    %v2560 = vld [vmem:[#allocation4 + $0x19d0] sm:$0xff]
    %v2561 = vld [vmem:[#allocation4 + $0x19d8] sm:$0xff]
    %v2562 = vld [vmem:[#allocation4 + $0x19e0] sm:$0xff]
    %v2563 = vld [vmem:[#allocation4 + $0x19e8] sm:$0xff]
    %v2564 = vld [vmem:[#allocation4 + $0x19f0] sm:$0xff]
    %v2565 = vld [vmem:[#allocation4 + $0x19f8] sm:$0xff]
    %v2566 = vld [vmem:[#allocation4 + $0x1a00] sm:$0xff]
    %v2567 = vld [vmem:[#allocation4 + $0x1a08] sm:$0xff]
    %v2568 = vld [vmem:[#allocation4 + $0x1a10] sm:$0xff]
    %v2569 = vld [vmem:[#allocation4 + $0x1a18] sm:$0xff]
    %v2570 = vld [vmem:[#allocation4 + $0x1a20] sm:$0xff]
    %v2571 = vld [vmem:[#allocation4 + $0x1a28] sm:$0xff]
    %v2572 = vld [vmem:[#allocation4 + $0x1a30] sm:$0xff]
    %v2573 = vld [vmem:[#allocation4 + $0x1a38] sm:$0xff]
    %v2574 = vld [vmem:[#allocation4 + $0x1a40] sm:$0xff]
    %v2575 = vld [vmem:[#allocation4 + $0x1a48] sm:$0xff]
    %v2576 = vld [vmem:[#allocation4 + $0x1a50] sm:$0xff]
    %v2577 = vld [vmem:[#allocation4 + $0x1a58] sm:$0xff]
    %v2578 = vld [vmem:[#allocation4 + $0x1a60] sm:$0xff]
    %v2579 = vld [vmem:[#allocation4 + $0x1a68] sm:$0xff]
    %v2580 = vld [vmem:[#allocation4 + $0x1a70] sm:$0xff]
    %v2581 = vld [vmem:[#allocation4 + $0x1a78] sm:$0xff]
    %v2582 = vld [vmem:[#allocation4 + $0x1a80] sm:$0xff]
    %v2583 = vld [vmem:[#allocation4 + $0x1a88] sm:$0xff]
    %v2584 = vld [vmem:[#allocation4 + $0x1a90] sm:$0xff]
    %v2585 = vld [vmem:[#allocation4 + $0x1a98] sm:$0xff]
    %v2586 = vld [vmem:[#allocation4 + $0x1aa0] sm:$0xff]
    %v2587 = vld [vmem:[#allocation4 + $0x1aa8] sm:$0xff]
    %v2588 = vld [vmem:[#allocation4 + $0x1ab0] sm:$0xff]
    %v2589 = vld [vmem:[#allocation4 + $0x1ab8] sm:$0xff]
    %v2590 = vld [vmem:[#allocation4 + $0x1ac0] sm:$0xff]
    %v2591 = vld [vmem:[#allocation4 + $0x1ac8] sm:$0xff]
    %v2592 = vld [vmem:[#allocation4 + $0x1ad0] sm:$0xff]
    %v2593 = vld [vmem:[#allocation4 + $0x1ad8] sm:$0xff]
    %v2594 = vld [vmem:[#allocation4 + $0x1ae0] sm:$0xff]
    %v2595 = vld [vmem:[#allocation4 + $0x1ae8] sm:$0xff]
    %v2596 = vld [vmem:[#allocation4 + $0x1af0] sm:$0xff]
    %v2597 = vld [vmem:[#allocation4 + $0x1af8] sm:$0xff]
    %v2598 = vld [vmem:[#allocation4 + $0x1b00] sm:$0xff]
    %v2599 = vld [vmem:[#allocation4 + $0x1b08] sm:$0xff]
    %v2600 = vld [vmem:[#allocation4 + $0x1b10] sm:$0xff]
    %v2601 = vld [vmem:[#allocation4 + $0x1b18] sm:$0xff]
    %v2602 = vld [vmem:[#allocation4 + $0x1b20] sm:$0xff]
    %v2603 = vld [vmem:[#allocation4 + $0x1b28] sm:$0xff]
    %v2604 = vld [vmem:[#allocation4 + $0x1b30] sm:$0xff]
    %v2605 = vld [vmem:[#allocation4 + $0x1b38] sm:$0xff]
    %v2606 = vld [vmem:[#allocation4 + $0x1b40] sm:$0xff]
    %v2607 = vld [vmem:[#allocation4 + $0x1b48] sm:$0xff]
    %v2608 = vld [vmem:[#allocation4 + $0x1b50] sm:$0xff]
    %v2609 = vld [vmem:[#allocation4 + $0x1b58] sm:$0xff]
    %v2610 = vld [vmem:[#allocation4 + $0x1b60] sm:$0xff]
    %v2611 = vld [vmem:[#allocation4 + $0x1b68] sm:$0xff]
    %v2612 = vld [vmem:[#allocation4 + $0x1b70] sm:$0xff]
    %v2613 = vld [vmem:[#allocation4 + $0x1b78] sm:$0xff]
    %v2614 = vld [vmem:[#allocation4 + $0x1b80] sm:$0xff]
    %v2615 = vld [vmem:[#allocation4 + $0x1b88] sm:$0xff]
    %v2616 = vld [vmem:[#allocation4 + $0x1b90] sm:$0xff]
    %v2617 = vld [vmem:[#allocation4 + $0x1b98] sm:$0xff]
    %v2618 = vld [vmem:[#allocation4 + $0x1ba0] sm:$0xff]
    %v2619 = vld [vmem:[#allocation4 + $0x1ba8] sm:$0xff]
    %v2620 = vld [vmem:[#allocation4 + $0x1bb0] sm:$0xff]
    %v2621 = vld [vmem:[#allocation4 + $0x1bb8] sm:$0xff]
    %v2622 = vld [vmem:[#allocation4 + $0x1bc0] sm:$0xff]
    %v2623 = vld [vmem:[#allocation4 + $0x1bc8] sm:$0xff]
    %v2624 = vld [vmem:[#allocation4 + $0x1bd0] sm:$0xff]
    %v2625 = vld [vmem:[#allocation4 + $0x1bd8] sm:$0xff]
    %v2626 = vld [vmem:[#allocation4 + $0x1be0] sm:$0xff]
    %v2627 = vld [vmem:[#allocation4 + $0x1be8] sm:$0xff]
    %v2628 = vld [vmem:[#allocation4 + $0x1bf0] sm:$0xff]
    %v2629 = vld [vmem:[#allocation4 + $0x1bf8] sm:$0xff]
    %v2630 = vld [vmem:[#allocation4 + $0x1c00] sm:$0xff]
    %v2631 = vld [vmem:[#allocation4 + $0x1c08] sm:$0xff]
    %v2632 = vld [vmem:[#allocation4 + $0x1c10] sm:$0xff]
    %v2633 = vld [vmem:[#allocation4 + $0x1c18] sm:$0xff]
    %v2634 = vld [vmem:[#allocation4 + $0x1c20] sm:$0xff]
    %v2635 = vld [vmem:[#allocation4 + $0x1c28] sm:$0xff]
    %v2636 = vld [vmem:[#allocation4 + $0x1c30] sm:$0xff]
    %v2637 = vld [vmem:[#allocation4 + $0x1c38] sm:$0xff]
    %v2638 = vld [vmem:[#allocation4 + $0x1c40] sm:$0xff]
    %v2639 = vld [vmem:[#allocation4 + $0x1c48] sm:$0xff]
    %v2640 = vld [vmem:[#allocation4 + $0x1c50] sm:$0xff]
    %v2641 = vld [vmem:[#allocation4 + $0x1c58] sm:$0xff]
    %v2642 = vld [vmem:[#allocation4 + $0x1c60] sm:$0xff]
    %v2643 = vld [vmem:[#allocation4 + $0x1c68] sm:$0xff]
    %v2644 = vld [vmem:[#allocation4 + $0x1c70] sm:$0xff]
    %v2645 = vld [vmem:[#allocation4 + $0x1c78] sm:$0xff]
    %v2646 = vld [vmem:[#allocation4 + $0x1c80] sm:$0xff]
    %v2647 = vld [vmem:[#allocation4 + $0x1c88] sm:$0xff]
    %v2648 = vld [vmem:[#allocation4 + $0x1c90] sm:$0xff]
    %v2649 = vld [vmem:[#allocation4 + $0x1c98] sm:$0xff]
    %v2650 = vld [vmem:[#allocation4 + $0x1ca0] sm:$0xff]
    %v2651 = vld [vmem:[#allocation4 + $0x1ca8] sm:$0xff]
    %v2652 = vld [vmem:[#allocation4 + $0x1cb0] sm:$0xff]
    %v2653 = vld [vmem:[#allocation4 + $0x1cb8] sm:$0xff]
    %v2654 = vld [vmem:[#allocation4 + $0x1cc0] sm:$0xff]
    %v2655 = vld [vmem:[#allocation4 + $0x1cc8] sm:$0xff]
    %v2656 = vld [vmem:[#allocation4 + $0x1cd0] sm:$0xff]
    %v2657 = vld [vmem:[#allocation4 + $0x1cd8] sm:$0xff]
    %v2658 = vld [vmem:[#allocation4 + $0x1ce0] sm:$0xff]
    %v2659 = vld [vmem:[#allocation4 + $0x1ce8] sm:$0xff]
    %v2660 = vld [vmem:[#allocation4 + $0x1cf0] sm:$0xff]
    %v2661 = vld [vmem:[#allocation4 + $0x1cf8] sm:$0xff]
    %v2662 = vld [vmem:[#allocation4 + $0x1d00] sm:$0xff]
    %v2663 = vld [vmem:[#allocation4 + $0x1d08] sm:$0xff]
    %v2664 = vld [vmem:[#allocation4 + $0x1d10] sm:$0xff]
    %v2665 = vld [vmem:[#allocation4 + $0x1d18] sm:$0xff]
    %v2666 = vld [vmem:[#allocation4 + $0x1d20] sm:$0xff]
    %v2667 = vld [vmem:[#allocation4 + $0x1d28] sm:$0xff]
    %v2668 = vld [vmem:[#allocation4 + $0x1d30] sm:$0xff]
    %v2669 = vld [vmem:[#allocation4 + $0x1d38] sm:$0xff]
    %v2670 = vld [vmem:[#allocation4 + $0x1d40] sm:$0xff]
    %v2671 = vld [vmem:[#allocation4 + $0x1d48] sm:$0xff]
    %v2672 = vld [vmem:[#allocation4 + $0x1d50] sm:$0xff]
    %v2673 = vld [vmem:[#allocation4 + $0x1d58] sm:$0xff]
    %v2674 = vld [vmem:[#allocation4 + $0x1d60] sm:$0xff]
    %v2675 = vld [vmem:[#allocation4 + $0x1d68] sm:$0xff]
    %v2676 = vld [vmem:[#allocation4 + $0x1d70] sm:$0xff]
    %v2677 = vld [vmem:[#allocation4 + $0x1d78] sm:$0xff]
    %v2678 = vld [vmem:[#allocation4 + $0x1d80] sm:$0xff]
    %v2679 = vld [vmem:[#allocation4 + $0x1d88] sm:$0xff]
    %v2680 = vld [vmem:[#allocation4 + $0x1d90] sm:$0xff]
    %v2681 = vld [vmem:[#allocation4 + $0x1d98] sm:$0xff]
    %v2682 = vld [vmem:[#allocation4 + $0x1da0] sm:$0xff]
    %v2683 = vld [vmem:[#allocation4 + $0x1da8] sm:$0xff]
    %v2684 = vld [vmem:[#allocation4 + $0x1db0] sm:$0xff]
    %v2685 = vld [vmem:[#allocation4 + $0x1db8] sm:$0xff]
    %v2686 = vld [vmem:[#allocation4 + $0x1dc0] sm:$0xff]
    %v2687 = vld [vmem:[#allocation4 + $0x1dc8] sm:$0xff]
    %v2688 = vld [vmem:[#allocation4 + $0x1dd0] sm:$0xff]
    %v2689 = vld [vmem:[#allocation4 + $0x1dd8] sm:$0xff]
    %v2690 = vld [vmem:[#allocation4 + $0x1de0] sm:$0xff]
    %v2691 = vld [vmem:[#allocation4 + $0x1de8] sm:$0xff]
    %v2692 = vld [vmem:[#allocation4 + $0x1df0] sm:$0xff]
    %v2693 = vld [vmem:[#allocation4 + $0x1df8] sm:$0xff]
    %v2694 = vld [vmem:[#allocation4 + $0x1e00] sm:$0xff]
    %v2695 = vld [vmem:[#allocation4 + $0x1e08] sm:$0xff]
    %v2696 = vld [vmem:[#allocation4 + $0x1e10] sm:$0xff]
    %v2697 = vld [vmem:[#allocation4 + $0x1e18] sm:$0xff]
    %v2698 = vld [vmem:[#allocation4 + $0x1e20] sm:$0xff]
    %v2699 = vld [vmem:[#allocation4 + $0x1e28] sm:$0xff]
    %v2700 = vld [vmem:[#allocation4 + $0x1e30] sm:$0xff]
    %v2701 = vld [vmem:[#allocation4 + $0x1e38] sm:$0xff]
    %v2702 = vld [vmem:[#allocation4 + $0x1e40] sm:$0xff]
    %v2703 = vld [vmem:[#allocation4 + $0x1e48] sm:$0xff]
    %v2704 = vld [vmem:[#allocation4 + $0x1e50] sm:$0xff]
    %v2705 = vld [vmem:[#allocation4 + $0x1e58] sm:$0xff]
    %v2706 = vld [vmem:[#allocation4 + $0x1e60] sm:$0xff]
    %v2707 = vld [vmem:[#allocation4 + $0x1e68] sm:$0xff]
    %v2708 = vld [vmem:[#allocation4 + $0x1e70] sm:$0xff]
    %v2709 = vld [vmem:[#allocation4 + $0x1e78] sm:$0xff]
    %v2710 = vld [vmem:[#allocation4 + $0x1e80] sm:$0xff]
    %v2711 = vld [vmem:[#allocation4 + $0x1e88] sm:$0xff]
    %v2712 = vld [vmem:[#allocation4 + $0x1e90] sm:$0xff]
    %v2713 = vld [vmem:[#allocation4 + $0x1e98] sm:$0xff]
    %v2714 = vld [vmem:[#allocation4 + $0x1ea0] sm:$0xff]
    %v2715 = vld [vmem:[#allocation4 + $0x1ea8] sm:$0xff]
    %v2716 = vld [vmem:[#allocation4 + $0x1eb0] sm:$0xff]
    %v2717 = vld [vmem:[#allocation4 + $0x1eb8] sm:$0xff]
    %v2718 = vld [vmem:[#allocation4 + $0x1ec0] sm:$0xff]
    %v2719 = vld [vmem:[#allocation4 + $0x1ec8] sm:$0xff]
    %v2720 = vld [vmem:[#allocation4 + $0x1ed0] sm:$0xff]
    %v2721 = vld [vmem:[#allocation4 + $0x1ed8] sm:$0xff]
    %v2722 = vld [vmem:[#allocation4 + $0x1ee0] sm:$0xff]
    %v2723 = vld [vmem:[#allocation4 + $0x1ee8] sm:$0xff]
    %v2724 = vld [vmem:[#allocation4 + $0x1ef0] sm:$0xff]
    %v2725 = vld [vmem:[#allocation4 + $0x1ef8] sm:$0xff]
    %v2726 = vld [vmem:[#allocation4 + $0x1f00] sm:$0xff]
    %v2727 = vld [vmem:[#allocation4 + $0x1f08] sm:$0xff]
    %v2728 = vld [vmem:[#allocation4 + $0x1f10] sm:$0xff]
    %v2729 = vld [vmem:[#allocation4 + $0x1f18] sm:$0xff]
    %v2730 = vld [vmem:[#allocation4 + $0x1f20] sm:$0xff]
    %v2731 = vld [vmem:[#allocation4 + $0x1f28] sm:$0xff]
    %v2732 = vld [vmem:[#allocation4 + $0x1f30] sm:$0xff]
    %v2733 = vld [vmem:[#allocation4 + $0x1f38] sm:$0xff]
    %v2734 = vld [vmem:[#allocation4 + $0x1f40] sm:$0xff]
    %v2735 = vld [vmem:[#allocation4 + $0x1f48] sm:$0xff]
    %v2736 = vld [vmem:[#allocation4 + $0x1f50] sm:$0xff]
    %v2737 = vld [vmem:[#allocation4 + $0x1f58] sm:$0xff]
    %v2738 = vld [vmem:[#allocation4 + $0x1f60] sm:$0xff]
    %v2739 = vld [vmem:[#allocation4 + $0x1f68] sm:$0xff]
    %v2740 = vld [vmem:[#allocation4 + $0x1f70] sm:$0xff]
    %v2741 = vld [vmem:[#allocation4 + $0x1f78] sm:$0xff]
    %v2742 = vld [vmem:[#allocation4 + $0x1f80] sm:$0xff]
    %v2743 = vld [vmem:[#allocation4 + $0x1f88] sm:$0xff]
    %v2744 = vld [vmem:[#allocation4 + $0x1f90] sm:$0xff]
    %v2745 = vld [vmem:[#allocation4 + $0x1f98] sm:$0xff]
    %v2746 = vld [vmem:[#allocation4 + $0x1fa0] sm:$0xff]
    %v2747 = vld [vmem:[#allocation4 + $0x1fa8] sm:$0xff]
    %v2748 = vld [vmem:[#allocation4 + $0x1fb0] sm:$0xff]
    %v2749 = vld [vmem:[#allocation4 + $0x1fb8] sm:$0xff]
    %v2750 = vld [vmem:[#allocation4 + $0x1fc0] sm:$0xff]
    %v2751 = vld [vmem:[#allocation4 + $0x1fc8] sm:$0xff]
    %v2752 = vld [vmem:[#allocation4 + $0x1fd0] sm:$0xff]
    %v2753 = vld [vmem:[#allocation4 + $0x1fd8] sm:$0xff]
    %v2754 = vld [vmem:[#allocation4 + $0x1fe0] sm:$0xff]
    %v2755 = vld [vmem:[#allocation4 + $0x1fe8] sm:$0xff]
    %v2756 = vld [vmem:[#allocation4 + $0x1ff0] sm:$0xff]
    %v2757 = vld [vmem:[#allocation4 + $0x1ff8] sm:$0xff]
    %v2758 = vld [vmem:[#allocation13] sm:$0xff]
    %v2759 = vld [vmem:[#allocation13 + $0x8] sm:$0xff]
    %v2762 = vlaneseq
    %v2763 = vshrl.u32 %v2762, 7
    %v2764 = vsub.s32 0, %v2763
    %v2765 = vrot.slane %v2758, %v2764
    %v2766 = vlaneseq
    %v2767 = vshrl.u32 %v2766, 7
    %v2768 = vsub.s32 1, %v2767
    %v2769 = vrot.slane %v2758, %v2768
    %v2770 = vlaneseq
    %v2771 = vshrl.u32 %v2770, 7
    %v2772 = vsub.s32 2, %v2771
    %v2773 = vrot.slane %v2758, %v2772
    %v2774 = vlaneseq
    %v2775 = vshrl.u32 %v2774, 7
    %v2776 = vsub.s32 3, %v2775
    %v2777 = vrot.slane %v2758, %v2776
    %v2778 = vlaneseq
    %v2779 = vshrl.u32 %v2778, 7
    %v2780 = vsub.s32 4, %v2779
    %v2781 = vrot.slane %v2758, %v2780
    %v2782 = vlaneseq
    %v2783 = vshrl.u32 %v2782, 7
    %v2784 = vsub.s32 5, %v2783
    %v2785 = vrot.slane %v2758, %v2784
    %v2786 = vlaneseq
    %v2787 = vshrl.u32 %v2786, 7
    %v2788 = vsub.s32 6, %v2787
    %v2789 = vrot.slane %v2758, %v2788
    %v2790 = vlaneseq
    %v2791 = vshrl.u32 %v2790, 7
    %v2792 = vsub.s32 7, %v2791
    %v2793 = vrot.slane %v2758, %v2792
    %v2794 = vlaneseq
    %v2795 = vshrl.u32 %v2794, 7
    %v2796 = vsub.s32 0, %v2795
    %v2797 = vrot.slane %v2759, %v2796
    %v2798 = vlaneseq
    %v2799 = vshrl.u32 %v2798, 7
    %v2800 = vsub.s32 1, %v2799
    %v2801 = vrot.slane %v2759, %v2800
    %v2802 = vlaneseq
    %v2803 = vshrl.u32 %v2802, 7
    %v2804 = vsub.s32 2, %v2803
    %v2805 = vrot.slane %v2759, %v2804
    %v2806 = vlaneseq
    %v2807 = vshrl.u32 %v2806, 7
    %v2808 = vsub.s32 3, %v2807
    %v2809 = vrot.slane %v2759, %v2808
    %v2810 = vlaneseq
    %v2811 = vshrl.u32 %v2810, 7
    %v2812 = vsub.s32 4, %v2811
    %v2813 = vrot.slane %v2759, %v2812
    %v2814 = vlaneseq
    %v2815 = vshrl.u32 %v2814, 7
    %v2816 = vsub.s32 5, %v2815
    %v2817 = vrot.slane %v2759, %v2816
    %v2818 = vlaneseq
    %v2819 = vshrl.u32 %v2818, 7
    %v2820 = vsub.s32 6, %v2819
    %v2821 = vrot.slane %v2759, %v2820
    %v2822 = vlaneseq
    %v2823 = vshrl.u32 %v2822, 7
    %v2824 = vsub.s32 7, %v2823
    %v2825 = vrot.slane %v2759, %v2824
    %2842 = vmatprep.subr.bf16.mxu0 %v1735
    %2843 = vmatpush1.bf16.msra.mxu0 %v1734
    %2844 = vmatprep.subr.bf16.mxu0 %v1751
    %2845 = vmatpush1.bf16.msra.mxu0 %v1750
    %2846 = vmatprep.subr.bf16.mxu0 %v1767
    %2847 = vmatpush1.bf16.msra.mxu0 %v1766
    %2848 = vmatprep.subr.bf16.mxu0 %v1783
    %2849 = vmatpush1.bf16.msra.mxu0 %v1782
    %2850 = vmatprep.subr.bf16.mxu0 %v1799
    %2851 = vmatpush1.bf16.msra.mxu0 %v1798
    %2852 = vmatprep.subr.bf16.mxu0 %v1815
    %2853 = vmatpush1.bf16.msra.mxu0 %v1814
    %2854 = vmatprep.subr.bf16.mxu0 %v1831
    %2855 = vmatpush1.bf16.msra.mxu0 %v1830
    %2856 = vmatprep.subr.bf16.mxu0 %v1847
    %2857 = vmatpush1.bf16.msra.mxu0 %v1846
    %2858 = vmatprep.subr.bf16.mxu0 %v1863
    %2859 = vmatpush1.bf16.msra.mxu0 %v1862
    %2860 = vmatprep.subr.bf16.mxu0 %v1879
    %2861 = vmatpush1.bf16.msra.mxu0 %v1878
    %2862 = vmatprep.subr.bf16.mxu0 %v1895
    %2863 = vmatpush1.bf16.msra.mxu0 %v1894
    %2864 = vmatprep.subr.bf16.mxu0 %v1911
    %2865 = vmatpush1.bf16.msra.mxu0 %v1910
    %2866 = vmatprep.subr.bf16.mxu0 %v1927
    %2867 = vmatpush1.bf16.msra.mxu0 %v1926
    %2868 = vmatprep.subr.bf16.mxu0 %v1943
    %2869 = vmatpush1.bf16.msra.mxu0 %v1942
    %2870 = vmatprep.subr.bf16.mxu0 %v1959
    %2871 = vmatpush1.bf16.msra.mxu0 %v1958
    %2872 = vmatprep.subr.bf16.mxu0 %v1975
    %2873 = vmatpush1.bf16.msra.mxu0 %v1974
    %2874 = vmatprep.mubr.bf16.mxu0 %v1727
    %2875 = vmatmul.mubr.bf16.gmra.mrb[0].mxu0 %v1726
    %v2876 = vpop.f32.mrb[0].mxu0
    %v2877 = vadd.f32 %v2765, %v2876
    %v2878 = vpop.f32.mrb[0].mxu0
    %v2879 = vadd.f32 %v2769, %v2878
    %v2880 = vpop.f32.mrb[0].mxu0
    %v2881 = vpop.f32.mrb[0].mxu0
    %2882 = vdwg.mxu0
    %2883 = vmatprep.subr.bf16.mxu0 %v1991
    %2884 = vmatpush1.bf16.msra.mxu0 %v1990
    %2885 = vmatprep.subr.bf16.mxu0 %v2007
    %2886 = vmatpush1.bf16.msra.mxu0 %v2006
    %2887 = vmatprep.subr.bf16.mxu0 %v2023
    %2888 = vmatpush1.bf16.msra.mxu0 %v2022
    %2889 = vmatprep.subr.bf16.mxu0 %v2039
    %2890 = vmatpush1.bf16.msra.mxu0 %v2038
    %2891 = vmatprep.subr.bf16.mxu0 %v2055
    %2892 = vmatpush1.bf16.msra.mxu0 %v2054
    %2893 = vmatprep.subr.bf16.mxu0 %v2071
    %2894 = vmatpush1.bf16.msra.mxu0 %v2070
    %2895 = vmatprep.subr.bf16.mxu0 %v2087
    %2896 = vmatpush1.bf16.msra.mxu0 %v2086
    %2897 = vmatprep.subr.bf16.mxu0 %v2103
    %2898 = vmatpush1.bf16.msra.mxu0 %v2102
    %2899 = vmatprep.subr.bf16.mxu0 %v2119
    %2900 = vmatpush1.bf16.msra.mxu0 %v2118
    %2901 = vmatprep.subr.bf16.mxu0 %v2135
    %2902 = vmatpush1.bf16.msra.mxu0 %v2134
    %2903 = vmatprep.subr.bf16.mxu0 %v2151
    %2904 = vmatpush1.bf16.msra.mxu0 %v2150
    %2905 = vmatprep.subr.bf16.mxu0 %v2167
    %2906 = vmatpush1.bf16.msra.mxu0 %v2166
    %2907 = vmatprep.subr.bf16.mxu0 %v2183
    %2908 = vmatpush1.bf16.msra.mxu0 %v2182
    %2909 = vmatprep.subr.bf16.mxu0 %v2199
    %2910 = vmatpush1.bf16.msra.mxu0 %v2198
    %2911 = vmatprep.subr.bf16.mxu0 %v2215
    %2912 = vmatpush1.bf16.msra.mxu0 %v2214
    %2913 = vmatprep.subr.bf16.mxu0 %v2231
    %2914 = vmatpush1.bf16.msra.mxu0 %v2230
    %2915 = vmatprep.mubr.bf16.mxu0 %v1729
    %2916 = vmatmul.mubr.bf16.gmra.mrb[0].mxu0 %v1728
    %v2917 = vpop.f32.mrb[0].mxu0
    %v2918 = vadd.f32 %v2877, %v2917
    %v2919 = vpop.f32.mrb[0].mxu0
    %v2920 = vadd.f32 %v2879, %v2919
    %v2921 = vpop.f32.mrb[0].mxu0
    %v2922 = vpop.f32.mrb[0].mxu0
    %2923 = vdwg.mxu0
    %2924 = vmatprep.subr.bf16.mxu0 %v2247
    %2925 = vmatpush1.bf16.msra.mxu0 %v2246
    %2926 = vmatprep.subr.bf16.mxu0 %v2263
    %2927 = vmatpush1.bf16.msra.mxu0 %v2262
    %2928 = vmatprep.subr.bf16.mxu0 %v2279
    %2929 = vmatpush1.bf16.msra.mxu0 %v2278
    %2930 = vmatprep.subr.bf16.mxu0 %v2295
    %2931 = vmatpush1.bf16.msra.mxu0 %v2294
    %2932 = vmatprep.subr.bf16.mxu0 %v2311
    %2933 = vmatpush1.bf16.msra.mxu0 %v2310
    %2934 = vmatprep.subr.bf16.mxu0 %v2327
    %2935 = vmatpush1.bf16.msra.mxu0 %v2326
    %2936 = vmatprep.subr.bf16.mxu0 %v2343
    %2937 = vmatpush1.bf16.msra.mxu0 %v2342
    %2938 = vmatprep.subr.bf16.mxu0 %v2359
    %2939 = vmatpush1.bf16.msra.mxu0 %v2358
    %2940 = vmatprep.subr.bf16.mxu0 %v2375
    %2941 = vmatpush1.bf16.msra.mxu0 %v2374
    %2942 = vmatprep.subr.bf16.mxu0 %v2391
    %2943 = vmatpush1.bf16.msra.mxu0 %v2390
    %2944 = vmatprep.subr.bf16.mxu0 %v2407
    %2945 = vmatpush1.bf16.msra.mxu0 %v2406
    %2946 = vmatprep.subr.bf16.mxu0 %v2423
    %2947 = vmatpush1.bf16.msra.mxu0 %v2422
    %2948 = vmatprep.subr.bf16.mxu0 %v2439
    %2949 = vmatpush1.bf16.msra.mxu0 %v2438
    %2950 = vmatprep.subr.bf16.mxu0 %v2455
    %2951 = vmatpush1.bf16.msra.mxu0 %v2454
    %2952 = vmatprep.subr.bf16.mxu0 %v2471
    %2953 = vmatpush1.bf16.msra.mxu0 %v2470
    %2954 = vmatprep.subr.bf16.mxu0 %v2487
    %2955 = vmatpush1.bf16.msra.mxu0 %v2486
    %2956 = vmatprep.mubr.bf16.mxu0 %v1731
    %2957 = vmatmul.mubr.bf16.gmra.mrb[0].mxu0 %v1730
    %v2958 = vpop.f32.mrb[0].mxu0
    %v2959 = vadd.f32 %v2918, %v2958
    %v2960 = vpop.f32.mrb[0].mxu0
    %v2961 = vadd.f32 %v2920, %v2960
    %v2962 = vpop.f32.mrb[0].mxu0
    %v2963 = vpop.f32.mrb[0].mxu0
    %2964 = vdwg.mxu0
    %2965 = vmatprep.subr.bf16.mxu0 %v2503
    %2966 = vmatpush1.bf16.msra.mxu0 %v2502
    %2967 = vmatprep.subr.bf16.mxu0 %v2519
    %2968 = vmatpush1.bf16.msra.mxu0 %v2518
    %2969 = vmatprep.subr.bf16.mxu0 %v2535
    %2970 = vmatpush1.bf16.msra.mxu0 %v2534
    %2971 = vmatprep.subr.bf16.mxu0 %v2551
    %2972 = vmatpush1.bf16.msra.mxu0 %v2550
    %2973 = vmatprep.subr.bf16.mxu0 %v2567
    %2974 = vmatpush1.bf16.msra.mxu0 %v2566
    %2975 = vmatprep.subr.bf16.mxu0 %v2583
    %2976 = vmatpush1.bf16.msra.mxu0 %v2582
    %2977 = vmatprep.subr.bf16.mxu0 %v2599
    %2978 = vmatpush1.bf16.msra.mxu0 %v2598
    %2979 = vmatprep.subr.bf16.mxu0 %v2615
    %2980 = vmatpush1.bf16.msra.mxu0 %v2614
    %2981 = vmatprep.subr.bf16.mxu0 %v2631
    %2982 = vmatpush1.bf16.msra.mxu0 %v2630
    %2983 = vmatprep.subr.bf16.mxu0 %v2647
    %2984 = vmatpush1.bf16.msra.mxu0 %v2646
    %2985 = vmatprep.subr.bf16.mxu0 %v2663
    %2986 = vmatpush1.bf16.msra.mxu0 %v2662
    %2987 = vmatprep.subr.bf16.mxu0 %v2679
    %2988 = vmatpush1.bf16.msra.mxu0 %v2678
    %2989 = vmatprep.subr.bf16.mxu0 %v2695
    %2990 = vmatpush1.bf16.msra.mxu0 %v2694
    %2991 = vmatprep.subr.bf16.mxu0 %v2711
    %2992 = vmatpush1.bf16.msra.mxu0 %v2710
    %2993 = vmatprep.subr.bf16.mxu0 %v2727
    %2994 = vmatpush1.bf16.msra.mxu0 %v2726
    %2995 = vmatprep.subr.bf16.mxu0 %v2743
    %2996 = vmatpush1.bf16.msra.mxu0 %v2742
    %2997 = vmatprep.mubr.bf16.mxu0 %v1733
    %2998 = vmatmul.mubr.bf16.gmra.mrb[0].mxu0 %v1732
    %v2999 = vpop.f32.mrb[0].mxu0
    %v3000 = vadd.f32 %v2959, %v2999
    %v3001 = vpop.f32.mrb[0].mxu0
    %v3002 = vadd.f32 %v2961, %v3001
    %v3003 = vpop.f32.mrb[0].mxu0
    %v3004 = vpop.f32.mrb[0].mxu0
    %3005 = vdwg.mxu0
    %3006 = vmatprep.subr.bf16.mxu0 %v1737
    %3007 = vmatpush1.bf16.msra.mxu0 %v1736
    %3008 = vmatprep.subr.bf16.mxu0 %v1753
    %3009 = vmatpush1.bf16.msra.mxu0 %v1752
    %3010 = vmatprep.subr.bf16.mxu0 %v1769
    %3011 = vmatpush1.bf16.msra.mxu0 %v1768
    %3012 = vmatprep.subr.bf16.mxu0 %v1785
    %3013 = vmatpush1.bf16.msra.mxu0 %v1784
    %3014 = vmatprep.subr.bf16.mxu0 %v1801
    %3015 = vmatpush1.bf16.msra.mxu0 %v1800
    %3016 = vmatprep.subr.bf16.mxu0 %v1817
    %3017 = vmatpush1.bf16.msra.mxu0 %v1816
    %3018 = vmatprep.subr.bf16.mxu0 %v1833
    %3019 = vmatpush1.bf16.msra.mxu0 %v1832
    %3020 = vmatprep.subr.bf16.mxu0 %v1849
    %3021 = vmatpush1.bf16.msra.mxu0 %v1848
    %3022 = vmatprep.subr.bf16.mxu0 %v1865
    %3023 = vmatpush1.bf16.msra.mxu0 %v1864
    %3024 = vmatprep.subr.bf16.mxu0 %v1881
    %3025 = vmatpush1.bf16.msra.mxu0 %v1880
    %3026 = vmatprep.subr.bf16.mxu0 %v1897
    %3027 = vmatpush1.bf16.msra.mxu0 %v1896
    %3028 = vmatprep.subr.bf16.mxu0 %v1913
    %3029 = vmatpush1.bf16.msra.mxu0 %v1912
    %3030 = vmatprep.subr.bf16.mxu0 %v1929
    %3031 = vmatpush1.bf16.msra.mxu0 %v1928
    %3032 = vmatprep.subr.bf16.mxu0 %v1945
    %3033 = vmatpush1.bf16.msra.mxu0 %v1944
    %3034 = vmatprep.subr.bf16.mxu0 %v1961
    %3035 = vmatpush1.bf16.msra.mxu0 %v1960
    %3036 = vmatprep.subr.bf16.mxu0 %v1977
    %3037 = vmatpush1.bf16.msra.mxu0 %v1976
    %3038 = vmatprep.mubr.bf16.mxu0 %v1727
    %3039 = vmatmul.mubr.bf16.gmra.mrb[0].mxu0 %v1726
    %v3040 = vpop.f32.mrb[0].mxu0
    %v3041 = vadd.f32 %v2773, %v3040
    %v3042 = vpop.f32.mrb[0].mxu0
    %v3043 = vadd.f32 %v2777, %v3042
    %v3044 = vpop.f32.mrb[0].mxu0
    %v3045 = vpop.f32.mrb[0].mxu0
    %3046 = vdwg.mxu0
    %3047 = vmatprep.subr.bf16.mxu0 %v1993
    %3048 = vmatpush1.bf16.msra.mxu0 %v1992
    %3049 = vmatprep.subr.bf16.mxu0 %v2009
    %3050 = vmatpush1.bf16.msra.mxu0 %v2008
    %3051 = vmatprep.subr.bf16.mxu0 %v2025
    %3052 = vmatpush1.bf16.msra.mxu0 %v2024
    %3053 = vmatprep.subr.bf16.mxu0 %v2041
    %3054 = vmatpush1.bf16.msra.mxu0 %v2040
    %3055 = vmatprep.subr.bf16.mxu0 %v2057
    %3056 = vmatpush1.bf16.msra.mxu0 %v2056
    %3057 = vmatprep.subr.bf16.mxu0 %v2073
    %3058 = vmatpush1.bf16.msra.mxu0 %v2072
    %3059 = vmatprep.subr.bf16.mxu0 %v2089
    %3060 = vmatpush1.bf16.msra.mxu0 %v2088
    %3061 = vmatprep.subr.bf16.mxu0 %v2105
    %3062 = vmatpush1.bf16.msra.mxu0 %v2104
    %3063 = vmatprep.subr.bf16.mxu0 %v2121
    %3064 = vmatpush1.bf16.msra.mxu0 %v2120
    %3065 = vmatprep.subr.bf16.mxu0 %v2137
    %3066 = vmatpush1.bf16.msra.mxu0 %v2136
    %3067 = vmatprep.subr.bf16.mxu0 %v2153
    %3068 = vmatpush1.bf16.msra.mxu0 %v2152
    %3069 = vmatprep.subr.bf16.mxu0 %v2169
    %3070 = vmatpush1.bf16.msra.mxu0 %v2168
    %3071 = vmatprep.subr.bf16.mxu0 %v2185
    %3072 = vmatpush1.bf16.msra.mxu0 %v2184
    %3073 = vmatprep.subr.bf16.mxu0 %v2201
    %3074 = vmatpush1.bf16.msra.mxu0 %v2200
    %3075 = vmatprep.subr.bf16.mxu0 %v2217
    %3076 = vmatpush1.bf16.msra.mxu0 %v2216
    %3077 = vmatprep.subr.bf16.mxu0 %v2233
    %3078 = vmatpush1.bf16.msra.mxu0 %v2232
    %3079 = vmatprep.mubr.bf16.mxu0 %v1729
    %3080 = vmatmul.mubr.bf16.gmra.mrb[0].mxu0 %v1728
    %v3081 = vpop.f32.mrb[0].mxu0
    %v3082 = vadd.f32 %v3041, %v3081
    %v3083 = vpop.f32.mrb[0].mxu0
    %v3084 = vadd.f32 %v3043, %v3083
    %v3085 = vpop.f32.mrb[0].mxu0
    %v3086 = vpop.f32.mrb[0].mxu0
    %3087 = vdwg.mxu0
    %3088 = vmatprep.subr.bf16.mxu0 %v2249
    %3089 = vmatpush1.bf16.msra.mxu0 %v2248
    %3090 = vmatprep.subr.bf16.mxu0 %v2265
    %3091 = vmatpush1.bf16.msra.mxu0 %v2264
    %3092 = vmatprep.subr.bf16.mxu0 %v2281
    %3093 = vmatpush1.bf16.msra.mxu0 %v2280
    %3094 = vmatprep.subr.bf16.mxu0 %v2297
    %3095 = vmatpush1.bf16.msra.mxu0 %v2296
    %3096 = vmatprep.subr.bf16.mxu0 %v2313
    %3097 = vmatpush1.bf16.msra.mxu0 %v2312
    %3098 = vmatprep.subr.bf16.mxu0 %v2329
    %3099 = vmatpush1.bf16.msra.mxu0 %v2328
    %3100 = vmatprep.subr.bf16.mxu0 %v2345
    %3101 = vmatpush1.bf16.msra.mxu0 %v2344
    %3102 = vmatprep.subr.bf16.mxu0 %v2361
    %3103 = vmatpush1.bf16.msra.mxu0 %v2360
    %3104 = vmatprep.subr.bf16.mxu0 %v2377
    %3105 = vmatpush1.bf16.msra.mxu0 %v2376
    %3106 = vmatprep.subr.bf16.mxu0 %v2393
    %3107 = vmatpush1.bf16.msra.mxu0 %v2392
    %3108 = vmatprep.subr.bf16.mxu0 %v2409
    %3109 = vmatpush1.bf16.msra.mxu0 %v2408
    %3110 = vmatprep.subr.bf16.mxu0 %v2425
    %3111 = vmatpush1.bf16.msra.mxu0 %v2424
    %3112 = vmatprep.subr.bf16.mxu0 %v2441
    %3113 = vmatpush1.bf16.msra.mxu0 %v2440
    %3114 = vmatprep.subr.bf16.mxu0 %v2457
    %3115 = vmatpush1.bf16.msra.mxu0 %v2456
    %3116 = vmatprep.subr.bf16.mxu0 %v2473
    %3117 = vmatpush1.bf16.msra.mxu0 %v2472
    %3118 = vmatprep.subr.bf16.mxu0 %v2489
    %3119 = vmatpush1.bf16.msra.mxu0 %v2488
    %3120 = vmatprep.mubr.bf16.mxu0 %v1731
    %3121 = vmatmul.mubr.bf16.gmra.mrb[0].mxu0 %v1730
    %v3122 = vpop.f32.mrb[0].mxu0
    %v3123 = vadd.f32 %v3082, %v3122
    %v3124 = vpop.f32.mrb[0].mxu0
    %v3125 = vadd.f32 %v3084, %v3124
    %v3126 = vpop.f32.mrb[0].mxu0
    %v3127 = vpop.f32.mrb[0].mxu0
    %3128 = vdwg.mxu0
    %3129 = vmatprep.subr.bf16.mxu0 %v2505
    %3130 = vmatpush1.bf16.msra.mxu0 %v2504
    %3131 = vmatprep.subr.bf16.mxu0 %v2521
    %3132 = vmatpush1.bf16.msra.mxu0 %v2520
    %3133 = vmatprep.subr.bf16.mxu0 %v2537
    %3134 = vmatpush1.bf16.msra.mxu0 %v2536
    %3135 = vmatprep.subr.bf16.mxu0 %v2553
    %3136 = vmatpush1.bf16.msra.mxu0 %v2552
    %3137 = vmatprep.subr.bf16.mxu0 %v2569
    %3138 = vmatpush1.bf16.msra.mxu0 %v2568
    %3139 = vmatprep.subr.bf16.mxu0 %v2585
    %3140 = vmatpush1.bf16.msra.mxu0 %v2584
    %3141 = vmatprep.subr.bf16.mxu0 %v2601
    %3142 = vmatpush1.bf16.msra.mxu0 %v2600
    %3143 = vmatprep.subr.bf16.mxu0 %v2617
    %3144 = vmatpush1.bf16.msra.mxu0 %v2616
    %3145 = vmatprep.subr.bf16.mxu0 %v2633
    %3146 = vmatpush1.bf16.msra.mxu0 %v2632
    %3147 = vmatprep.subr.bf16.mxu0 %v2649
    %3148 = vmatpush1.bf16.msra.mxu0 %v2648
    %3149 = vmatprep.subr.bf16.mxu0 %v2665
    %3150 = vmatpush1.bf16.msra.mxu0 %v2664
    %3151 = vmatprep.subr.bf16.mxu0 %v2681
    %3152 = vmatpush1.bf16.msra.mxu0 %v2680
    %3153 = vmatprep.subr.bf16.mxu0 %v2697
    %3154 = vmatpush1.bf16.msra.mxu0 %v2696
    %3155 = vmatprep.subr.bf16.mxu0 %v2713
    %3156 = vmatpush1.bf16.msra.mxu0 %v2712
    %3157 = vmatprep.subr.bf16.mxu0 %v2729
    %3158 = vmatpush1.bf16.msra.mxu0 %v2728
    %3159 = vmatprep.subr.bf16.mxu0 %v2745
    %3160 = vmatpush1.bf16.msra.mxu0 %v2744
    %3161 = vmatprep.mubr.bf16.mxu0 %v1733
    %3162 = vmatmul.mubr.bf16.gmra.mrb[0].mxu0 %v1732
    %v3163 = vpop.f32.mrb[0].mxu0
    %v3164 = vadd.f32 %v3123, %v3163
    %v3165 = vpop.f32.mrb[0].mxu0
    %v3166 = vadd.f32 %v3125, %v3165
    %v3167 = vpop.f32.mrb[0].mxu0
    %v3168 = vpop.f32.mrb[0].mxu0
    %3169 = vdwg.mxu0
    %3170 = vmatprep.subr.bf16.mxu0 %v1739
    %3171 = vmatpush1.bf16.msra.mxu0 %v1738
    %3172 = vmatprep.subr.bf16.mxu0 %v1755
    %3173 = vmatpush1.bf16.msra.mxu0 %v1754
    %3174 = vmatprep.subr.bf16.mxu0 %v1771
    %3175 = vmatpush1.bf16.msra.mxu0 %v1770
    %3176 = vmatprep.subr.bf16.mxu0 %v1787
    %3177 = vmatpush1.bf16.msra.mxu0 %v1786
    %3178 = vmatprep.subr.bf16.mxu0 %v1803
    %3179 = vmatpush1.bf16.msra.mxu0 %v1802
    %3180 = vmatprep.subr.bf16.mxu0 %v1819
    %3181 = vmatpush1.bf16.msra.mxu0 %v1818
    %3182 = vmatprep.subr.bf16.mxu0 %v1835
    %3183 = vmatpush1.bf16.msra.mxu0 %v1834
    %3184 = vmatprep.subr.bf16.mxu0 %v1851
    %3185 = vmatpush1.bf16.msra.mxu0 %v1850
    %3186 = vmatprep.subr.bf16.mxu0 %v1867
    %3187 = vmatpush1.bf16.msra.mxu0 %v1866
    %3188 = vmatprep.subr.bf16.mxu0 %v1883
    %3189 = vmatpush1.bf16.msra.mxu0 %v1882
    %3190 = vmatprep.subr.bf16.mxu0 %v1899
    %3191 = vmatpush1.bf16.msra.mxu0 %v1898
    %3192 = vmatprep.subr.bf16.mxu0 %v1915
    %3193 = vmatpush1.bf16.msra.mxu0 %v1914
    %3194 = vmatprep.subr.bf16.mxu0 %v1931
    %3195 = vmatpush1.bf16.msra.mxu0 %v1930
    %3196 = vmatprep.subr.bf16.mxu0 %v1947
    %3197 = vmatpush1.bf16.msra.mxu0 %v1946
    %3198 = vmatprep.subr.bf16.mxu0 %v1963
    %3199 = vmatpush1.bf16.msra.mxu0 %v1962
    %3200 = vmatprep.subr.bf16.mxu0 %v1979
    %3201 = vmatpush1.bf16.msra.mxu0 %v1978
    %3202 = vmatprep.mubr.bf16.mxu0 %v1727
    %3203 = vmatmul.mubr.bf16.gmra.mrb[0].mxu0 %v1726
    %v3204 = vpop.f32.mrb[0].mxu0
    %v3205 = vadd.f32 %v2781, %v3204
    %v3206 = vpop.f32.mrb[0].mxu0
    %v3207 = vadd.f32 %v2785, %v3206
    %v3208 = vpop.f32.mrb[0].mxu0
    %v3209 = vpop.f32.mrb[0].mxu0
    %3210 = vdwg.mxu0
    %3211 = vmatprep.subr.bf16.mxu0 %v1995
    %3212 = vmatpush1.bf16.msra.mxu0 %v1994
    %3213 = vmatprep.subr.bf16.mxu0 %v2011
    %3214 = vmatpush1.bf16.msra.mxu0 %v2010
    %3215 = vmatprep.subr.bf16.mxu0 %v2027
    %3216 = vmatpush1.bf16.msra.mxu0 %v2026
    %3217 = vmatprep.subr.bf16.mxu0 %v2043
    %3218 = vmatpush1.bf16.msra.mxu0 %v2042
    %3219 = vmatprep.subr.bf16.mxu0 %v2059
    %3220 = vmatpush1.bf16.msra.mxu0 %v2058
    %3221 = vmatprep.subr.bf16.mxu0 %v2075
    %3222 = vmatpush1.bf16.msra.mxu0 %v2074
    %3223 = vmatprep.subr.bf16.mxu0 %v2091
    %3224 = vmatpush1.bf16.msra.mxu0 %v2090
    %3225 = vmatprep.subr.bf16.mxu0 %v2107
    %3226 = vmatpush1.bf16.msra.mxu0 %v2106
    %3227 = vmatprep.subr.bf16.mxu0 %v2123
    %3228 = vmatpush1.bf16.msra.mxu0 %v2122
    %3229 = vmatprep.subr.bf16.mxu0 %v2139
    %3230 = vmatpush1.bf16.msra.mxu0 %v2138
    %3231 = vmatprep.subr.bf16.mxu0 %v2155
    %3232 = vmatpush1.bf16.msra.mxu0 %v2154
    %3233 = vmatprep.subr.bf16.mxu0 %v2171
    %3234 = vmatpush1.bf16.msra.mxu0 %v2170
    %3235 = vmatprep.subr.bf16.mxu0 %v2187
    %3236 = vmatpush1.bf16.msra.mxu0 %v2186
    %3237 = vmatprep.subr.bf16.mxu0 %v2203
    %3238 = vmatpush1.bf16.msra.mxu0 %v2202
    %3239 = vmatprep.subr.bf16.mxu0 %v2219
    %3240 = vmatpush1.bf16.msra.mxu0 %v2218
    %3241 = vmatprep.subr.bf16.mxu0 %v2235
    %3242 = vmatpush1.bf16.msra.mxu0 %v2234
    %3243 = vmatprep.mubr.bf16.mxu0 %v1729
    %3244 = vmatmul.mubr.bf16.gmra.mrb[0].mxu0 %v1728
    %v3245 = vpop.f32.mrb[0].mxu0
    %v3246 = vadd.f32 %v3205, %v3245
    %v3247 = vpop.f32.mrb[0].mxu0
    %v3248 = vadd.f32 %v3207, %v3247
    %v3249 = vpop.f32.mrb[0].mxu0
    %v3250 = vpop.f32.mrb[0].mxu0
    %3251 = vdwg.mxu0
    %3252 = vmatprep.subr.bf16.mxu0 %v2251
    %3253 = vmatpush1.bf16.msra.mxu0 %v2250
    %3254 = vmatprep.subr.bf16.mxu0 %v2267
    %3255 = vmatpush1.bf16.msra.mxu0 %v2266
    %3256 = vmatprep.subr.bf16.mxu0 %v2283
    %3257 = vmatpush1.bf16.msra.mxu0 %v2282
    %3258 = vmatprep.subr.bf16.mxu0 %v2299
    %3259 = vmatpush1.bf16.msra.mxu0 %v2298
    %3260 = vmatprep.subr.bf16.mxu0 %v2315
    %3261 = vmatpush1.bf16.msra.mxu0 %v2314
    %3262 = vmatprep.subr.bf16.mxu0 %v2331
    %3263 = vmatpush1.bf16.msra.mxu0 %v2330
    %3264 = vmatprep.subr.bf16.mxu0 %v2347
    %3265 = vmatpush1.bf16.msra.mxu0 %v2346
    %3266 = vmatprep.subr.bf16.mxu0 %v2363
    %3267 = vmatpush1.bf16.msra.mxu0 %v2362
    %3268 = vmatprep.subr.bf16.mxu0 %v2379
    %3269 = vmatpush1.bf16.msra.mxu0 %v2378
    %3270 = vmatprep.subr.bf16.mxu0 %v2395
    %3271 = vmatpush1.bf16.msra.mxu0 %v2394
    %3272 = vmatprep.subr.bf16.mxu0 %v2411
    %3273 = vmatpush1.bf16.msra.mxu0 %v2410
    %3274 = vmatprep.subr.bf16.mxu0 %v2427
    %3275 = vmatpush1.bf16.msra.mxu0 %v2426
    %3276 = vmatprep.subr.bf16.mxu0 %v2443
    %3277 = vmatpush1.bf16.msra.mxu0 %v2442
    %3278 = vmatprep.subr.bf16.mxu0 %v2459
    %3279 = vmatpush1.bf16.msra.mxu0 %v2458
    %3280 = vmatprep.subr.bf16.mxu0 %v2475
    %3281 = vmatpush1.bf16.msra.mxu0 %v2474
    %3282 = vmatprep.subr.bf16.mxu0 %v2491
    %3283 = vmatpush1.bf16.msra.mxu0 %v2490
    %3284 = vmatprep.mubr.bf16.mxu0 %v1731
    %3285 = vmatmul.mubr.bf16.gmra.mrb[0].mxu0 %v1730
    %v3286 = vpop.f32.mrb[0].mxu0
    %v3287 = vadd.f32 %v3246, %v3286
    %v3288 = vpop.f32.mrb[0].mxu0
    %v3289 = vadd.f32 %v3248, %v3288
    %v3290 = vpop.f32.mrb[0].mxu0
    %v3291 = vpop.f32.mrb[0].mxu0
    %3292 = vdwg.mxu0
    %3293 = vmatprep.subr.bf16.mxu0 %v2507
    %3294 = vmatpush1.bf16.msra.mxu0 %v2506
    %3295 = vmatprep.subr.bf16.mxu0 %v2523
    %3296 = vmatpush1.bf16.msra.mxu0 %v2522
    %3297 = vmatprep.subr.bf16.mxu0 %v2539
    %3298 = vmatpush1.bf16.msra.mxu0 %v2538
    %3299 = vmatprep.subr.bf16.mxu0 %v2555
    %3300 = vmatpush1.bf16.msra.mxu0 %v2554
    %3301 = vmatprep.subr.bf16.mxu0 %v2571
    %3302 = vmatpush1.bf16.msra.mxu0 %v2570
    %3303 = vmatprep.subr.bf16.mxu0 %v2587
    %3304 = vmatpush1.bf16.msra.mxu0 %v2586
    %3305 = vmatprep.subr.bf16.mxu0 %v2603
    %3306 = vmatpush1.bf16.msra.mxu0 %v2602
    %3307 = vmatprep.subr.bf16.mxu0 %v2619
    %3308 = vmatpush1.bf16.msra.mxu0 %v2618
    %3309 = vmatprep.subr.bf16.mxu0 %v2635
    %3310 = vmatpush1.bf16.msra.mxu0 %v2634
    %3311 = vmatprep.subr.bf16.mxu0 %v2651
    %3312 = vmatpush1.bf16.msra.mxu0 %v2650
    %3313 = vmatprep.subr.bf16.mxu0 %v2667
    %3314 = vmatpush1.bf16.msra.mxu0 %v2666
    %3315 = vmatprep.subr.bf16.mxu0 %v2683
    %3316 = vmatpush1.bf16.msra.mxu0 %v2682
    %3317 = vmatprep.subr.bf16.mxu0 %v2699
    %3318 = vmatpush1.bf16.msra.mxu0 %v2698
    %3319 = vmatprep.subr.bf16.mxu0 %v2715
    %3320 = vmatpush1.bf16.msra.mxu0 %v2714
    %3321 = vmatprep.subr.bf16.mxu0 %v2731
    %3322 = vmatpush1.bf16.msra.mxu0 %v2730
    %3323 = vmatprep.subr.bf16.mxu0 %v2747
    %3324 = vmatpush1.bf16.msra.mxu0 %v2746
    %3325 = vmatprep.mubr.bf16.mxu0 %v1733
    %3326 = vmatmul.mubr.bf16.gmra.mrb[0].mxu0 %v1732
    %v3327 = vpop.f32.mrb[0].mxu0
    %v3328 = vadd.f32 %v3287, %v3327
    %v3329 = vpop.f32.mrb[0].mxu0
    %v3330 = vadd.f32 %v3289, %v3329
    %v3331 = vpop.f32.mrb[0].mxu0
    %v3332 = vpop.f32.mrb[0].mxu0
    %3333 = vdwg.mxu0
    %3334 = vmatprep.subr.bf16.mxu0 %v1741
    %3335 = vmatpush1.bf16.msra.mxu0 %v1740
    %3336 = vmatprep.subr.bf16.mxu0 %v1757
    %3337 = vmatpush1.bf16.msra.mxu0 %v1756
    %3338 = vmatprep.subr.bf16.mxu0 %v1773
    %3339 = vmatpush1.bf16.msra.mxu0 %v1772
    %3340 = vmatprep.subr.bf16.mxu0 %v1789
    %3341 = vmatpush1.bf16.msra.mxu0 %v1788
    %3342 = vmatprep.subr.bf16.mxu0 %v1805
    %3343 = vmatpush1.bf16.msra.mxu0 %v1804
    %3344 = vmatprep.subr.bf16.mxu0 %v1821
    %3345 = vmatpush1.bf16.msra.mxu0 %v1820
    %3346 = vmatprep.subr.bf16.mxu0 %v1837
    %3347 = vmatpush1.bf16.msra.mxu0 %v1836
    %3348 = vmatprep.subr.bf16.mxu0 %v1853
    %3349 = vmatpush1.bf16.msra.mxu0 %v1852
    %3350 = vmatprep.subr.bf16.mxu0 %v1869
    %3351 = vmatpush1.bf16.msra.mxu0 %v1868
    %3352 = vmatprep.subr.bf16.mxu0 %v1885
    %3353 = vmatpush1.bf16.msra.mxu0 %v1884
    %3354 = vmatprep.subr.bf16.mxu0 %v1901
    %3355 = vmatpush1.bf16.msra.mxu0 %v1900
    %3356 = vmatprep.subr.bf16.mxu0 %v1917
    %3357 = vmatpush1.bf16.msra.mxu0 %v1916
    %3358 = vmatprep.subr.bf16.mxu0 %v1933
    %3359 = vmatpush1.bf16.msra.mxu0 %v1932
    %3360 = vmatprep.subr.bf16.mxu0 %v1949
    %3361 = vmatpush1.bf16.msra.mxu0 %v1948
    %3362 = vmatprep.subr.bf16.mxu0 %v1965
    %3363 = vmatpush1.bf16.msra.mxu0 %v1964
    %3364 = vmatprep.subr.bf16.mxu0 %v1981
    %3365 = vmatpush1.bf16.msra.mxu0 %v1980
    %3366 = vmatprep.mubr.bf16.mxu0 %v1727
    %3367 = vmatmul.mubr.bf16.gmra.mrb[0].mxu0 %v1726
    %v3368 = vpop.f32.mrb[0].mxu0
    %v3369 = vadd.f32 %v2789, %v3368
    %v3370 = vpop.f32.mrb[0].mxu0
    %v3371 = vadd.f32 %v2793, %v3370
    %v3372 = vpop.f32.mrb[0].mxu0
    %v3373 = vpop.f32.mrb[0].mxu0
    %3374 = vdwg.mxu0
    %3375 = vmatprep.subr.bf16.mxu0 %v1997
    %3376 = vmatpush1.bf16.msra.mxu0 %v1996
    %3377 = vmatprep.subr.bf16.mxu0 %v2013
    %3378 = vmatpush1.bf16.msra.mxu0 %v2012
    %3379 = vmatprep.subr.bf16.mxu0 %v2029
    %3380 = vmatpush1.bf16.msra.mxu0 %v2028
    %3381 = vmatprep.subr.bf16.mxu0 %v2045
    %3382 = vmatpush1.bf16.msra.mxu0 %v2044
    %3383 = vmatprep.subr.bf16.mxu0 %v2061
    %3384 = vmatpush1.bf16.msra.mxu0 %v2060
    %3385 = vmatprep.subr.bf16.mxu0 %v2077
    %3386 = vmatpush1.bf16.msra.mxu0 %v2076
    %3387 = vmatprep.subr.bf16.mxu0 %v2093
    %3388 = vmatpush1.bf16.msra.mxu0 %v2092
    %3389 = vmatprep.subr.bf16.mxu0 %v2109
    %3390 = vmatpush1.bf16.msra.mxu0 %v2108
    %3391 = vmatprep.subr.bf16.mxu0 %v2125
    %3392 = vmatpush1.bf16.msra.mxu0 %v2124
    %3393 = vmatprep.subr.bf16.mxu0 %v2141
    %3394 = vmatpush1.bf16.msra.mxu0 %v2140
    %3395 = vmatprep.subr.bf16.mxu0 %v2157
    %3396 = vmatpush1.bf16.msra.mxu0 %v2156
    %3397 = vmatprep.subr.bf16.mxu0 %v2173
    %3398 = vmatpush1.bf16.msra.mxu0 %v2172
    %3399 = vmatprep.subr.bf16.mxu0 %v2189
    %3400 = vmatpush1.bf16.msra.mxu0 %v2188
    %3401 = vmatprep.subr.bf16.mxu0 %v2205
    %3402 = vmatpush1.bf16.msra.mxu0 %v2204
    %3403 = vmatprep.subr.bf16.mxu0 %v2221
    %3404 = vmatpush1.bf16.msra.mxu0 %v2220
    %3405 = vmatprep.subr.bf16.mxu0 %v2237
    %3406 = vmatpush1.bf16.msra.mxu0 %v2236
    %3407 = vmatprep.mubr.bf16.mxu0 %v1729
    %3408 = vmatmul.mubr.bf16.gmra.mrb[0].mxu0 %v1728
    %v3409 = vpop.f32.mrb[0].mxu0
    %v3410 = vadd.f32 %v3369, %v3409
    %v3411 = vpop.f32.mrb[0].mxu0
    %v3412 = vadd.f32 %v3371, %v3411
    %v3413 = vpop.f32.mrb[0].mxu0
    %v3414 = vpop.f32.mrb[0].mxu0
    %3415 = vdwg.mxu0
    %3416 = vmatprep.subr.bf16.mxu0 %v2253
    %3417 = vmatpush1.bf16.msra.mxu0 %v2252
    %3418 = vmatprep.subr.bf16.mxu0 %v2269
    %3419 = vmatpush1.bf16.msra.mxu0 %v2268
    %3420 = vmatprep.subr.bf16.mxu0 %v2285
    %3421 = vmatpush1.bf16.msra.mxu0 %v2284
    %3422 = vmatprep.subr.bf16.mxu0 %v2301
    %3423 = vmatpush1.bf16.msra.mxu0 %v2300
    %3424 = vmatprep.subr.bf16.mxu0 %v2317
    %3425 = vmatpush1.bf16.msra.mxu0 %v2316
    %3426 = vmatprep.subr.bf16.mxu0 %v2333
    %3427 = vmatpush1.bf16.msra.mxu0 %v2332
    %3428 = vmatprep.subr.bf16.mxu0 %v2349
    %3429 = vmatpush1.bf16.msra.mxu0 %v2348
    %3430 = vmatprep.subr.bf16.mxu0 %v2365
    %3431 = vmatpush1.bf16.msra.mxu0 %v2364
    %3432 = vmatprep.subr.bf16.mxu0 %v2381
    %3433 = vmatpush1.bf16.msra.mxu0 %v2380
    %3434 = vmatprep.subr.bf16.mxu0 %v2397
    %3435 = vmatpush1.bf16.msra.mxu0 %v2396
    %3436 = vmatprep.subr.bf16.mxu0 %v2413
    %3437 = vmatpush1.bf16.msra.mxu0 %v2412
    %3438 = vmatprep.subr.bf16.mxu0 %v2429
    %3439 = vmatpush1.bf16.msra.mxu0 %v2428
    %3440 = vmatprep.subr.bf16.mxu0 %v2445
    %3441 = vmatpush1.bf16.msra.mxu0 %v2444
    %3442 = vmatprep.subr.bf16.mxu0 %v2461
    %3443 = vmatpush1.bf16.msra.mxu0 %v2460
    %3444 = vmatprep.subr.bf16.mxu0 %v2477
    %3445 = vmatpush1.bf16.msra.mxu0 %v2476
    %3446 = vmatprep.subr.bf16.mxu0 %v2493
    %3447 = vmatpush1.bf16.msra.mxu0 %v2492
    %3448 = vmatprep.mubr.bf16.mxu0 %v1731
    %3449 = vmatmul.mubr.bf16.gmra.mrb[0].mxu0 %v1730
    %v3450 = vpop.f32.mrb[0].mxu0
    %v3451 = vadd.f32 %v3410, %v3450
    %v3452 = vpop.f32.mrb[0].mxu0
    %v3453 = vadd.f32 %v3412, %v3452
    %v3454 = vpop.f32.mrb[0].mxu0
    %v3455 = vpop.f32.mrb[0].mxu0
    %3456 = vdwg.mxu0
    %3457 = vmatprep.subr.bf16.mxu0 %v2509
    %3458 = vmatpush1.bf16.msra.mxu0 %v2508
    %3459 = vmatprep.subr.bf16.mxu0 %v2525
    %3460 = vmatpush1.bf16.msra.mxu0 %v2524
    %3461 = vmatprep.subr.bf16.mxu0 %v2541
    %3462 = vmatpush1.bf16.msra.mxu0 %v2540
    %3463 = vmatprep.subr.bf16.mxu0 %v2557
    %3464 = vmatpush1.bf16.msra.mxu0 %v2556
    %3465 = vmatprep.subr.bf16.mxu0 %v2573
    %3466 = vmatpush1.bf16.msra.mxu0 %v2572
    %3467 = vmatprep.subr.bf16.mxu0 %v2589
    %3468 = vmatpush1.bf16.msra.mxu0 %v2588
    %3469 = vmatprep.subr.bf16.mxu0 %v2605
    %3470 = vmatpush1.bf16.msra.mxu0 %v2604
    %3471 = vmatprep.subr.bf16.mxu0 %v2621
    %3472 = vmatpush1.bf16.msra.mxu0 %v2620
    %3473 = vmatprep.subr.bf16.mxu0 %v2637
    %3474 = vmatpush1.bf16.msra.mxu0 %v2636
    %3475 = vmatprep.subr.bf16.mxu0 %v2653
    %3476 = vmatpush1.bf16.msra.mxu0 %v2652
    %3477 = vmatprep.subr.bf16.mxu0 %v2669
    %3478 = vmatpush1.bf16.msra.mxu0 %v2668
    %3479 = vmatprep.subr.bf16.mxu0 %v2685
    %3480 = vmatpush1.bf16.msra.mxu0 %v2684
    %3481 = vmatprep.subr.bf16.mxu0 %v2701
    %3482 = vmatpush1.bf16.msra.mxu0 %v2700
    %3483 = vmatprep.subr.bf16.mxu0 %v2717
    %3484 = vmatpush1.bf16.msra.mxu0 %v2716
    %3485 = vmatprep.subr.bf16.mxu0 %v2733
    %3486 = vmatpush1.bf16.msra.mxu0 %v2732
    %3487 = vmatprep.subr.bf16.mxu0 %v2749
    %3488 = vmatpush1.bf16.msra.mxu0 %v2748
    %3489 = vmatprep.mubr.bf16.mxu0 %v1733
    %3490 = vmatmul.mubr.bf16.gmra.mrb[0].mxu0 %v1732
    %v3491 = vpop.f32.mrb[0].mxu0
    %v3492 = vadd.f32 %v3451, %v3491
    %v3493 = vpop.f32.mrb[0].mxu0
    %v3494 = vadd.f32 %v3453, %v3493
    %v3495 = vpop.f32.mrb[0].mxu0
    %v3496 = vpop.f32.mrb[0].mxu0
    %3497 = vdwg.mxu0
    %3498 = vmatprep.subr.bf16.mxu0 %v1743
    %3499 = vmatpush1.bf16.msra.mxu0 %v1742
    %3500 = vmatprep.subr.bf16.mxu0 %v1759
    %3501 = vmatpush1.bf16.msra.mxu0 %v1758
    %3502 = vmatprep.subr.bf16.mxu0 %v1775
    %3503 = vmatpush1.bf16.msra.mxu0 %v1774
    %3504 = vmatprep.subr.bf16.mxu0 %v1791
    %3505 = vmatpush1.bf16.msra.mxu0 %v1790
    %3506 = vmatprep.subr.bf16.mxu0 %v1807
    %3507 = vmatpush1.bf16.msra.mxu0 %v1806
    %3508 = vmatprep.subr.bf16.mxu0 %v1823
    %3509 = vmatpush1.bf16.msra.mxu0 %v1822
    %3510 = vmatprep.subr.bf16.mxu0 %v1839
    %3511 = vmatpush1.bf16.msra.mxu0 %v1838
    %3512 = vmatprep.subr.bf16.mxu0 %v1855
    %3513 = vmatpush1.bf16.msra.mxu0 %v1854
    %3514 = vmatprep.subr.bf16.mxu0 %v1871
    %3515 = vmatpush1.bf16.msra.mxu0 %v1870
    %3516 = vmatprep.subr.bf16.mxu0 %v1887
    %3517 = vmatpush1.bf16.msra.mxu0 %v1886
    %3518 = vmatprep.subr.bf16.mxu0 %v1903
    %3519 = vmatpush1.bf16.msra.mxu0 %v1902
    %3520 = vmatprep.subr.bf16.mxu0 %v1919
    %3521 = vmatpush1.bf16.msra.mxu0 %v1918
    %3522 = vmatprep.subr.bf16.mxu0 %v1935
    %3523 = vmatpush1.bf16.msra.mxu0 %v1934
    %3524 = vmatprep.subr.bf16.mxu0 %v1951
    %3525 = vmatpush1.bf16.msra.mxu0 %v1950
    %3526 = vmatprep.subr.bf16.mxu0 %v1967
    %3527 = vmatpush1.bf16.msra.mxu0 %v1966
    %3528 = vmatprep.subr.bf16.mxu0 %v1983
    %3529 = vmatpush1.bf16.msra.mxu0 %v1982
    %3530 = vmatprep.mubr.bf16.mxu0 %v1727
    %3531 = vmatmul.mubr.bf16.gmra.mrb[0].mxu0 %v1726
    %v3532 = vpop.f32.mrb[0].mxu0
    %v3533 = vadd.f32 %v2797, %v3532
    %v3534 = vpop.f32.mrb[0].mxu0
    %v3535 = vadd.f32 %v2801, %v3534
    %v3536 = vpop.f32.mrb[0].mxu0
    %v3537 = vpop.f32.mrb[0].mxu0
    %3538 = vdwg.mxu0
    %3539 = vmatprep.subr.bf16.mxu0 %v1999
    %3540 = vmatpush1.bf16.msra.mxu0 %v1998
    %3541 = vmatprep.subr.bf16.mxu0 %v2015
    %3542 = vmatpush1.bf16.msra.mxu0 %v2014
    %3543 = vmatprep.subr.bf16.mxu0 %v2031
    %3544 = vmatpush1.bf16.msra.mxu0 %v2030
    %3545 = vmatprep.subr.bf16.mxu0 %v2047
    %3546 = vmatpush1.bf16.msra.mxu0 %v2046
    %3547 = vmatprep.subr.bf16.mxu0 %v2063
    %3548 = vmatpush1.bf16.msra.mxu0 %v2062
    %3549 = vmatprep.subr.bf16.mxu0 %v2079
    %3550 = vmatpush1.bf16.msra.mxu0 %v2078
    %3551 = vmatprep.subr.bf16.mxu0 %v2095
    %3552 = vmatpush1.bf16.msra.mxu0 %v2094
    %3553 = vmatprep.subr.bf16.mxu0 %v2111
    %3554 = vmatpush1.bf16.msra.mxu0 %v2110
    %3555 = vmatprep.subr.bf16.mxu0 %v2127
    %3556 = vmatpush1.bf16.msra.mxu0 %v2126
    %3557 = vmatprep.subr.bf16.mxu0 %v2143
    %3558 = vmatpush1.bf16.msra.mxu0 %v2142
    %3559 = vmatprep.subr.bf16.mxu0 %v2159
    %3560 = vmatpush1.bf16.msra.mxu0 %v2158
    %3561 = vmatprep.subr.bf16.mxu0 %v2175
    %3562 = vmatpush1.bf16.msra.mxu0 %v2174
    %3563 = vmatprep.subr.bf16.mxu0 %v2191
    %3564 = vmatpush1.bf16.msra.mxu0 %v2190
    %3565 = vmatprep.subr.bf16.mxu0 %v2207
    %3566 = vmatpush1.bf16.msra.mxu0 %v2206
    %3567 = vmatprep.subr.bf16.mxu0 %v2223
    %3568 = vmatpush1.bf16.msra.mxu0 %v2222
    %3569 = vmatprep.subr.bf16.mxu0 %v2239
    %3570 = vmatpush1.bf16.msra.mxu0 %v2238
    %3571 = vmatprep.mubr.bf16.mxu0 %v1729
    %3572 = vmatmul.mubr.bf16.gmra.mrb[0].mxu0 %v1728
    %v3573 = vpop.f32.mrb[0].mxu0
    %v3574 = vadd.f32 %v3533, %v3573
    %v3575 = vpop.f32.mrb[0].mxu0
    %v3576 = vadd.f32 %v3535, %v3575
    %v3577 = vpop.f32.mrb[0].mxu0
    %v3578 = vpop.f32.mrb[0].mxu0
    %3579 = vdwg.mxu0
    %3580 = vmatprep.subr.bf16.mxu0 %v2255
    %3581 = vmatpush1.bf16.msra.mxu0 %v2254
    %3582 = vmatprep.subr.bf16.mxu0 %v2271
    %3583 = vmatpush1.bf16.msra.mxu0 %v2270
    %3584 = vmatprep.subr.bf16.mxu0 %v2287
    %3585 = vmatpush1.bf16.msra.mxu0 %v2286
    %3586 = vmatprep.subr.bf16.mxu0 %v2303
    %3587 = vmatpush1.bf16.msra.mxu0 %v2302
    %3588 = vmatprep.subr.bf16.mxu0 %v2319
    %3589 = vmatpush1.bf16.msra.mxu0 %v2318
    %3590 = vmatprep.subr.bf16.mxu0 %v2335
    %3591 = vmatpush1.bf16.msra.mxu0 %v2334
    %3592 = vmatprep.subr.bf16.mxu0 %v2351
    %3593 = vmatpush1.bf16.msra.mxu0 %v2350
    %3594 = vmatprep.subr.bf16.mxu0 %v2367
    %3595 = vmatpush1.bf16.msra.mxu0 %v2366
    %3596 = vmatprep.subr.bf16.mxu0 %v2383
    %3597 = vmatpush1.bf16.msra.mxu0 %v2382
    %3598 = vmatprep.subr.bf16.mxu0 %v2399
    %3599 = vmatpush1.bf16.msra.mxu0 %v2398
    %3600 = vmatprep.subr.bf16.mxu0 %v2415
    %3601 = vmatpush1.bf16.msra.mxu0 %v2414
    %3602 = vmatprep.subr.bf16.mxu0 %v2431
    %3603 = vmatpush1.bf16.msra.mxu0 %v2430
    %3604 = vmatprep.subr.bf16.mxu0 %v2447
    %3605 = vmatpush1.bf16.msra.mxu0 %v2446
    %3606 = vmatprep.subr.bf16.mxu0 %v2463
    %3607 = vmatpush1.bf16.msra.mxu0 %v2462
    %3608 = vmatprep.subr.bf16.mxu0 %v2479
    %3609 = vmatpush1.bf16.msra.mxu0 %v2478
    %3610 = vmatprep.subr.bf16.mxu0 %v2495
    %3611 = vmatpush1.bf16.msra.mxu0 %v2494
    %3612 = vmatprep.mubr.bf16.mxu0 %v1731
    %3613 = vmatmul.mubr.bf16.gmra.mrb[0].mxu0 %v1730
    %v3614 = vpop.f32.mrb[0].mxu0
    %v3615 = vadd.f32 %v3574, %v3614
    %v3616 = vpop.f32.mrb[0].mxu0
    %v3617 = vadd.f32 %v3576, %v3616
    %v3618 = vpop.f32.mrb[0].mxu0
    %v3619 = vpop.f32.mrb[0].mxu0
    %3620 = vdwg.mxu0
    %3621 = vmatprep.subr.bf16.mxu0 %v2511
    %3622 = vmatpush1.bf16.msra.mxu0 %v2510
    %3623 = vmatprep.subr.bf16.mxu0 %v2527
    %3624 = vmatpush1.bf16.msra.mxu0 %v2526
    %3625 = vmatprep.subr.bf16.mxu0 %v2543
    %3626 = vmatpush1.bf16.msra.mxu0 %v2542
    %3627 = vmatprep.subr.bf16.mxu0 %v2559
    %3628 = vmatpush1.bf16.msra.mxu0 %v2558
    %3629 = vmatprep.subr.bf16.mxu0 %v2575
    %3630 = vmatpush1.bf16.msra.mxu0 %v2574
    %3631 = vmatprep.subr.bf16.mxu0 %v2591
    %3632 = vmatpush1.bf16.msra.mxu0 %v2590
    %3633 = vmatprep.subr.bf16.mxu0 %v2607
    %3634 = vmatpush1.bf16.msra.mxu0 %v2606
    %3635 = vmatprep.subr.bf16.mxu0 %v2623
    %3636 = vmatpush1.bf16.msra.mxu0 %v2622
    %3637 = vmatprep.subr.bf16.mxu0 %v2639
    %3638 = vmatpush1.bf16.msra.mxu0 %v2638
    %3639 = vmatprep.subr.bf16.mxu0 %v2655
    %3640 = vmatpush1.bf16.msra.mxu0 %v2654
    %3641 = vmatprep.subr.bf16.mxu0 %v2671
    %3642 = vmatpush1.bf16.msra.mxu0 %v2670
    %3643 = vmatprep.subr.bf16.mxu0 %v2687
    %3644 = vmatpush1.bf16.msra.mxu0 %v2686
    %3645 = vmatprep.subr.bf16.mxu0 %v2703
    %3646 = vmatpush1.bf16.msra.mxu0 %v2702
    %3647 = vmatprep.subr.bf16.mxu0 %v2719
    %3648 = vmatpush1.bf16.msra.mxu0 %v2718
    %3649 = vmatprep.subr.bf16.mxu0 %v2735
    %3650 = vmatpush1.bf16.msra.mxu0 %v2734
    %3651 = vmatprep.subr.bf16.mxu0 %v2751
    %3652 = vmatpush1.bf16.msra.mxu0 %v2750
    %3653 = vmatprep.mubr.bf16.mxu0 %v1733
    %3654 = vmatmul.mubr.bf16.gmra.mrb[0].mxu0 %v1732
    %v3655 = vpop.f32.mrb[0].mxu0
    %v3656 = vadd.f32 %v3615, %v3655
    %v3657 = vpop.f32.mrb[0].mxu0
    %v3658 = vadd.f32 %v3617, %v3657
    %v3659 = vpop.f32.mrb[0].mxu0
    %v3660 = vpop.f32.mrb[0].mxu0
    %3661 = vdwg.mxu0
    %3662 = vmatprep.subr.bf16.mxu0 %v1745
    %3663 = vmatpush1.bf16.msra.mxu0 %v1744
    %3664 = vmatprep.subr.bf16.mxu0 %v1761
    %3665 = vmatpush1.bf16.msra.mxu0 %v1760
    %3666 = vmatprep.subr.bf16.mxu0 %v1777
    %3667 = vmatpush1.bf16.msra.mxu0 %v1776
    %3668 = vmatprep.subr.bf16.mxu0 %v1793
    %3669 = vmatpush1.bf16.msra.mxu0 %v1792
    %3670 = vmatprep.subr.bf16.mxu0 %v1809
    %3671 = vmatpush1.bf16.msra.mxu0 %v1808
    %3672 = vmatprep.subr.bf16.mxu0 %v1825
    %3673 = vmatpush1.bf16.msra.mxu0 %v1824
    %3674 = vmatprep.subr.bf16.mxu0 %v1841
    %3675 = vmatpush1.bf16.msra.mxu0 %v1840
    %3676 = vmatprep.subr.bf16.mxu0 %v1857
    %3677 = vmatpush1.bf16.msra.mxu0 %v1856
    %3678 = vmatprep.subr.bf16.mxu0 %v1873
    %3679 = vmatpush1.bf16.msra.mxu0 %v1872
    %3680 = vmatprep.subr.bf16.mxu0 %v1889
    %3681 = vmatpush1.bf16.msra.mxu0 %v1888
    %3682 = vmatprep.subr.bf16.mxu0 %v1905
    %3683 = vmatpush1.bf16.msra.mxu0 %v1904
    %3684 = vmatprep.subr.bf16.mxu0 %v1921
    %3685 = vmatpush1.bf16.msra.mxu0 %v1920
    %3686 = vmatprep.subr.bf16.mxu0 %v1937
    %3687 = vmatpush1.bf16.msra.mxu0 %v1936
    %3688 = vmatprep.subr.bf16.mxu0 %v1953
    %3689 = vmatpush1.bf16.msra.mxu0 %v1952
    %3690 = vmatprep.subr.bf16.mxu0 %v1969
    %3691 = vmatpush1.bf16.msra.mxu0 %v1968
    %3692 = vmatprep.subr.bf16.mxu0 %v1985
    %3693 = vmatpush1.bf16.msra.mxu0 %v1984
    %3694 = vmatprep.mubr.bf16.mxu0 %v1727
    %3695 = vmatmul.mubr.bf16.gmra.mrb[0].mxu0 %v1726
    %v3696 = vpop.f32.mrb[0].mxu0
    %v3697 = vadd.f32 %v2805, %v3696
    %v3698 = vpop.f32.mrb[0].mxu0
    %v3699 = vadd.f32 %v2809, %v3698
    %v3700 = vpop.f32.mrb[0].mxu0
    %v3701 = vpop.f32.mrb[0].mxu0
    %3702 = vdwg.mxu0
    %3703 = vmatprep.subr.bf16.mxu0 %v2001
    %3704 = vmatpush1.bf16.msra.mxu0 %v2000
    %3705 = vmatprep.subr.bf16.mxu0 %v2017
    %3706 = vmatpush1.bf16.msra.mxu0 %v2016
    %3707 = vmatprep.subr.bf16.mxu0 %v2033
    %3708 = vmatpush1.bf16.msra.mxu0 %v2032
    %3709 = vmatprep.subr.bf16.mxu0 %v2049
    %3710 = vmatpush1.bf16.msra.mxu0 %v2048
    %3711 = vmatprep.subr.bf16.mxu0 %v2065
    %3712 = vmatpush1.bf16.msra.mxu0 %v2064
    %3713 = vmatprep.subr.bf16.mxu0 %v2081
    %3714 = vmatpush1.bf16.msra.mxu0 %v2080
    %3715 = vmatprep.subr.bf16.mxu0 %v2097
    %3716 = vmatpush1.bf16.msra.mxu0 %v2096
    %3717 = vmatprep.subr.bf16.mxu0 %v2113
    %3718 = vmatpush1.bf16.msra.mxu0 %v2112
    %3719 = vmatprep.subr.bf16.mxu0 %v2129
    %3720 = vmatpush1.bf16.msra.mxu0 %v2128
    %3721 = vmatprep.subr.bf16.mxu0 %v2145
    %3722 = vmatpush1.bf16.msra.mxu0 %v2144
    %3723 = vmatprep.subr.bf16.mxu0 %v2161
    %3724 = vmatpush1.bf16.msra.mxu0 %v2160
    %3725 = vmatprep.subr.bf16.mxu0 %v2177
    %3726 = vmatpush1.bf16.msra.mxu0 %v2176
    %3727 = vmatprep.subr.bf16.mxu0 %v2193
    %3728 = vmatpush1.bf16.msra.mxu0 %v2192
    %3729 = vmatprep.subr.bf16.mxu0 %v2209
    %3730 = vmatpush1.bf16.msra.mxu0 %v2208
    %3731 = vmatprep.subr.bf16.mxu0 %v2225
    %3732 = vmatpush1.bf16.msra.mxu0 %v2224
    %3733 = vmatprep.subr.bf16.mxu0 %v2241
    %3734 = vmatpush1.bf16.msra.mxu0 %v2240
    %3735 = vmatprep.mubr.bf16.mxu0 %v1729
    %3736 = vmatmul.mubr.bf16.gmra.mrb[0].mxu0 %v1728
    %v3737 = vpop.f32.mrb[0].mxu0
    %v3738 = vadd.f32 %v3697, %v3737
    %v3739 = vpop.f32.mrb[0].mxu0
    %v3740 = vadd.f32 %v3699, %v3739
    %v3741 = vpop.f32.mrb[0].mxu0
    %v3742 = vpop.f32.mrb[0].mxu0
    %3743 = vdwg.mxu0
    %3744 = vmatprep.subr.bf16.mxu0 %v2257
    %3745 = vmatpush1.bf16.msra.mxu0 %v2256
    %3746 = vmatprep.subr.bf16.mxu0 %v2273
    %3747 = vmatpush1.bf16.msra.mxu0 %v2272
    %3748 = vmatprep.subr.bf16.mxu0 %v2289
    %3749 = vmatpush1.bf16.msra.mxu0 %v2288
    %3750 = vmatprep.subr.bf16.mxu0 %v2305
    %3751 = vmatpush1.bf16.msra.mxu0 %v2304
    %3752 = vmatprep.subr.bf16.mxu0 %v2321
    %3753 = vmatpush1.bf16.msra.mxu0 %v2320
    %3754 = vmatprep.subr.bf16.mxu0 %v2337
    %3755 = vmatpush1.bf16.msra.mxu0 %v2336
    %3756 = vmatprep.subr.bf16.mxu0 %v2353
    %3757 = vmatpush1.bf16.msra.mxu0 %v2352
    %3758 = vmatprep.subr.bf16.mxu0 %v2369
    %3759 = vmatpush1.bf16.msra.mxu0 %v2368
    %3760 = vmatprep.subr.bf16.mxu0 %v2385
    %3761 = vmatpush1.bf16.msra.mxu0 %v2384
    %3762 = vmatprep.subr.bf16.mxu0 %v2401
    %3763 = vmatpush1.bf16.msra.mxu0 %v2400
    %3764 = vmatprep.subr.bf16.mxu0 %v2417
    %3765 = vmatpush1.bf16.msra.mxu0 %v2416
    %3766 = vmatprep.subr.bf16.mxu0 %v2433
    %3767 = vmatpush1.bf16.msra.mxu0 %v2432
    %3768 = vmatprep.subr.bf16.mxu0 %v2449
    %3769 = vmatpush1.bf16.msra.mxu0 %v2448
    %3770 = vmatprep.subr.bf16.mxu0 %v2465
    %3771 = vmatpush1.bf16.msra.mxu0 %v2464
    %3772 = vmatprep.subr.bf16.mxu0 %v2481
    %3773 = vmatpush1.bf16.msra.mxu0 %v2480
    %3774 = vmatprep.subr.bf16.mxu0 %v2497
    %3775 = vmatpush1.bf16.msra.mxu0 %v2496
    %3776 = vmatprep.mubr.bf16.mxu0 %v1731
    %3777 = vmatmul.mubr.bf16.gmra.mrb[0].mxu0 %v1730
    %v3778 = vpop.f32.mrb[0].mxu0
    %v3779 = vadd.f32 %v3738, %v3778
    %v3780 = vpop.f32.mrb[0].mxu0
    %v3781 = vadd.f32 %v3740, %v3780
    %v3782 = vpop.f32.mrb[0].mxu0
    %v3783 = vpop.f32.mrb[0].mxu0
    %3784 = vdwg.mxu0
    %3785 = vmatprep.subr.bf16.mxu0 %v2513
    %3786 = vmatpush1.bf16.msra.mxu0 %v2512
    %3787 = vmatprep.subr.bf16.mxu0 %v2529
    %3788 = vmatpush1.bf16.msra.mxu0 %v2528
    %3789 = vmatprep.subr.bf16.mxu0 %v2545
    %3790 = vmatpush1.bf16.msra.mxu0 %v2544
    %3791 = vmatprep.subr.bf16.mxu0 %v2561
    %3792 = vmatpush1.bf16.msra.mxu0 %v2560
    %3793 = vmatprep.subr.bf16.mxu0 %v2577
    %3794 = vmatpush1.bf16.msra.mxu0 %v2576
    %3795 = vmatprep.subr.bf16.mxu0 %v2593
    %3796 = vmatpush1.bf16.msra.mxu0 %v2592
    %3797 = vmatprep.subr.bf16.mxu0 %v2609
    %3798 = vmatpush1.bf16.msra.mxu0 %v2608
    %3799 = vmatprep.subr.bf16.mxu0 %v2625
    %3800 = vmatpush1.bf16.msra.mxu0 %v2624
    %3801 = vmatprep.subr.bf16.mxu0 %v2641
    %3802 = vmatpush1.bf16.msra.mxu0 %v2640
    %3803 = vmatprep.subr.bf16.mxu0 %v2657
    %3804 = vmatpush1.bf16.msra.mxu0 %v2656
    %3805 = vmatprep.subr.bf16.mxu0 %v2673
    %3806 = vmatpush1.bf16.msra.mxu0 %v2672
    %3807 = vmatprep.subr.bf16.mxu0 %v2689
    %3808 = vmatpush1.bf16.msra.mxu0 %v2688
    %3809 = vmatprep.subr.bf16.mxu0 %v2705
    %3810 = vmatpush1.bf16.msra.mxu0 %v2704
    %3811 = vmatprep.subr.bf16.mxu0 %v2721
    %3812 = vmatpush1.bf16.msra.mxu0 %v2720
    %3813 = vmatprep.subr.bf16.mxu0 %v2737
    %3814 = vmatpush1.bf16.msra.mxu0 %v2736
    %3815 = vmatprep.subr.bf16.mxu0 %v2753
    %3816 = vmatpush1.bf16.msra.mxu0 %v2752
    %3817 = vmatprep.mubr.bf16.mxu0 %v1733
    %3818 = vmatmul.mubr.bf16.gmra.mrb[0].mxu0 %v1732
    %v3819 = vpop.f32.mrb[0].mxu0
    %v3820 = vadd.f32 %v3779, %v3819
    %v3821 = vpop.f32.mrb[0].mxu0
    %v3822 = vadd.f32 %v3781, %v3821
    %v3823 = vpop.f32.mrb[0].mxu0
    %v3824 = vpop.f32.mrb[0].mxu0
    %3825 = vdwg.mxu0
    %3826 = vmatprep.subr.bf16.mxu0 %v1747
    %3827 = vmatpush1.bf16.msra.mxu0 %v1746
    %3828 = vmatprep.subr.bf16.mxu0 %v1763
    %3829 = vmatpush1.bf16.msra.mxu0 %v1762
    %3830 = vmatprep.subr.bf16.mxu0 %v1779
    %3831 = vmatpush1.bf16.msra.mxu0 %v1778
    %3832 = vmatprep.subr.bf16.mxu0 %v1795
    %3833 = vmatpush1.bf16.msra.mxu0 %v1794
    %3834 = vmatprep.subr.bf16.mxu0 %v1811
    %3835 = vmatpush1.bf16.msra.mxu0 %v1810
    %3836 = vmatprep.subr.bf16.mxu0 %v1827
    %3837 = vmatpush1.bf16.msra.mxu0 %v1826
    %3838 = vmatprep.subr.bf16.mxu0 %v1843
    %3839 = vmatpush1.bf16.msra.mxu0 %v1842
    %3840 = vmatprep.subr.bf16.mxu0 %v1859
    %3841 = vmatpush1.bf16.msra.mxu0 %v1858
    %3842 = vmatprep.subr.bf16.mxu0 %v1875
    %3843 = vmatpush1.bf16.msra.mxu0 %v1874
    %3844 = vmatprep.subr.bf16.mxu0 %v1891
    %3845 = vmatpush1.bf16.msra.mxu0 %v1890
    %3846 = vmatprep.subr.bf16.mxu0 %v1907
    %3847 = vmatpush1.bf16.msra.mxu0 %v1906
    %3848 = vmatprep.subr.bf16.mxu0 %v1923
    %3849 = vmatpush1.bf16.msra.mxu0 %v1922
    %3850 = vmatprep.subr.bf16.mxu0 %v1939
    %3851 = vmatpush1.bf16.msra.mxu0 %v1938
    %3852 = vmatprep.subr.bf16.mxu0 %v1955
    %3853 = vmatpush1.bf16.msra.mxu0 %v1954
    %3854 = vmatprep.subr.bf16.mxu0 %v1971
    %3855 = vmatpush1.bf16.msra.mxu0 %v1970
    %3856 = vmatprep.subr.bf16.mxu0 %v1987
    %3857 = vmatpush1.bf16.msra.mxu0 %v1986
    %3858 = vmatprep.mubr.bf16.mxu0 %v1727
    %3859 = vmatmul.mubr.bf16.gmra.mrb[0].mxu0 %v1726
    %v3860 = vpop.f32.mrb[0].mxu0
    %v3861 = vadd.f32 %v2813, %v3860
    %v3862 = vpop.f32.mrb[0].mxu0
    %v3863 = vadd.f32 %v2817, %v3862
    %v3864 = vpop.f32.mrb[0].mxu0
    %v3865 = vpop.f32.mrb[0].mxu0
    %3866 = vdwg.mxu0
    %3867 = vmatprep.subr.bf16.mxu0 %v2003
    %3868 = vmatpush1.bf16.msra.mxu0 %v2002
    %3869 = vmatprep.subr.bf16.mxu0 %v2019
    %3870 = vmatpush1.bf16.msra.mxu0 %v2018
    %3871 = vmatprep.subr.bf16.mxu0 %v2035
    %3872 = vmatpush1.bf16.msra.mxu0 %v2034
    %3873 = vmatprep.subr.bf16.mxu0 %v2051
    %3874 = vmatpush1.bf16.msra.mxu0 %v2050
    %3875 = vmatprep.subr.bf16.mxu0 %v2067
    %3876 = vmatpush1.bf16.msra.mxu0 %v2066
    %3877 = vmatprep.subr.bf16.mxu0 %v2083
    %3878 = vmatpush1.bf16.msra.mxu0 %v2082
    %3879 = vmatprep.subr.bf16.mxu0 %v2099
    %3880 = vmatpush1.bf16.msra.mxu0 %v2098
    %3881 = vmatprep.subr.bf16.mxu0 %v2115
    %3882 = vmatpush1.bf16.msra.mxu0 %v2114
    %3883 = vmatprep.subr.bf16.mxu0 %v2131
    %3884 = vmatpush1.bf16.msra.mxu0 %v2130
    %3885 = vmatprep.subr.bf16.mxu0 %v2147
    %3886 = vmatpush1.bf16.msra.mxu0 %v2146
    %3887 = vmatprep.subr.bf16.mxu0 %v2163
    %3888 = vmatpush1.bf16.msra.mxu0 %v2162
    %3889 = vmatprep.subr.bf16.mxu0 %v2179
    %3890 = vmatpush1.bf16.msra.mxu0 %v2178
    %3891 = vmatprep.subr.bf16.mxu0 %v2195
    %3892 = vmatpush1.bf16.msra.mxu0 %v2194
    %3893 = vmatprep.subr.bf16.mxu0 %v2211
    %3894 = vmatpush1.bf16.msra.mxu0 %v2210
    %3895 = vmatprep.subr.bf16.mxu0 %v2227
    %3896 = vmatpush1.bf16.msra.mxu0 %v2226
    %3897 = vmatprep.subr.bf16.mxu0 %v2243
    %3898 = vmatpush1.bf16.msra.mxu0 %v2242
    %3899 = vmatprep.mubr.bf16.mxu0 %v1729
    %3900 = vmatmul.mubr.bf16.gmra.mrb[0].mxu0 %v1728
    %v3901 = vpop.f32.mrb[0].mxu0
    %v3902 = vadd.f32 %v3861, %v3901
    %v3903 = vpop.f32.mrb[0].mxu0
    %v3904 = vadd.f32 %v3863, %v3903
    %v3905 = vpop.f32.mrb[0].mxu0
    %v3906 = vpop.f32.mrb[0].mxu0
    %3907 = vdwg.mxu0
    %3908 = vmatprep.subr.bf16.mxu0 %v2259
    %3909 = vmatpush1.bf16.msra.mxu0 %v2258
    %3910 = vmatprep.subr.bf16.mxu0 %v2275
    %3911 = vmatpush1.bf16.msra.mxu0 %v2274
    %3912 = vmatprep.subr.bf16.mxu0 %v2291
    %3913 = vmatpush1.bf16.msra.mxu0 %v2290
    %3914 = vmatprep.subr.bf16.mxu0 %v2307
    %3915 = vmatpush1.bf16.msra.mxu0 %v2306
    %3916 = vmatprep.subr.bf16.mxu0 %v2323
    %3917 = vmatpush1.bf16.msra.mxu0 %v2322
    %3918 = vmatprep.subr.bf16.mxu0 %v2339
    %3919 = vmatpush1.bf16.msra.mxu0 %v2338
    %3920 = vmatprep.subr.bf16.mxu0 %v2355
    %3921 = vmatpush1.bf16.msra.mxu0 %v2354
    %3922 = vmatprep.subr.bf16.mxu0 %v2371
    %3923 = vmatpush1.bf16.msra.mxu0 %v2370
    %3924 = vmatprep.subr.bf16.mxu0 %v2387
    %3925 = vmatpush1.bf16.msra.mxu0 %v2386
    %3926 = vmatprep.subr.bf16.mxu0 %v2403
    %3927 = vmatpush1.bf16.msra.mxu0 %v2402
    %3928 = vmatprep.subr.bf16.mxu0 %v2419
    %3929 = vmatpush1.bf16.msra.mxu0 %v2418
    %3930 = vmatprep.subr.bf16.mxu0 %v2435
    %3931 = vmatpush1.bf16.msra.mxu0 %v2434
    %3932 = vmatprep.subr.bf16.mxu0 %v2451
    %3933 = vmatpush1.bf16.msra.mxu0 %v2450
    %3934 = vmatprep.subr.bf16.mxu0 %v2467
    %3935 = vmatpush1.bf16.msra.mxu0 %v2466
    %3936 = vmatprep.subr.bf16.mxu0 %v2483
    %3937 = vmatpush1.bf16.msra.mxu0 %v2482
    %3938 = vmatprep.subr.bf16.mxu0 %v2499
    %3939 = vmatpush1.bf16.msra.mxu0 %v2498
    %3940 = vmatprep.mubr.bf16.mxu0 %v1731
    %3941 = vmatmul.mubr.bf16.gmra.mrb[0].mxu0 %v1730
    %v3942 = vpop.f32.mrb[0].mxu0
    %v3943 = vadd.f32 %v3902, %v3942
    %v3944 = vpop.f32.mrb[0].mxu0
    %v3945 = vadd.f32 %v3904, %v3944
    %v3946 = vpop.f32.mrb[0].mxu0
    %v3947 = vpop.f32.mrb[0].mxu0
    %3948 = vdwg.mxu0
    %3949 = vmatprep.subr.bf16.mxu0 %v2515
    %3950 = vmatpush1.bf16.msra.mxu0 %v2514
    %3951 = vmatprep.subr.bf16.mxu0 %v2531
    %3952 = vmatpush1.bf16.msra.mxu0 %v2530
    %3953 = vmatprep.subr.bf16.mxu0 %v2547
    %3954 = vmatpush1.bf16.msra.mxu0 %v2546
    %3955 = vmatprep.subr.bf16.mxu0 %v2563
    %3956 = vmatpush1.bf16.msra.mxu0 %v2562
    %3957 = vmatprep.subr.bf16.mxu0 %v2579
    %3958 = vmatpush1.bf16.msra.mxu0 %v2578
    %3959 = vmatprep.subr.bf16.mxu0 %v2595
    %3960 = vmatpush1.bf16.msra.mxu0 %v2594
    %3961 = vmatprep.subr.bf16.mxu0 %v2611
    %3962 = vmatpush1.bf16.msra.mxu0 %v2610
    %3963 = vmatprep.subr.bf16.mxu0 %v2627
    %3964 = vmatpush1.bf16.msra.mxu0 %v2626
    %3965 = vmatprep.subr.bf16.mxu0 %v2643
    %3966 = vmatpush1.bf16.msra.mxu0 %v2642
    %3967 = vmatprep.subr.bf16.mxu0 %v2659
    %3968 = vmatpush1.bf16.msra.mxu0 %v2658
    %3969 = vmatprep.subr.bf16.mxu0 %v2675
    %3970 = vmatpush1.bf16.msra.mxu0 %v2674
    %3971 = vmatprep.subr.bf16.mxu0 %v2691
    %3972 = vmatpush1.bf16.msra.mxu0 %v2690
    %3973 = vmatprep.subr.bf16.mxu0 %v2707
    %3974 = vmatpush1.bf16.msra.mxu0 %v2706
    %3975 = vmatprep.subr.bf16.mxu0 %v2723
    %3976 = vmatpush1.bf16.msra.mxu0 %v2722
    %3977 = vmatprep.subr.bf16.mxu0 %v2739
    %3978 = vmatpush1.bf16.msra.mxu0 %v2738
    %3979 = vmatprep.subr.bf16.mxu0 %v2755
    %3980 = vmatpush1.bf16.msra.mxu0 %v2754
    %3981 = vmatprep.mubr.bf16.mxu0 %v1733
    %3982 = vmatmul.mubr.bf16.gmra.mrb[0].mxu0 %v1732
    %v3983 = vpop.f32.mrb[0].mxu0
    %v3984 = vadd.f32 %v3943, %v3983
    %v3985 = vpop.f32.mrb[0].mxu0
    %v3986 = vadd.f32 %v3945, %v3985
    %v3987 = vpop.f32.mrb[0].mxu0
    %v3988 = vpop.f32.mrb[0].mxu0
    %3989 = vdwg.mxu0
    %3990 = vmatprep.subr.bf16.mxu0 %v1749
    %3991 = vmatpush1.bf16.msra.mxu0 %v1748
    %3992 = vmatprep.subr.bf16.mxu0 %v1765
    %3993 = vmatpush1.bf16.msra.mxu0 %v1764
    %3994 = vmatprep.subr.bf16.mxu0 %v1781
    %3995 = vmatpush1.bf16.msra.mxu0 %v1780
    %3996 = vmatprep.subr.bf16.mxu0 %v1797
    %3997 = vmatpush1.bf16.msra.mxu0 %v1796
    %3998 = vmatprep.subr.bf16.mxu0 %v1813
    %3999 = vmatpush1.bf16.msra.mxu0 %v1812
    %4000 = vmatprep.subr.bf16.mxu0 %v1829
    %4001 = vmatpush1.bf16.msra.mxu0 %v1828
    %4002 = vmatprep.subr.bf16.mxu0 %v1845
    %4003 = vmatpush1.bf16.msra.mxu0 %v1844
    %4004 = vmatprep.subr.bf16.mxu0 %v1861
    %4005 = vmatpush1.bf16.msra.mxu0 %v1860
    %4006 = vmatprep.subr.bf16.mxu0 %v1877
    %4007 = vmatpush1.bf16.msra.mxu0 %v1876
    %4008 = vmatprep.subr.bf16.mxu0 %v1893
    %4009 = vmatpush1.bf16.msra.mxu0 %v1892
    %4010 = vmatprep.subr.bf16.mxu0 %v1909
    %4011 = vmatpush1.bf16.msra.mxu0 %v1908
    %4012 = vmatprep.subr.bf16.mxu0 %v1925
    %4013 = vmatpush1.bf16.msra.mxu0 %v1924
    %4014 = vmatprep.subr.bf16.mxu0 %v1941
    %4015 = vmatpush1.bf16.msra.mxu0 %v1940
    %4016 = vmatprep.subr.bf16.mxu0 %v1957
    %4017 = vmatpush1.bf16.msra.mxu0 %v1956
    %4018 = vmatprep.subr.bf16.mxu0 %v1973
    %4019 = vmatpush1.bf16.msra.mxu0 %v1972
    %4020 = vmatprep.subr.bf16.mxu0 %v1989
    %4021 = vmatpush1.bf16.msra.mxu0 %v1988
    %4022 = vmatprep.mubr.bf16.mxu0 %v1727
    %4023 = vmatmul.mubr.bf16.gmra.mrb[0].mxu0 %v1726
    %v4024 = vpop.f32.mrb[0].mxu0
    %v4025 = vadd.f32 %v2821, %v4024
    %v4026 = vpop.f32.mrb[0].mxu0
    %v4027 = vadd.f32 %v2825, %v4026
    %v4028 = vpop.f32.mrb[0].mxu0
    %v4029 = vpop.f32.mrb[0].mxu0
    %4030 = vdwg.mxu0
    %4031 = vmatprep.subr.bf16.mxu0 %v2005
    %4032 = vmatpush1.bf16.msra.mxu0 %v2004
    %4033 = vmatprep.subr.bf16.mxu0 %v2021
    %4034 = vmatpush1.bf16.msra.mxu0 %v2020
    %4035 = vmatprep.subr.bf16.mxu0 %v2037
    %4036 = vmatpush1.bf16.msra.mxu0 %v2036
    %4037 = vmatprep.subr.bf16.mxu0 %v2053
    %4038 = vmatpush1.bf16.msra.mxu0 %v2052
    %4039 = vmatprep.subr.bf16.mxu0 %v2069
    %4040 = vmatpush1.bf16.msra.mxu0 %v2068
    %4041 = vmatprep.subr.bf16.mxu0 %v2085
    %4042 = vmatpush1.bf16.msra.mxu0 %v2084
    %4043 = vmatprep.subr.bf16.mxu0 %v2101
    %4044 = vmatpush1.bf16.msra.mxu0 %v2100
    %4045 = vmatprep.subr.bf16.mxu0 %v2117
    %4046 = vmatpush1.bf16.msra.mxu0 %v2116
    %4047 = vmatprep.subr.bf16.mxu0 %v2133
    %4048 = vmatpush1.bf16.msra.mxu0 %v2132
    %4049 = vmatprep.subr.bf16.mxu0 %v2149
    %4050 = vmatpush1.bf16.msra.mxu0 %v2148
    %4051 = vmatprep.subr.bf16.mxu0 %v2165
    %4052 = vmatpush1.bf16.msra.mxu0 %v2164
    %4053 = vmatprep.subr.bf16.mxu0 %v2181
    %4054 = vmatpush1.bf16.msra.mxu0 %v2180
    %4055 = vmatprep.subr.bf16.mxu0 %v2197
    %4056 = vmatpush1.bf16.msra.mxu0 %v2196
    %4057 = vmatprep.subr.bf16.mxu0 %v2213
    %4058 = vmatpush1.bf16.msra.mxu0 %v2212
    %4059 = vmatprep.subr.bf16.mxu0 %v2229
    %4060 = vmatpush1.bf16.msra.mxu0 %v2228
    %4061 = vmatprep.subr.bf16.mxu0 %v2245
    %4062 = vmatpush1.bf16.msra.mxu0 %v2244
    %4063 = vmatprep.mubr.bf16.mxu0 %v1729
    %4064 = vmatmul.mubr.bf16.gmra.mrb[0].mxu0 %v1728
    %v4065 = vpop.f32.mrb[0].mxu0
    %v4066 = vadd.f32 %v4025, %v4065
    %v4067 = vpop.f32.mrb[0].mxu0
    %v4068 = vadd.f32 %v4027, %v4067
    %v4069 = vpop.f32.mrb[0].mxu0
    %v4070 = vpop.f32.mrb[0].mxu0
    %4071 = vdwg.mxu0
    %4072 = vmatprep.subr.bf16.mxu0 %v2261
    %4073 = vmatpush1.bf16.msra.mxu0 %v2260
    %4074 = vmatprep.subr.bf16.mxu0 %v2277
    %4075 = vmatpush1.bf16.msra.mxu0 %v2276
    %4076 = vmatprep.subr.bf16.mxu0 %v2293
    %4077 = vmatpush1.bf16.msra.mxu0 %v2292
    %4078 = vmatprep.subr.bf16.mxu0 %v2309
    %4079 = vmatpush1.bf16.msra.mxu0 %v2308
    %4080 = vmatprep.subr.bf16.mxu0 %v2325
    %4081 = vmatpush1.bf16.msra.mxu0 %v2324
    %4082 = vmatprep.subr.bf16.mxu0 %v2341
    %4083 = vmatpush1.bf16.msra.mxu0 %v2340
    %4084 = vmatprep.subr.bf16.mxu0 %v2357
    %4085 = vmatpush1.bf16.msra.mxu0 %v2356
    %4086 = vmatprep.subr.bf16.mxu0 %v2373
    %4087 = vmatpush1.bf16.msra.mxu0 %v2372
    %4088 = vmatprep.subr.bf16.mxu0 %v2389
    %4089 = vmatpush1.bf16.msra.mxu0 %v2388
    %4090 = vmatprep.subr.bf16.mxu0 %v2405
    %4091 = vmatpush1.bf16.msra.mxu0 %v2404
    %4092 = vmatprep.subr.bf16.mxu0 %v2421
    %4093 = vmatpush1.bf16.msra.mxu0 %v2420
    %4094 = vmatprep.subr.bf16.mxu0 %v2437
    %4095 = vmatpush1.bf16.msra.mxu0 %v2436
    %4096 = vmatprep.subr.bf16.mxu0 %v2453
    %4097 = vmatpush1.bf16.msra.mxu0 %v2452
    %4098 = vmatprep.subr.bf16.mxu0 %v2469
    %4099 = vmatpush1.bf16.msra.mxu0 %v2468
    %4100 = vmatprep.subr.bf16.mxu0 %v2485
    %4101 = vmatpush1.bf16.msra.mxu0 %v2484
    %4102 = vmatprep.subr.bf16.mxu0 %v2501
    %4103 = vmatpush1.bf16.msra.mxu0 %v2500
    %4104 = vmatprep.mubr.bf16.mxu0 %v1731
    %4105 = vmatmul.mubr.bf16.gmra.mrb[0].mxu0 %v1730
    %v4106 = vpop.f32.mrb[0].mxu0
    %v4107 = vadd.f32 %v4066, %v4106
    %v4108 = vpop.f32.mrb[0].mxu0
    %v4109 = vadd.f32 %v4068, %v4108
    %v4110 = vpop.f32.mrb[0].mxu0
    %v4111 = vpop.f32.mrb[0].mxu0
    %4112 = vdwg.mxu0
    %4113 = vmatprep.subr.bf16.mxu0 %v2517
    %4114 = vmatpush1.bf16.msra.mxu0 %v2516
    %4115 = vmatprep.subr.bf16.mxu0 %v2533
    %4116 = vmatpush1.bf16.msra.mxu0 %v2532
    %4117 = vmatprep.subr.bf16.mxu0 %v2549
    %4118 = vmatpush1.bf16.msra.mxu0 %v2548
    %4119 = vmatprep.subr.bf16.mxu0 %v2565
    %4120 = vmatpush1.bf16.msra.mxu0 %v2564
    %4121 = vmatprep.subr.bf16.mxu0 %v2581
    %4122 = vmatpush1.bf16.msra.mxu0 %v2580
    %4123 = vmatprep.subr.bf16.mxu0 %v2597
    %4124 = vmatpush1.bf16.msra.mxu0 %v2596
    %4125 = vmatprep.subr.bf16.mxu0 %v2613
    %4126 = vmatpush1.bf16.msra.mxu0 %v2612
    %4127 = vmatprep.subr.bf16.mxu0 %v2629
    %4128 = vmatpush1.bf16.msra.mxu0 %v2628
    %4129 = vmatprep.subr.bf16.mxu0 %v2645
    %4130 = vmatpush1.bf16.msra.mxu0 %v2644
    %4131 = vmatprep.subr.bf16.mxu0 %v2661
    %4132 = vmatpush1.bf16.msra.mxu0 %v2660
    %4133 = vmatprep.subr.bf16.mxu0 %v2677
    %4134 = vmatpush1.bf16.msra.mxu0 %v2676
    %4135 = vmatprep.subr.bf16.mxu0 %v2693
    %4136 = vmatpush1.bf16.msra.mxu0 %v2692
    %4137 = vmatprep.subr.bf16.mxu0 %v2709
    %4138 = vmatpush1.bf16.msra.mxu0 %v2708
    %4139 = vmatprep.subr.bf16.mxu0 %v2725
    %4140 = vmatpush1.bf16.msra.mxu0 %v2724
    %4141 = vmatprep.subr.bf16.mxu0 %v2741
    %4142 = vmatpush1.bf16.msra.mxu0 %v2740
    %4143 = vmatprep.subr.bf16.mxu0 %v2757
    %4144 = vmatpush1.bf16.msra.mxu0 %v2756
    %4145 = vmatprep.mubr.bf16.mxu0 %v1733
    %4146 = vmatmul.mubr.bf16.gmra.mrb[0].mxu0 %v1732
    %v4147 = vpop.f32.mrb[0].mxu0
    %v4148 = vadd.f32 %v4107, %v4147
    %v4149 = vpop.f32.mrb[0].mxu0
    %v4150 = vadd.f32 %v4109, %v4149
    %v4151 = vpop.f32.mrb[0].mxu0
    %v4152 = vpop.f32.mrb[0].mxu0
    %4153 = vdwg.mxu0
    %v4154 = vmax.f32 %v3000, 0.0
    %v4155 = vmax.f32 %v3002, 0.0
    %v4156 = vmax.f32 %v3164, 0.0
    %v4157 = vmax.f32 %v3166, 0.0
    %v4158 = vmax.f32 %v3328, 0.0
    %v4159 = vmax.f32 %v3330, 0.0
    %v4160 = vmax.f32 %v3492, 0.0
    %v4161 = vmax.f32 %v3494, 0.0
    %v4162 = vmax.f32 %v3656, 0.0
    %v4163 = vmax.f32 %v3658, 0.0
    %v4164 = vmax.f32 %v3820, 0.0
    %v4165 = vmax.f32 %v3822, 0.0
    %v4166 = vmax.f32 %v3984, 0.0
    %v4167 = vmax.f32 %v3986, 0.0
    %v4168 = vmax.f32 %v4148, 0.0
    %v4169 = vmax.f32 %v4150, 0.0
    %v4170 = vpack.c.bf16 %v4154, %v4154
    %v4171 = vpack.c.bf16 %v4155, %v4155
    %v4172 = vpack.c.bf16 %v4156, %v4156
    %v4173 = vpack.c.bf16 %v4157, %v4157
    %v4174 = vpack.c.bf16 %v4158, %v4158
    %v4175 = vpack.c.bf16 %v4159, %v4159
    %v4176 = vpack.c.bf16 %v4160, %v4160
    %v4177 = vpack.c.bf16 %v4161, %v4161
    %v4178 = vpack.c.bf16 %v4162, %v4162
    %v4179 = vpack.c.bf16 %v4163, %v4163
    %v4180 = vpack.c.bf16 %v4164, %v4164
    %v4181 = vpack.c.bf16 %v4165, %v4165
    %v4182 = vpack.c.bf16 %v4166, %v4166
    %v4183 = vpack.c.bf16 %v4167, %v4167
    %v4184 = vpack.c.bf16 %v4168, %v4168
    %v4185 = vpack.c.bf16 %v4169, %v4169
    %v4186 = vld [vmem:[#allocation5] sm:$0xff]
    %v4187 = vld [vmem:[#allocation5 + $0x8] sm:$0xff]
    %v4188 = vld [vmem:[#allocation5 + $0x10] sm:$0xff]
    %v4189 = vld [vmem:[#allocation5 + $0x18] sm:$0xff]
    %v4190 = vld [vmem:[#allocation5 + $0x20] sm:$0xff]
    %v4191 = vld [vmem:[#allocation5 + $0x28] sm:$0xff]
    %v4192 = vld [vmem:[#allocation5 + $0x30] sm:$0xff]
    %v4193 = vld [vmem:[#allocation5 + $0x38] sm:$0xff]
    %v4194 = vld [vmem:[#allocation5 + $0x40] sm:$0xff]
    %v4195 = vld [vmem:[#allocation5 + $0x48] sm:$0xff]
    %v4196 = vld [vmem:[#allocation5 + $0x50] sm:$0xff]
    %v4197 = vld [vmem:[#allocation5 + $0x58] sm:$0xff]
    %v4198 = vld [vmem:[#allocation5 + $0x60] sm:$0xff]
    %v4199 = vld [vmem:[#allocation5 + $0x68] sm:$0xff]
    %v4200 = vld [vmem:[#allocation5 + $0x70] sm:$0xff]
    %v4201 = vld [vmem:[#allocation5 + $0x78] sm:$0xff]
    %v4202 = vld [vmem:[#allocation5 + $0x80] sm:$0xff]
    %v4203 = vld [vmem:[#allocation5 + $0x88] sm:$0xff]
    %v4204 = vld [vmem:[#allocation5 + $0x90] sm:$0xff]
    %v4205 = vld [vmem:[#allocation5 + $0x98] sm:$0xff]
    %v4206 = vld [vmem:[#allocation5 + $0xa0] sm:$0xff]
    %v4207 = vld [vmem:[#allocation5 + $0xa8] sm:$0xff]
    %v4208 = vld [vmem:[#allocation5 + $0xb0] sm:$0xff]
    %v4209 = vld [vmem:[#allocation5 + $0xb8] sm:$0xff]
    %v4210 = vld [vmem:[#allocation5 + $0xc0] sm:$0xff]
    %v4211 = vld [vmem:[#allocation5 + $0xc8] sm:$0xff]
    %v4212 = vld [vmem:[#allocation5 + $0xd0] sm:$0xff]
    %v4213 = vld [vmem:[#allocation5 + $0xd8] sm:$0xff]
    %v4214 = vld [vmem:[#allocation5 + $0xe0] sm:$0xff]
    %v4215 = vld [vmem:[#allocation5 + $0xe8] sm:$0xff]
    %v4216 = vld [vmem:[#allocation5 + $0xf0] sm:$0xff]
    %v4217 = vld [vmem:[#allocation5 + $0xf8] sm:$0xff]
    %v4218 = vld [vmem:[#allocation5 + $0x100] sm:$0xff]
    %v4219 = vld [vmem:[#allocation5 + $0x108] sm:$0xff]
    %v4220 = vld [vmem:[#allocation5 + $0x110] sm:$0xff]
    %v4221 = vld [vmem:[#allocation5 + $0x118] sm:$0xff]
    %v4222 = vld [vmem:[#allocation5 + $0x120] sm:$0xff]
    %v4223 = vld [vmem:[#allocation5 + $0x128] sm:$0xff]
    %v4224 = vld [vmem:[#allocation5 + $0x130] sm:$0xff]
    %v4225 = vld [vmem:[#allocation5 + $0x138] sm:$0xff]
    %v4226 = vld [vmem:[#allocation5 + $0x140] sm:$0xff]
    %v4227 = vld [vmem:[#allocation5 + $0x148] sm:$0xff]
    %v4228 = vld [vmem:[#allocation5 + $0x150] sm:$0xff]
    %v4229 = vld [vmem:[#allocation5 + $0x158] sm:$0xff]
    %v4230 = vld [vmem:[#allocation5 + $0x160] sm:$0xff]
    %v4231 = vld [vmem:[#allocation5 + $0x168] sm:$0xff]
    %v4232 = vld [vmem:[#allocation5 + $0x170] sm:$0xff]
    %v4233 = vld [vmem:[#allocation5 + $0x178] sm:$0xff]
    %v4234 = vld [vmem:[#allocation5 + $0x180] sm:$0xff]
    %v4235 = vld [vmem:[#allocation5 + $0x188] sm:$0xff]
    %v4236 = vld [vmem:[#allocation5 + $0x190] sm:$0xff]
    %v4237 = vld [vmem:[#allocation5 + $0x198] sm:$0xff]
    %v4238 = vld [vmem:[#allocation5 + $0x1a0] sm:$0xff]
    %v4239 = vld [vmem:[#allocation5 + $0x1a8] sm:$0xff]
    %v4240 = vld [vmem:[#allocation5 + $0x1b0] sm:$0xff]
    %v4241 = vld [vmem:[#allocation5 + $0x1b8] sm:$0xff]
    %v4242 = vld [vmem:[#allocation5 + $0x1c0] sm:$0xff]
    %v4243 = vld [vmem:[#allocation5 + $0x1c8] sm:$0xff]
    %v4244 = vld [vmem:[#allocation5 + $0x1d0] sm:$0xff]
    %v4245 = vld [vmem:[#allocation5 + $0x1d8] sm:$0xff]
    %v4246 = vld [vmem:[#allocation5 + $0x1e0] sm:$0xff]
    %v4247 = vld [vmem:[#allocation5 + $0x1e8] sm:$0xff]
    %v4248 = vld [vmem:[#allocation5 + $0x1f0] sm:$0xff]
    %v4249 = vld [vmem:[#allocation5 + $0x1f8] sm:$0xff]
    %v4250 = vld [vmem:[#allocation5 + $0x200] sm:$0xff]
    %v4251 = vld [vmem:[#allocation5 + $0x208] sm:$0xff]
    %v4252 = vld [vmem:[#allocation5 + $0x210] sm:$0xff]
    %v4253 = vld [vmem:[#allocation5 + $0x218] sm:$0xff]
    %v4254 = vld [vmem:[#allocation5 + $0x220] sm:$0xff]
    %v4255 = vld [vmem:[#allocation5 + $0x228] sm:$0xff]
    %v4256 = vld [vmem:[#allocation5 + $0x230] sm:$0xff]
    %v4257 = vld [vmem:[#allocation5 + $0x238] sm:$0xff]
    %v4258 = vld [vmem:[#allocation5 + $0x240] sm:$0xff]
    %v4259 = vld [vmem:[#allocation5 + $0x248] sm:$0xff]
    %v4260 = vld [vmem:[#allocation5 + $0x250] sm:$0xff]
    %v4261 = vld [vmem:[#allocation5 + $0x258] sm:$0xff]
    %v4262 = vld [vmem:[#allocation5 + $0x260] sm:$0xff]
    %v4263 = vld [vmem:[#allocation5 + $0x268] sm:$0xff]
    %v4264 = vld [vmem:[#allocation5 + $0x270] sm:$0xff]
    %v4265 = vld [vmem:[#allocation5 + $0x278] sm:$0xff]
    %v4266 = vld [vmem:[#allocation5 + $0x280] sm:$0xff]
    %v4267 = vld [vmem:[#allocation5 + $0x288] sm:$0xff]
    %v4268 = vld [vmem:[#allocation5 + $0x290] sm:$0xff]
    %v4269 = vld [vmem:[#allocation5 + $0x298] sm:$0xff]
    %v4270 = vld [vmem:[#allocation5 + $0x2a0] sm:$0xff]
    %v4271 = vld [vmem:[#allocation5 + $0x2a8] sm:$0xff]
    %v4272 = vld [vmem:[#allocation5 + $0x2b0] sm:$0xff]
    %v4273 = vld [vmem:[#allocation5 + $0x2b8] sm:$0xff]
    %v4274 = vld [vmem:[#allocation5 + $0x2c0] sm:$0xff]
    %v4275 = vld [vmem:[#allocation5 + $0x2c8] sm:$0xff]
    %v4276 = vld [vmem:[#allocation5 + $0x2d0] sm:$0xff]
    %v4277 = vld [vmem:[#allocation5 + $0x2d8] sm:$0xff]
    %v4278 = vld [vmem:[#allocation5 + $0x2e0] sm:$0xff]
    %v4279 = vld [vmem:[#allocation5 + $0x2e8] sm:$0xff]
    %v4280 = vld [vmem:[#allocation5 + $0x2f0] sm:$0xff]
    %v4281 = vld [vmem:[#allocation5 + $0x2f8] sm:$0xff]
    %v4282 = vld [vmem:[#allocation5 + $0x300] sm:$0xff]
    %v4283 = vld [vmem:[#allocation5 + $0x308] sm:$0xff]
    %v4284 = vld [vmem:[#allocation5 + $0x310] sm:$0xff]
    %v4285 = vld [vmem:[#allocation5 + $0x318] sm:$0xff]
    %v4286 = vld [vmem:[#allocation5 + $0x320] sm:$0xff]
    %v4287 = vld [vmem:[#allocation5 + $0x328] sm:$0xff]
    %v4288 = vld [vmem:[#allocation5 + $0x330] sm:$0xff]
    %v4289 = vld [vmem:[#allocation5 + $0x338] sm:$0xff]
    %v4290 = vld [vmem:[#allocation5 + $0x340] sm:$0xff]
    %v4291 = vld [vmem:[#allocation5 + $0x348] sm:$0xff]
    %v4292 = vld [vmem:[#allocation5 + $0x350] sm:$0xff]
    %v4293 = vld [vmem:[#allocation5 + $0x358] sm:$0xff]
    %v4294 = vld [vmem:[#allocation5 + $0x360] sm:$0xff]
    %v4295 = vld [vmem:[#allocation5 + $0x368] sm:$0xff]
    %v4296 = vld [vmem:[#allocation5 + $0x370] sm:$0xff]
    %v4297 = vld [vmem:[#allocation5 + $0x378] sm:$0xff]
    %v4298 = vld [vmem:[#allocation5 + $0x380] sm:$0xff]
    %v4299 = vld [vmem:[#allocation5 + $0x388] sm:$0xff]
    %v4300 = vld [vmem:[#allocation5 + $0x390] sm:$0xff]
    %v4301 = vld [vmem:[#allocation5 + $0x398] sm:$0xff]
    %v4302 = vld [vmem:[#allocation5 + $0x3a0] sm:$0xff]
    %v4303 = vld [vmem:[#allocation5 + $0x3a8] sm:$0xff]
    %v4304 = vld [vmem:[#allocation5 + $0x3b0] sm:$0xff]
    %v4305 = vld [vmem:[#allocation5 + $0x3b8] sm:$0xff]
    %v4306 = vld [vmem:[#allocation5 + $0x3c0] sm:$0xff]
    %v4307 = vld [vmem:[#allocation5 + $0x3c8] sm:$0xff]
    %v4308 = vld [vmem:[#allocation5 + $0x3d0] sm:$0xff]
    %v4309 = vld [vmem:[#allocation5 + $0x3d8] sm:$0xff]
    %v4310 = vld [vmem:[#allocation5 + $0x3e0] sm:$0xff]
    %v4311 = vld [vmem:[#allocation5 + $0x3e8] sm:$0xff]
    %v4312 = vld [vmem:[#allocation5 + $0x3f0] sm:$0xff]
    %v4313 = vld [vmem:[#allocation5 + $0x3f8] sm:$0xff]
    %v4314 = vld [vmem:[#allocation15] sm:$0x1]
    %v4316 = vlaneseq
    %v4317 = vshrl.u32 %v4316, 7
    %v4318 = vsub.s32 0, %v4317
    %v4319 = vrot.slane %v4314, %v4318
    %4321 = vmatprep.subr.bf16.mxu0 0
    %4322 = vmatpush1.bf16.msra.mxu0 %v4186
    %4323 = vmatprep.subr.bf16.mxu0 0
    %4324 = vmatpush1.bf16.msra.mxu0 %v4187
    %4325 = vmatprep.subr.bf16.mxu0 0
    %4326 = vmatpush1.bf16.msra.mxu0 %v4188
    %4327 = vmatprep.subr.bf16.mxu0 0
    %4328 = vmatpush1.bf16.msra.mxu0 %v4189
    %4329 = vmatprep.subr.bf16.mxu0 0
    %4330 = vmatpush1.bf16.msra.mxu0 %v4190
    %4331 = vmatprep.subr.bf16.mxu0 0
    %4332 = vmatpush1.bf16.msra.mxu0 %v4191
    %4333 = vmatprep.subr.bf16.mxu0 0
    %4334 = vmatpush1.bf16.msra.mxu0 %v4192
    %4335 = vmatprep.subr.bf16.mxu0 0
    %4336 = vmatpush1.bf16.msra.mxu0 %v4193
    %4337 = vmatprep.subr.bf16.mxu0 0
    %4338 = vmatpush1.bf16.msra.mxu0 %v4194
    %4339 = vmatprep.subr.bf16.mxu0 0
    %4340 = vmatpush1.bf16.msra.mxu0 %v4195
    %4341 = vmatprep.subr.bf16.mxu0 0
    %4342 = vmatpush1.bf16.msra.mxu0 %v4196
    %4343 = vmatprep.subr.bf16.mxu0 0
    %4344 = vmatpush1.bf16.msra.mxu0 %v4197
    %4345 = vmatprep.subr.bf16.mxu0 0
    %4346 = vmatpush1.bf16.msra.mxu0 %v4198
    %4347 = vmatprep.subr.bf16.mxu0 0
    %4348 = vmatpush1.bf16.msra.mxu0 %v4199
    %4349 = vmatprep.subr.bf16.mxu0 0
    %4350 = vmatpush1.bf16.msra.mxu0 %v4200
    %4351 = vmatprep.subr.bf16.mxu0 0
    %4352 = vmatpush1.bf16.msra.mxu0 %v4201
    %4353 = vmatprep.mubr.bf16.mxu0 %v4171
    %4354 = vmatmul.mubr.bf16.gmra.mrb[0].mxu0 %v4170
    %v4355 = vpop.f32.mrb[0].mxu0
    %v4356 = vadd.f32 %v4319, %v4355
    %v4357 = vpop.f32.mrb[0].mxu0
    %v4358 = vpop.f32.mrb[0].mxu0
    %v4359 = vpop.f32.mrb[0].mxu0
    %4360 = vdwg.mxu0
    %4361 = vmatprep.subr.bf16.mxu0 0
    %4362 = vmatpush1.bf16.msra.mxu0 %v4202
    %4363 = vmatprep.subr.bf16.mxu0 0
    %4364 = vmatpush1.bf16.msra.mxu0 %v4203
    %4365 = vmatprep.subr.bf16.mxu0 0
    %4366 = vmatpush1.bf16.msra.mxu0 %v4204
    %4367 = vmatprep.subr.bf16.mxu0 0
    %4368 = vmatpush1.bf16.msra.mxu0 %v4205
    %4369 = vmatprep.subr.bf16.mxu0 0
    %4370 = vmatpush1.bf16.msra.mxu0 %v4206
    %4371 = vmatprep.subr.bf16.mxu0 0
    %4372 = vmatpush1.bf16.msra.mxu0 %v4207
    %4373 = vmatprep.subr.bf16.mxu0 0
    %4374 = vmatpush1.bf16.msra.mxu0 %v4208
    %4375 = vmatprep.subr.bf16.mxu0 0
    %4376 = vmatpush1.bf16.msra.mxu0 %v4209
    %4377 = vmatprep.subr.bf16.mxu0 0
    %4378 = vmatpush1.bf16.msra.mxu0 %v4210
    %4379 = vmatprep.subr.bf16.mxu0 0
    %4380 = vmatpush1.bf16.msra.mxu0 %v4211
    %4381 = vmatprep.subr.bf16.mxu0 0
    %4382 = vmatpush1.bf16.msra.mxu0 %v4212
    %4383 = vmatprep.subr.bf16.mxu0 0
    %4384 = vmatpush1.bf16.msra.mxu0 %v4213
    %4385 = vmatprep.subr.bf16.mxu0 0
    %4386 = vmatpush1.bf16.msra.mxu0 %v4214
    %4387 = vmatprep.subr.bf16.mxu0 0
    %4388 = vmatpush1.bf16.msra.mxu0 %v4215
    %4389 = vmatprep.subr.bf16.mxu0 0
    %4390 = vmatpush1.bf16.msra.mxu0 %v4216
    %4391 = vmatprep.subr.bf16.mxu0 0
    %4392 = vmatpush1.bf16.msra.mxu0 %v4217
    %4393 = vmatprep.mubr.bf16.mxu0 %v4173
    %4394 = vmatmul.mubr.bf16.gmra.mrb[0].mxu0 %v4172
    %v4395 = vpop.f32.mrb[0].mxu0
    %v4396 = vadd.f32 %v4356, %v4395
    %v4397 = vpop.f32.mrb[0].mxu0
    %v4398 = vpop.f32.mrb[0].mxu0
    %v4399 = vpop.f32.mrb[0].mxu0
    %4400 = vdwg.mxu0
    %4401 = vmatprep.subr.bf16.mxu0 0
    %4402 = vmatpush1.bf16.msra.mxu0 %v4218
    %4403 = vmatprep.subr.bf16.mxu0 0
    %4404 = vmatpush1.bf16.msra.mxu0 %v4219
    %4405 = vmatprep.subr.bf16.mxu0 0
    %4406 = vmatpush1.bf16.msra.mxu0 %v4220
    %4407 = vmatprep.subr.bf16.mxu0 0
    %4408 = vmatpush1.bf16.msra.mxu0 %v4221
    %4409 = vmatprep.subr.bf16.mxu0 0
    %4410 = vmatpush1.bf16.msra.mxu0 %v4222
    %4411 = vmatprep.subr.bf16.mxu0 0
    %4412 = vmatpush1.bf16.msra.mxu0 %v4223
    %4413 = vmatprep.subr.bf16.mxu0 0
    %4414 = vmatpush1.bf16.msra.mxu0 %v4224
    %4415 = vmatprep.subr.bf16.mxu0 0
    %4416 = vmatpush1.bf16.msra.mxu0 %v4225
    %4417 = vmatprep.subr.bf16.mxu0 0
    %4418 = vmatpush1.bf16.msra.mxu0 %v4226
    %4419 = vmatprep.subr.bf16.mxu0 0
    %4420 = vmatpush1.bf16.msra.mxu0 %v4227
    %4421 = vmatprep.subr.bf16.mxu0 0
    %4422 = vmatpush1.bf16.msra.mxu0 %v4228
    %4423 = vmatprep.subr.bf16.mxu0 0
    %4424 = vmatpush1.bf16.msra.mxu0 %v4229
    %4425 = vmatprep.subr.bf16.mxu0 0
    %4426 = vmatpush1.bf16.msra.mxu0 %v4230
    %4427 = vmatprep.subr.bf16.mxu0 0
    %4428 = vmatpush1.bf16.msra.mxu0 %v4231
    %4429 = vmatprep.subr.bf16.mxu0 0
    %4430 = vmatpush1.bf16.msra.mxu0 %v4232
    %4431 = vmatprep.subr.bf16.mxu0 0
    %4432 = vmatpush1.bf16.msra.mxu0 %v4233
    %4433 = vmatprep.mubr.bf16.mxu0 %v4175
    %4434 = vmatmul.mubr.bf16.gmra.mrb[0].mxu0 %v4174
    %v4435 = vpop.f32.mrb[0].mxu0
    %v4436 = vadd.f32 %v4396, %v4435
    %v4437 = vpop.f32.mrb[0].mxu0
    %v4438 = vpop.f32.mrb[0].mxu0
    %v4439 = vpop.f32.mrb[0].mxu0
    %4440 = vdwg.mxu0
    %4441 = vmatprep.subr.bf16.mxu0 0
    %4442 = vmatpush1.bf16.msra.mxu0 %v4234
    %4443 = vmatprep.subr.bf16.mxu0 0
    %4444 = vmatpush1.bf16.msra.mxu0 %v4235
    %4445 = vmatprep.subr.bf16.mxu0 0
    %4446 = vmatpush1.bf16.msra.mxu0 %v4236
    %4447 = vmatprep.subr.bf16.mxu0 0
    %4448 = vmatpush1.bf16.msra.mxu0 %v4237
    %4449 = vmatprep.subr.bf16.mxu0 0
    %4450 = vmatpush1.bf16.msra.mxu0 %v4238
    %4451 = vmatprep.subr.bf16.mxu0 0
    %4452 = vmatpush1.bf16.msra.mxu0 %v4239
    %4453 = vmatprep.subr.bf16.mxu0 0
    %4454 = vmatpush1.bf16.msra.mxu0 %v4240
    %4455 = vmatprep.subr.bf16.mxu0 0
    %4456 = vmatpush1.bf16.msra.mxu0 %v4241
    %4457 = vmatprep.subr.bf16.mxu0 0
    %4458 = vmatpush1.bf16.msra.mxu0 %v4242
    %4459 = vmatprep.subr.bf16.mxu0 0
    %4460 = vmatpush1.bf16.msra.mxu0 %v4243
    %4461 = vmatprep.subr.bf16.mxu0 0
    %4462 = vmatpush1.bf16.msra.mxu0 %v4244
    %4463 = vmatprep.subr.bf16.mxu0 0
    %4464 = vmatpush1.bf16.msra.mxu0 %v4245
    %4465 = vmatprep.subr.bf16.mxu0 0
    %4466 = vmatpush1.bf16.msra.mxu0 %v4246
    %4467 = vmatprep.subr.bf16.mxu0 0
    %4468 = vmatpush1.bf16.msra.mxu0 %v4247
    %4469 = vmatprep.subr.bf16.mxu0 0
    %4470 = vmatpush1.bf16.msra.mxu0 %v4248
    %4471 = vmatprep.subr.bf16.mxu0 0
    %4472 = vmatpush1.bf16.msra.mxu0 %v4249
    %4473 = vmatprep.mubr.bf16.mxu0 %v4177
    %4474 = vmatmul.mubr.bf16.gmra.mrb[0].mxu0 %v4176
    %v4475 = vpop.f32.mrb[0].mxu0
    %v4476 = vadd.f32 %v4436, %v4475
    %v4477 = vpop.f32.mrb[0].mxu0
    %v4478 = vpop.f32.mrb[0].mxu0
    %v4479 = vpop.f32.mrb[0].mxu0
    %4480 = vdwg.mxu0
    %4481 = vmatprep.subr.bf16.mxu0 0
    %4482 = vmatpush1.bf16.msra.mxu0 %v4250
    %4483 = vmatprep.subr.bf16.mxu0 0
    %4484 = vmatpush1.bf16.msra.mxu0 %v4251
    %4485 = vmatprep.subr.bf16.mxu0 0
    %4486 = vmatpush1.bf16.msra.mxu0 %v4252
    %4487 = vmatprep.subr.bf16.mxu0 0
    %4488 = vmatpush1.bf16.msra.mxu0 %v4253
    %4489 = vmatprep.subr.bf16.mxu0 0
    %4490 = vmatpush1.bf16.msra.mxu0 %v4254
    %4491 = vmatprep.subr.bf16.mxu0 0
    %4492 = vmatpush1.bf16.msra.mxu0 %v4255
    %4493 = vmatprep.subr.bf16.mxu0 0
    %4494 = vmatpush1.bf16.msra.mxu0 %v4256
    %4495 = vmatprep.subr.bf16.mxu0 0
    %4496 = vmatpush1.bf16.msra.mxu0 %v4257
    %4497 = vmatprep.subr.bf16.mxu0 0
    %4498 = vmatpush1.bf16.msra.mxu0 %v4258
    %4499 = vmatprep.subr.bf16.mxu0 0
    %4500 = vmatpush1.bf16.msra.mxu0 %v4259
    %4501 = vmatprep.subr.bf16.mxu0 0
    %4502 = vmatpush1.bf16.msra.mxu0 %v4260
    %4503 = vmatprep.subr.bf16.mxu0 0
    %4504 = vmatpush1.bf16.msra.mxu0 %v4261
    %4505 = vmatprep.subr.bf16.mxu0 0
    %4506 = vmatpush1.bf16.msra.mxu0 %v4262
    %4507 = vmatprep.subr.bf16.mxu0 0
    %4508 = vmatpush1.bf16.msra.mxu0 %v4263
    %4509 = vmatprep.subr.bf16.mxu0 0
    %4510 = vmatpush1.bf16.msra.mxu0 %v4264
    %4511 = vmatprep.subr.bf16.mxu0 0
    %4512 = vmatpush1.bf16.msra.mxu0 %v4265
    %4513 = vmatprep.mubr.bf16.mxu0 %v4179
    %4514 = vmatmul.mubr.bf16.gmra.mrb[0].mxu0 %v4178
    %v4515 = vpop.f32.mrb[0].mxu0
    %v4516 = vadd.f32 %v4476, %v4515
    %v4517 = vpop.f32.mrb[0].mxu0
    %v4518 = vpop.f32.mrb[0].mxu0
    %v4519 = vpop.f32.mrb[0].mxu0
    %4520 = vdwg.mxu0
    %4521 = vmatprep.subr.bf16.mxu0 0
    %4522 = vmatpush1.bf16.msra.mxu0 %v4266
    %4523 = vmatprep.subr.bf16.mxu0 0
    %4524 = vmatpush1.bf16.msra.mxu0 %v4267
    %4525 = vmatprep.subr.bf16.mxu0 0
    %4526 = vmatpush1.bf16.msra.mxu0 %v4268
    %4527 = vmatprep.subr.bf16.mxu0 0
    %4528 = vmatpush1.bf16.msra.mxu0 %v4269
    %4529 = vmatprep.subr.bf16.mxu0 0
    %4530 = vmatpush1.bf16.msra.mxu0 %v4270
    %4531 = vmatprep.subr.bf16.mxu0 0
    %4532 = vmatpush1.bf16.msra.mxu0 %v4271
    %4533 = vmatprep.subr.bf16.mxu0 0
    %4534 = vmatpush1.bf16.msra.mxu0 %v4272
    %4535 = vmatprep.subr.bf16.mxu0 0
    %4536 = vmatpush1.bf16.msra.mxu0 %v4273
    %4537 = vmatprep.subr.bf16.mxu0 0
    %4538 = vmatpush1.bf16.msra.mxu0 %v4274
    %4539 = vmatprep.subr.bf16.mxu0 0
    %4540 = vmatpush1.bf16.msra.mxu0 %v4275
    %4541 = vmatprep.subr.bf16.mxu0 0
    %4542 = vmatpush1.bf16.msra.mxu0 %v4276
    %4543 = vmatprep.subr.bf16.mxu0 0
    %4544 = vmatpush1.bf16.msra.mxu0 %v4277
    %4545 = vmatprep.subr.bf16.mxu0 0
    %4546 = vmatpush1.bf16.msra.mxu0 %v4278
    %4547 = vmatprep.subr.bf16.mxu0 0
    %4548 = vmatpush1.bf16.msra.mxu0 %v4279
    %4549 = vmatprep.subr.bf16.mxu0 0
    %4550 = vmatpush1.bf16.msra.mxu0 %v4280
    %4551 = vmatprep.subr.bf16.mxu0 0
    %4552 = vmatpush1.bf16.msra.mxu0 %v4281
    %4553 = vmatprep.mubr.bf16.mxu0 %v4181
    %4554 = vmatmul.mubr.bf16.gmra.mrb[0].mxu0 %v4180
    %v4555 = vpop.f32.mrb[0].mxu0
    %v4556 = vadd.f32 %v4516, %v4555
    %v4557 = vpop.f32.mrb[0].mxu0
    %v4558 = vpop.f32.mrb[0].mxu0
    %v4559 = vpop.f32.mrb[0].mxu0
    %4560 = vdwg.mxu0
    %4561 = vmatprep.subr.bf16.mxu0 0
    %4562 = vmatpush1.bf16.msra.mxu0 %v4282
    %4563 = vmatprep.subr.bf16.mxu0 0
    %4564 = vmatpush1.bf16.msra.mxu0 %v4283
    %4565 = vmatprep.subr.bf16.mxu0 0
    %4566 = vmatpush1.bf16.msra.mxu0 %v4284
    %4567 = vmatprep.subr.bf16.mxu0 0
    %4568 = vmatpush1.bf16.msra.mxu0 %v4285
    %4569 = vmatprep.subr.bf16.mxu0 0
    %4570 = vmatpush1.bf16.msra.mxu0 %v4286
    %4571 = vmatprep.subr.bf16.mxu0 0
    %4572 = vmatpush1.bf16.msra.mxu0 %v4287
    %4573 = vmatprep.subr.bf16.mxu0 0
    %4574 = vmatpush1.bf16.msra.mxu0 %v4288
    %4575 = vmatprep.subr.bf16.mxu0 0
    %4576 = vmatpush1.bf16.msra.mxu0 %v4289
    %4577 = vmatprep.subr.bf16.mxu0 0
    %4578 = vmatpush1.bf16.msra.mxu0 %v4290
    %4579 = vmatprep.subr.bf16.mxu0 0
    %4580 = vmatpush1.bf16.msra.mxu0 %v4291
    %4581 = vmatprep.subr.bf16.mxu0 0
    %4582 = vmatpush1.bf16.msra.mxu0 %v4292
    %4583 = vmatprep.subr.bf16.mxu0 0
    %4584 = vmatpush1.bf16.msra.mxu0 %v4293
    %4585 = vmatprep.subr.bf16.mxu0 0
    %4586 = vmatpush1.bf16.msra.mxu0 %v4294
    %4587 = vmatprep.subr.bf16.mxu0 0
    %4588 = vmatpush1.bf16.msra.mxu0 %v4295
    %4589 = vmatprep.subr.bf16.mxu0 0
    %4590 = vmatpush1.bf16.msra.mxu0 %v4296
    %4591 = vmatprep.subr.bf16.mxu0 0
    %4592 = vmatpush1.bf16.msra.mxu0 %v4297
    %4593 = vmatprep.mubr.bf16.mxu0 %v4183
    %4594 = vmatmul.mubr.bf16.gmra.mrb[0].mxu0 %v4182
    %v4595 = vpop.f32.mrb[0].mxu0
    %v4596 = vadd.f32 %v4556, %v4595
    %v4597 = vpop.f32.mrb[0].mxu0
    %v4598 = vpop.f32.mrb[0].mxu0
    %v4599 = vpop.f32.mrb[0].mxu0
    %4600 = vdwg.mxu0
    %4601 = vmatprep.subr.bf16.mxu0 0
    %4602 = vmatpush1.bf16.msra.mxu0 %v4298
    %4603 = vmatprep.subr.bf16.mxu0 0
    %4604 = vmatpush1.bf16.msra.mxu0 %v4299
    %4605 = vmatprep.subr.bf16.mxu0 0
    %4606 = vmatpush1.bf16.msra.mxu0 %v4300
    %4607 = vmatprep.subr.bf16.mxu0 0
    %4608 = vmatpush1.bf16.msra.mxu0 %v4301
    %4609 = vmatprep.subr.bf16.mxu0 0
    %4610 = vmatpush1.bf16.msra.mxu0 %v4302
    %4611 = vmatprep.subr.bf16.mxu0 0
    %4612 = vmatpush1.bf16.msra.mxu0 %v4303
    %4613 = vmatprep.subr.bf16.mxu0 0
    %4614 = vmatpush1.bf16.msra.mxu0 %v4304
    %4615 = vmatprep.subr.bf16.mxu0 0
    %4616 = vmatpush1.bf16.msra.mxu0 %v4305
    %4617 = vmatprep.subr.bf16.mxu0 0
    %4618 = vmatpush1.bf16.msra.mxu0 %v4306
    %4619 = vmatprep.subr.bf16.mxu0 0
    %4620 = vmatpush1.bf16.msra.mxu0 %v4307
    %4621 = vmatprep.subr.bf16.mxu0 0
    %4622 = vmatpush1.bf16.msra.mxu0 %v4308
    %4623 = vmatprep.subr.bf16.mxu0 0
    %4624 = vmatpush1.bf16.msra.mxu0 %v4309
    %4625 = vmatprep.subr.bf16.mxu0 0
    %4626 = vmatpush1.bf16.msra.mxu0 %v4310
    %4627 = vmatprep.subr.bf16.mxu0 0
    %4628 = vmatpush1.bf16.msra.mxu0 %v4311
    %4629 = vmatprep.subr.bf16.mxu0 0
    %4630 = vmatpush1.bf16.msra.mxu0 %v4312
    %4631 = vmatprep.subr.bf16.mxu0 0
    %4632 = vmatpush1.bf16.msra.mxu0 %v4313
    %4633 = vmatprep.mubr.bf16.mxu0 %v4185
    %4634 = vmatmul.mubr.bf16.gmra.mrb[0].mxu0 %v4184
    %v4635 = vpop.f32.mrb[0].mxu0
    %v4636 = vadd.f32 %v4596, %v4635
    %v4637 = vpop.f32.mrb[0].mxu0
    %v4638 = vpop.f32.mrb[0].mxu0
    %v4639 = vpop.f32.mrb[0].mxu0
    %4640 = vdwg.mxu0
    %4641 = vst [vmem:[#allocation16] sm:$0xff] %v4636
    // Predicated region
    $region50: #{tpu_custom_call.1} parent=1 // pred_check
      _
    $region51: #{tpu_custom_call.1} parent=1 // pred_check_branch
      %4643 = sbr.rel (0) target = $region53
    $region52: #{tpu_custom_call.1} parent=1 // pred_region
      %s4645 = ssub.s32 128, 128
      %4646 = vsyncadd [#allocation9], %s4645
      %s4648 = sshll.u32 [#allocation16], 4
      %s4649 = int_to_ptr.vmem [resolvable:$true] %s4648
      %4651 = dma.vmem_to_hbm [thread:$0]  %s4649, 128, %s9, [#allocation9]
    $region53: #{tpu_custom_call.1} parent=1 // pred_fallthru
      _
    // Predicated region
    $region54: #{tpu_custom_call.1} parent=1 // pred_check
      _
    $region55: #{tpu_custom_call.1} parent=1 // pred_check_branch
      %4653 = sbr.rel (0) target = $region57
    $region56: #{tpu_custom_call.1} parent=1 // pred_region
      %4654 = dma.done [#allocation9], 128
    $region57: #{tpu_custom_call.1} parent=1 // pred_fallthru
      _
    %4655 = vsyncpa [#allocation8], 1
    %4656 = vsyncpa [#allocation11], 1
    %4657 = vsyncpa [#allocation14], 1
    %4658 = vsyncpa [#allocation9], 1
  %4659 = vsyncmov [#allocation6]
  %s4660 = vpop.sfrf %4659
  %p4661 = scmp.eq.s32.totalorder %s4660, 0
  %p4662 = pneg %p4661
  %4664 = shalt.err (%p4662)
  %s4665 = scalar_lea.sflag [#allocation6], 1
  %4666 = vsyncmov %s4665
  %s4667 = vpop.sfrf %4666
  %p4668 = scmp.eq.s32.totalorder %s4667, 0
  %p4669 = pneg %p4668
  %4671 = shalt.err (%p4669)
  %s4672 = scalar_lea.sflag [#allocation6], 2
  %4673 = vsyncmov %s4672
  %s4674 = vpop.sfrf %4673
  %p4675 = scmp.eq.s32.totalorder %s4674, 0
  %p4676 = pneg %p4675
  %4678 = shalt.err (%p4676)
  %s4679 = scalar_lea.sflag [#allocation6], 3
  %4680 = vsyncmov %s4679
  %s4681 = vpop.sfrf %4680
  %p4682 = scmp.eq.s32.totalorder %s4681, 0
  %p4683 = pneg %p4682
  %4685 = shalt.err (%p4683)

</llo_original>
